<compile_context>
chip_gen: v7x
topology: tpu7x:2x2x1
jax: 0.10.0
libtpu: 0.0.40
codegen_flags: <defaults>
</compile_context>

<pallas_src>
import functools

import jax
import jax.numpy as jnp
from jax.experimental import pallas as pl
from jax.experimental.pallas import tpu as pltpu

LANE = 128
SUBLANE = 8


def _round_up(x, m):
    return (x + m - 1) // m * m


# --- Per-generation budgets (v7x has 64 MiB VMEM; v5e/v6e have 128 MiB) ---
try:
    _KIND = jax.devices()[0].device_kind.lower()
except Exception:  # pragma: no cover - defensive
    _KIND = ""
_IS_V7 = ("v7" in _KIND) or ("7x" in _KIND)
_VMEM_LIMIT = (32 if _IS_V7 else 64) * 1024 * 1024
_TM_DEFAULT = 256 if _IS_V7 else 512
_TN_DEFAULT = 512 if _IS_V7 else 1024
_TK_MAX = 2048


# ----------------------------------------------------------------------------
# Tiled linear kernels:  o = x @ w + b   (bf16 operands, f32 accumulation)
# ----------------------------------------------------------------------------
def _linear_kernel(x_ref, w_ref, b_ref, o_ref):
    acc = jnp.dot(x_ref[...], w_ref[...], preferred_element_type=jnp.float32)
    o_ref[...] = (acc + b_ref[...]).astype(o_ref.dtype)


def _linear_kernel_ktiled(x_ref, w_ref, b_ref, o_ref, acc_ref):
    @pl.when(pl.program_id(2) == 0)
    def _():
        acc_ref[...] = jnp.zeros_like(acc_ref)

    acc_ref[...] += jnp.dot(x_ref[...], w_ref[...],
                            preferred_element_type=jnp.float32)

    @pl.when(pl.program_id(2) == pl.num_programs(2) - 1)
    def _():
        o_ref[...] = (acc_ref[...] + b_ref[...]).astype(o_ref.dtype)


def linear_pallas(x, w, b, *, out_dtype=jnp.float32,
                  tm_max=_TM_DEFAULT, tn_max=_TN_DEFAULT, tk_max=_TK_MAX):
    """x: [M, K], w: [K, N], b: [1, N] -> [M, N] in out_dtype.

    Operands are cast to bf16 (MXU-native), accumulation is f32.  Tiled over
    (M, N) with "parallel" grid semantics; an extra "arbitrary" K axis with an
    f32 VMEM accumulator is used when K exceeds tk_max.
    """
    M, K = x.shape
    Kw, N = w.shape
    assert K == Kw and b.shape == (1, N)

    x = x.astype(jnp.bfloat16)
    w = w.astype(jnp.bfloat16)
    b = b.astype(jnp.float32)

    tm = min(tm_max, _round_up(M, SUBLANE))
    tn = min(tn_max, _round_up(N, LANE))
    Mp = _round_up(M, tm)
    Np = _round_up(N, tn)

    if K <= tk_max:
        tk, Kp = K, K
    else:
        tk = tk_max
        Kp = _round_up(K, tk)

    if Mp != M or Kp != K:
        x = jnp.pad(x, ((0, Mp - M), (0, Kp - K)))
    if Kp != K or Np != N:
        w = jnp.pad(w, ((0, Kp - K), (0, Np - N)))
    if Np != N:
        b = jnp.pad(b, ((0, 0), (0, Np - N)))

    nk = Kp // tk
    if nk == 1:
        out = pl.pallas_call(
            _linear_kernel,
            out_shape=jax.ShapeDtypeStruct((Mp, Np), out_dtype),
            grid_spec=pltpu.PrefetchScalarGridSpec(
                num_scalar_prefetch=0,
                grid=(Mp // tm, Np // tn),
                in_specs=[
                    pl.BlockSpec((tm, tk), lambda i, j: (i, 0)),
                    pl.BlockSpec((tk, tn), lambda i, j: (0, j)),
                    pl.BlockSpec((1, tn), lambda i, j: (0, j)),
                ],
                out_specs=pl.BlockSpec((tm, tn), lambda i, j: (i, j)),
            ),
            compiler_params=pltpu.CompilerParams(
                dimension_semantics=("parallel", "parallel"),
                vmem_limit_bytes=_VMEM_LIMIT,
            ),
        )(x, w, b)
    else:
        out = pl.pallas_call(
            _linear_kernel_ktiled,
            out_shape=jax.ShapeDtypeStruct((Mp, Np), out_dtype),
            grid_spec=pltpu.PrefetchScalarGridSpec(
                num_scalar_prefetch=0,
                grid=(Mp // tm, Np // tn, nk),
                in_specs=[
                    pl.BlockSpec((tm, tk), lambda i, j, k: (i, k)),
                    pl.BlockSpec((tk, tn), lambda i, j, k: (k, j)),
                    pl.BlockSpec((1, tn), lambda i, j, k: (0, j)),
                ],
                out_specs=pl.BlockSpec((tm, tn), lambda i, j, k: (i, j)),
                scratch_shapes=[pltpu.VMEM((tm, tn), jnp.float32)],
            ),
            compiler_params=pltpu.CompilerParams(
                dimension_semantics=("parallel", "parallel", "arbitrary"),
                vmem_limit_bytes=_VMEM_LIMIT,
            ),
        )(x, w, b)

    if Mp != M or Np != N:
        out = out[:M, :N]
    return out


# ----------------------------------------------------------------------------
# GRU recurrence kernel (input gates gi precomputed & bias-folded outside).
#   gi_ref:  [t_chunk, Bp, 3Hp] bf16 (gates r, z, n at 128-aligned offsets;
#            r/z thirds of b_hh already folded into gi)
#   h0_ref:  [Bp, Hp] f32
#   whh_ref: [Hp, 3Hp] bf16
#   bhn_ref: [1, Hp]  f32 (n-third of b_hh only)
#   out_ref: [t_chunk, Bp, Hp] bf16
#   h_scr:   VMEM [Bp, Hp] f32 hidden state carried across grid steps
# ----------------------------------------------------------------------------
def _gru_kernel(gi_ref, h0_ref, whh_ref, bhn_ref, out_ref, h_scr, *,
                chunk, hidden):
    @pl.when(pl.program_id(0) == 0)
    def _():
        h_scr[...] = h0_ref[...]

    Hp = hidden
    Bp = h0_ref.shape[0]
    # Hoist the b_hn broadcast out of the unrolled loop (no CSE of broadcasts).
    bhn = jnp.broadcast_to(bhn_ref[...], (Bp, Hp))

    def step(t, h):
        gi = gi_ref[t].astype(jnp.float32)                        # [Bp, 3Hp]
        gh = jnp.dot(h.astype(jnp.bfloat16), whh_ref[...],
                     preferred_element_type=jnp.float32)          # [Bp, 3Hp]
        r = jax.nn.sigmoid(gi[:, 0:Hp] + gh[:, 0:Hp])
        z = jax.nn.sigmoid(gi[:, Hp:2 * Hp] + gh[:, Hp:2 * Hp])
        n = jnp.tanh(gi[:, 2 * Hp:3 * Hp] + r * (gh[:, 2 * Hp:3 * Hp] + bhn))
        h_new = (1.0 - z) * n + z * h
        out_ref[t] = h_new.astype(out_ref.dtype)
        return h_new

    h_scr[...] = jax.lax.fori_loop(0, chunk, step, h_scr[...], unroll=True)


def gru_pallas(gi, h0, w_hh, b_hn, *, t_chunk=16):
    """gi: [T, Bp, 3Hp] bf16, h0: [Bp, Hp] f32 -> hidden states [T, Bp, Hp] bf16."""
    T, Bp, G = gi.shape
    Hp = G // 3
    assert h0.shape == (Bp, Hp) and b_hn.shape == (1, Hp)

    t_chunk = min(t_chunk, T)
    Tp = _round_up(T, t_chunk)
    if Tp != T:
        gi = jnp.pad(gi, ((0, Tp - T), (0, 0), (0, 0)))

    kernel = functools.partial(_gru_kernel, chunk=t_chunk, hidden=Hp)
    hs = pl.pallas_call(
        kernel,
        out_shape=jax.ShapeDtypeStruct((Tp, Bp, Hp), jnp.bfloat16),
        grid_spec=pltpu.PrefetchScalarGridSpec(
            num_scalar_prefetch=0,
            grid=(Tp // t_chunk,),
            in_specs=[
                pl.BlockSpec((t_chunk, Bp, G), lambda c: (c, 0, 0)),
                pl.BlockSpec((Bp, Hp), lambda c: (0, 0)),
                pl.BlockSpec((Hp, G), lambda c: (0, 0)),
                pl.BlockSpec((1, Hp), lambda c: (0, 0)),
            ],
            out_specs=pl.BlockSpec((t_chunk, Bp, Hp), lambda c: (c, 0, 0)),
            scratch_shapes=[pltpu.VMEM((Bp, Hp), jnp.float32)],
        ),
        compiler_params=pltpu.CompilerParams(
            dimension_semantics=("arbitrary",),   # sequential recurrence
            vmem_limit_bytes=_VMEM_LIMIT,
        ),
    )(gi, h0, w_hh, b_hn)
    return hs[:T] if Tp != T else hs


# ----------------------------------------------------------------------------
# Parameters (weights stored [in_features, out_features], gate order r,z,n)
# ----------------------------------------------------------------------------
def init_params(key, embed_size, hidden_size, vocab_size):
    ks = jax.random.split(key, 9)
    s = 0.1
    return {
        # nn.Embedding(vocab_size, embed_size)
        "embedding": jax.random.normal(ks[0], (vocab_size, embed_size), jnp.float32),
        # nn.GRU(embed_size, hidden_size, 1)
        "w_ih": s * jax.random.normal(ks[1], (embed_size, 3 * hidden_size), jnp.float32),
        "w_hh": s * jax.random.normal(ks[2], (hidden_size, 3 * hidden_size), jnp.float32),
        "b_ih": s * jax.random.normal(ks[3], (1, 3 * hidden_size), jnp.float32),
        "b_hh": s * jax.random.normal(ks[4], (1, 3 * hidden_size), jnp.float32),
        # nn.Linear(hidden_size, vocab_size)
        "w_fc": s * jax.random.normal(ks[5], (hidden_size, vocab_size), jnp.float32),
        "b_fc": s * jax.random.normal(ks[6], (1, vocab_size), jnp.float32),
        # nn.Linear(embed_size, hidden_size)  (feat2hidden)
        "w_f2h": s * jax.random.normal(ks[7], (embed_size, hidden_size), jnp.float32),
        "b_f2h": s * jax.random.normal(ks[8], (1, hidden_size), jnp.float32),
    }


# ----------------------------------------------------------------------------
# FastDecoderGRU forward
# ----------------------------------------------------------------------------
@jax.jit
def fast_decoder_gru_forward(params, features, captions):
    """features: [B, embed_size] f32, captions: [B, T] int32
    returns logits: [B, T, vocab_size] f32 (matches PyTorch forward)."""
    B, T = captions.shape
    H = params["w_hh"].shape[0]
    V = params["w_fc"].shape[1]

    Hp = _round_up(H, LANE)      # pad hidden to 128 lanes
    Bp = _round_up(B, SUBLANE)   # pad batch to 8 sublanes

    def pad_gates(w):
        # [..., 3H] -> [..., 3Hp]: each gate zero-padded into a 128-aligned chunk.
        r, z, n = jnp.split(w, 3, axis=-1)
        padw = ((0, 0),) * (w.ndim - 1) + ((0, Hp - H),)
        return jnp.concatenate(
            [jnp.pad(r, padw), jnp.pad(z, padw), jnp.pad(n, padw)], axis=-1)

    # --- Embedding lookup (plain JAX gather) in bf16, time-major, batch padded
    emb_table = params["embedding"].astype(jnp.bfloat16)
    emb_tbe = jnp.take(emb_table, captions.T, axis=0)                 # [T, B, E]
    emb_tbe = jnp.pad(emb_tbe, ((0, 0), (0, Bp - B), (0, 0)))         # [T, Bp, E]
    E = emb_tbe.shape[-1]

    # --- h0 = feat2hidden(features), padded to [Bp, Hp] (kept f32) ---
    feats_p = jnp.pad(features, ((0, Bp - B), (0, 0)))                # [Bp, E]
    w_f2h_p = jnp.pad(params["w_f2h"], ((0, 0), (0, Hp - H)))
    b_f2h_p = jnp.pad(params["b_f2h"], ((0, 0), (0, Hp - H)))
    h0 = linear_pallas(feats_p, w_f2h_p, b_f2h_p,
                       out_dtype=jnp.float32)                          # [Bp, Hp]

    # --- Fold r/z thirds of b_hh into the hoisted gi bias (torch GRU keeps
    #     only b_hn inside r*(h@W_hn + b_hn)) ---
    b_ir, b_iz, b_in = jnp.split(params["b_ih"], 3, axis=-1)
    b_hr, b_hz, b_hn = jnp.split(params["b_hh"], 3, axis=-1)
    b_gi = jnp.concatenate([b_ir + b_hr, b_iz + b_hz, b_in], axis=-1)  # [1, 3H]

    # --- Hoisted input-to-hidden matmul for ALL timesteps (bf16 output) ---
    w_ih_p = pad_gates(params["w_ih"])                                 # [E, 3Hp]
    b_gi_p = pad_gates(b_gi)                                           # [1, 3Hp]
    gi = linear_pallas(emb_tbe.reshape(T * Bp, E), w_ih_p, b_gi_p,
                       out_dtype=jnp.bfloat16)                         # [T*Bp, 3Hp]
    gi = gi.reshape(T, Bp, 3 * Hp)

    # --- GRU recurrence: only h @ W_hh (bf16) + f32 gate math per step ---
    w_hh_p = pad_gates(jnp.pad(params["w_hh"], ((0, Hp - H), (0, 0))))
    w_hh_p = w_hh_p.astype(jnp.bfloat16)                               # [Hp, 3Hp]
    b_hn_p = jnp.pad(b_hn, ((0, 0), (0, Hp - H)))                      # [1, Hp]
    hs = gru_pallas(gi, h0, w_hh_p, b_hn_p)                            # [T, Bp, Hp] bf16

    # --- Vocab projection: transpose the NARROW hs (Hp) to batch-major, so
    #     fc_out writes [B*T, V] logits directly (no logits slice/transpose).
    hs_bt = jnp.transpose(hs, (1, 0, 2))[:B].reshape(B * T, Hp)        # [B*T, Hp]
    w_fc_p = jnp.pad(params["w_fc"], ((0, Hp - H), (0, 0)))            # [Hp, V]
    logits = linear_pallas(hs_bt, w_fc_p, params["b_fc"],
                           out_dtype=jnp.float32)                      # [B*T, V]
    return logits.reshape(B, T, V)                                     # [B, T, V]


# ----------------------------------------------------------------------------
# Pure-JAX reference (torch.nn.GRU semantics, f32) for a correctness check
# ----------------------------------------------------------------------------
def reference_forward(params, features, captions):
    emb = jnp.take(params["embedding"], captions, axis=0)              # [B, T, E]
    h0 = features @ params["w_f2h"] + params["b_f2h"]                  # [B, H]

    def step(h, x_t):
        gi = x_t @ params["w_ih"] + params["b_ih"]
        gh = h @ params["w_hh"] + params["b_hh"]
        i_r, i_z, i_n = jnp.split(gi, 3, axis=-1)
        h_r, h_z, h_n = jnp.split(gh, 3, axis=-1)
        r = jax.nn.sigmoid(i_r + h_r)
        z = jax.nn.sigmoid(i_z + h_z)
        n = jnp.tanh(i_n + r * h_n)
        h_new = (1.0 - z) * n + z * h
        return h_new, h_new

    _, hs = jax.lax.scan(step, h0, jnp.transpose(emb, (1, 0, 2)))
    hs = jnp.transpose(hs, (1, 0, 2))                                  # [B, T, H]
    return hs @ params["w_fc"] + params["b_fc"]


if __name__ == "__main__":
    embed_size = 32
    hidden_size = 32
    vocab_size = 64
    batch = 2
    seq = 8

    key = jax.random.PRNGKey(0)
    k_params, k_feat, k_cap = jax.random.split(key, 3)

    params = init_params(k_params, embed_size, hidden_size, vocab_size)
    features = jax.random.normal(k_feat, (batch, embed_size), jnp.float32)
    captions = jax.random.randint(k_cap, (batch, seq), 0, vocab_size, jnp.int32)

    out = fast_decoder_gru_forward(params, features, captions)
    jax.block_until_ready(out)
    assert out.shape == (batch, seq, vocab_size), out.shape
    assert bool(jnp.all(jnp.isfinite(out)))

    # bf16 matmul operands => looser tolerance than the pure-f32 version.
    ref = reference_forward(params, features, captions)
    max_err = float(jnp.max(jnp.abs(out - ref)))
    assert bool(jnp.allclose(out, ref, atol=5e-2, rtol=5e-2)), max_err

    print("KERNEL_OK")
</pallas_src>

<mosaic_0001>
module attributes {stable_mosaic.version = 11 : i64} {
  func.func @_linear_kernel(%arg0: i32, %arg1: i32, %arg2: memref<64x32xbf16, #tpu.memory_space<vmem>>, %arg3: memref<32x384xbf16, #tpu.memory_space<vmem>>, %arg4: memref<1x384xf32, #tpu.memory_space<vmem>>, %arg5: memref<64x384xbf16, #tpu.memory_space<vmem>>) attributes {dimension_semantics = [#tpu.dimension_semantics<parallel>, #tpu.dimension_semantics<parallel>], iteration_bounds = array<i64: 1, 1>, scalar_prefetch = 0 : i64, scratch_operands = 0 : i64, tpu.core_type = #tpu.core_type<tc>, window_params = [{transform_indices = @transform_0, window_bounds = array<i64: 64, 32>}, {transform_indices = @transform_1, window_bounds = array<i64: 32, 384>}, {transform_indices = @transform_2, window_bounds = array<i64: 1, 384>}, {transform_indices = @transform_3, window_bounds = array<i64: 64, 384>}]} {
    %c0 = arith.constant 0 : index
    %c0_0 = arith.constant 0 : index
    %0 = vector.load %arg2[%c0, %c0_0] : memref<64x32xbf16, #tpu.memory_space<vmem>>, vector<64x32xbf16>
    %c0_1 = arith.constant 0 : index
    %c0_2 = arith.constant 0 : index
    %1 = vector.load %arg3[%c0_1, %c0_2] : memref<32x384xbf16, #tpu.memory_space<vmem>>, vector<32x384xbf16>
    %cst = arith.constant dense<0.000000e+00> : vector<64x384xf32>
    %2 = tpu.matmul %0, %1, %cst {dimension_numbers = #tpu.dot_dimension_numbers<[1], [0], [0], [1], [0, 0, 1, 1], [], []>} : vector<64x32xbf16>, vector<32x384xbf16>, vector<64x384xf32> -> vector<64x384xf32>
    %c0_3 = arith.constant 0 : index
    %c0_4 = arith.constant 0 : index
    %3 = vector.load %arg4[%c0_3, %c0_4] : memref<1x384xf32, #tpu.memory_space<vmem>>, vector<1x384xf32>
    %4 = vector.broadcast %3 : vector<1x384xf32> to vector<64x384xf32>
    %5 = arith.addf %2, %4 : vector<64x384xf32>
    %6 = arith.truncf %5 : vector<64x384xf32> to vector<64x384xbf16>
    %c0_5 = arith.constant 0 : index
    %c0_6 = arith.constant 0 : index
    %7 = vector.load %arg5[%c0_5, %c0_6] : memref<64x384xbf16, #tpu.memory_space<vmem>>, vector<64x384xbf16>
    tpu.vector_store %arg5[%c0_5, %c0_6], %6 {strides = array<i32>} : memref<64x384xbf16, #tpu.memory_space<vmem>>, vector<64x384xbf16>,
    return
  }
  func.func @transform_0(%arg0: i32, %arg1: i32) -> (i32, i32) {
    %c0_i32 = arith.constant 0 : i32
    %c0_i32_0 = arith.constant 0 : i32
    return %arg0, %c0_i32 : i32, i32
  }
  func.func @transform_1(%arg0: i32, %arg1: i32) -> (i32, i32) {
    %c0_i32 = arith.constant 0 : i32
    %c0_i32_0 = arith.constant 0 : i32
    return %c0_i32, %arg1 : i32, i32
  }
  func.func @transform_2(%arg0: i32, %arg1: i32) -> (i32, i32) {
    %c0_i32 = arith.constant 0 : i32
    %c0_i32_0 = arith.constant 0 : i32
    return %c0_i32, %arg1 : i32, i32
  }
  func.func @transform_3(%arg0: i32, %arg1: i32) -> (i32, i32) {
    %c0_i32 = arith.constant 0 : i32
    return %arg0, %arg1 : i32, i32
  }
}

module attributes {stable_mosaic.version = 11 : i64} {
  func.func @_linear_kernel(%arg0: i32, %arg1: i32, %arg2: memref<8x32xbf16, #tpu.memory_space<vmem>>, %arg3: memref<32x128xbf16, #tpu.memory_space<vmem>>, %arg4: memref<1x128xf32, #tpu.memory_space<vmem>>, %arg5: memref<8x128xf32, #tpu.memory_space<vmem>>) attributes {dimension_semantics = [#tpu.dimension_semantics<parallel>, #tpu.dimension_semantics<parallel>], iteration_bounds = array<i64: 1, 1>, scalar_prefetch = 0 : i64, scratch_operands = 0 : i64, tpu.core_type = #tpu.core_type<tc>, window_params = [{transform_indices = @transform_0, window_bounds = array<i64: 8, 32>}, {transform_indices = @transform_1, window_bounds = array<i64: 32, 128>}, {transform_indices = @transform_2, window_bounds = array<i64: 1, 128>}, {transform_indices = @transform_3, window_bounds = array<i64: 8, 128>}]} {
    %c0 = arith.constant 0 : index
    %c0_0 = arith.constant 0 : index
    %0 = vector.load %arg2[%c0, %c0_0] : memref<8x32xbf16, #tpu.memory_space<vmem>>, vector<8x32xbf16>
    %c0_1 = arith.constant 0 : index
    %c0_2 = arith.constant 0 : index
    %1 = vector.load %arg3[%c0_1, %c0_2] : memref<32x128xbf16, #tpu.memory_space<vmem>>, vector<32x128xbf16>
    %cst = arith.constant dense<0.000000e+00> : vector<8x128xf32>
    %2 = tpu.matmul %0, %1, %cst {dimension_numbers = #tpu.dot_dimension_numbers<[1], [0], [0], [1], [0, 0, 1, 1], [], []>} : vector<8x32xbf16>, vector<32x128xbf16>, vector<8x128xf32> -> vector<8x128xf32>
    %c0_3 = arith.constant 0 : index
    %c0_4 = arith.constant 0 : index
    %3 = vector.load %arg4[%c0_3, %c0_4] : memref<1x128xf32, #tpu.memory_space<vmem>>, vector<1x128xf32>
    %4 = vector.broadcast %3 : vector<1x128xf32> to vector<8x128xf32>
    %5 = arith.addf %2, %4 : vector<8x128xf32>
    %c0_5 = arith.constant 0 : index
    %c0_6 = arith.constant 0 : index
    %6 = vector.load %arg5[%c0_5, %c0_6] : memref<8x128xf32, #tpu.memory_space<vmem>>, vector<8x128xf32>
    tpu.vector_store %arg5[%c0_5, %c0_6], %5 {strides = array<i32>} : memref<8x128xf32, #tpu.memory_space<vmem>>, vector<8x128xf32>,
    return
  }
  func.func @transform_0(%arg0: i32, %arg1: i32) -> (i32, i32) {
    %c0_i32 = arith.constant 0 : i32
    %c0_i32_0 = arith.constant 0 : i32
    return %arg0, %c0_i32 : i32, i32
  }
  func.func @transform_1(%arg0: i32, %arg1: i32) -> (i32, i32) {
    %c0_i32 = arith.constant 0 : i32
    %c0_i32_0 = arith.constant 0 : i32
    return %c0_i32, %arg1 : i32, i32
  }
  func.func @transform_2(%arg0: i32, %arg1: i32) -> (i32, i32) {
    %c0_i32 = arith.constant 0 : i32
    %c0_i32_0 = arith.constant 0 : i32
    return %c0_i32, %arg1 : i32, i32
  }
  func.func @transform_3(%arg0: i32, %arg1: i32) -> (i32, i32) {
    %c0_i32 = arith.constant 0 : i32
    return %arg0, %arg1 : i32, i32
  }
}

module attributes {stable_mosaic.version = 11 : i64} {
  func.func @_gru_kernel(%arg0: i32, %arg1: memref<8x8x384xbf16, #tpu.memory_space<vmem>>, %arg2: memref<8x128xf32, #tpu.memory_space<vmem>>, %arg3: memref<128x384xbf16, #tpu.memory_space<vmem>>, %arg4: memref<1x128xf32, #tpu.memory_space<vmem>>, %arg5: memref<8x8x128xbf16, #tpu.memory_space<vmem>>, %arg6: memref<8x128xf32, #tpu.memory_space<vmem>>) attributes {dimension_semantics = [#tpu.dimension_semantics<arbitrary>], iteration_bounds = array<i64: 1>, scalar_prefetch = 0 : i64, scratch_operands = 1 : i64, tpu.core_type = #tpu.core_type<tc>, window_params = [{transform_indices = @transform_0, window_bounds = array<i64: 8, 8, 384>}, {pipeline_mode = #tpu.pipeline_mode<synchronous>, transform_indices = @transform_1, window_bounds = array<i64: 8, 128>}, {pipeline_mode = #tpu.pipeline_mode<synchronous>, transform_indices = @transform_2, window_bounds = array<i64: 128, 384>}, {pipeline_mode = #tpu.pipeline_mode<synchronous>, transform_indices = @transform_3, window_bounds = array<i64: 1, 128>}, {transform_indices = @transform_4, window_bounds = array<i64: 8, 8, 128>}]} {
    %c0_i32 = arith.constant 0 : i32
    %0 = arith.cmpi eq, %arg0, %c0_i32 : i32
    %1 = arith.extui %0 : i1 to i32
    %c0_i32_0 = arith.constant 0 : i32
    %2 = arith.cmpi ne, %1, %c0_i32_0 : i32
    scf.if %2 {
      %c0_86 = arith.constant 0 : index
      %c0_87 = arith.constant 0 : index
      %320 = vector.load %arg2[%c0_86, %c0_87] : memref<8x128xf32, #tpu.memory_space<vmem>>, vector<8x128xf32>
      %c0_88 = arith.constant 0 : index
      %c0_89 = arith.constant 0 : index
      %321 = vector.load %arg6[%c0_88, %c0_89] : memref<8x128xf32, #tpu.memory_space<vmem>>, vector<8x128xf32>
      tpu.vector_store %arg6[%c0_88, %c0_89], %320 {strides = array<i32>} : memref<8x128xf32, #tpu.memory_space<vmem>>, vector<8x128xf32>,
    } else {
    }
    %c0 = arith.constant 0 : index
    %c0_1 = arith.constant 0 : index
    %3 = vector.load %arg4[%c0, %c0_1] : memref<1x128xf32, #tpu.memory_space<vmem>>, vector<1x128xf32>
    %4 = vector.shape_cast %3 : vector<1x128xf32> to vector<1x128xf32>
    %5 = vector.broadcast %4 : vector<1x128xf32> to vector<8x128xf32>
    %c0_2 = arith.constant 0 : index
    %c0_3 = arith.constant 0 : index
    %6 = vector.load %arg6[%c0_2, %c0_3] : memref<8x128xf32, #tpu.memory_space<vmem>>, vector<8x128xf32>
    %c0_i32_4 = arith.constant 0 : i32
    %7 = arith.index_cast %c0_i32_4 : i32 to index
    %c0_5 = arith.constant 0 : index
    %c0_6 = arith.constant 0 : index
    %8 = vector.load %arg1[%7, %c0_5, %c0_6] : memref<8x8x384xbf16, #tpu.memory_space<vmem>>, vector<1x8x384xbf16>
    %9 = vector.shape_cast %8 : vector<1x8x384xbf16> to vector<8x384xbf16>
    %10 = arith.extf %9 : vector<8x384xbf16> to vector<8x384xf32>
    %11 = arith.truncf %6 : vector<8x128xf32> to vector<8x128xbf16>
    %c0_7 = arith.constant 0 : index
    %c0_8 = arith.constant 0 : index
    %12 = vector.load %arg3[%c0_7, %c0_8] : memref<128x384xbf16, #tpu.memory_space<vmem>>, vector<128x384xbf16>
    %cst = arith.constant dense<0.000000e+00> : vector<8x384xf32>
    %13 = tpu.matmul %11, %12, %cst {dimension_numbers = #tpu.dot_dimension_numbers<[1], [0], [0], [1], [0, 0, 1, 1], [], []>} : vector<8x128xbf16>, vector<128x384xbf16>, vector<8x384xf32> -> vector<8x384xf32>
    %14 = vector.extract_strided_slice %10 {offsets = [0, 0], sizes = [8, 128], strides = [1, 1]} : vector<8x384xf32> to vector<8x128xf32>
    %15 = vector.extract_strided_slice %13 {offsets = [0, 0], sizes = [8, 128], strides = [1, 1]} : vector<8x384xf32> to vector<8x128xf32>
    %16 = arith.addf %14, %15 : vector<8x128xf32>
    %17 = arith.negf %16 : vector<8x128xf32>
    %18 = math.exp %17 : vector<8x128xf32>
    %cst_9 = arith.constant 1.000000e+00 : f32
    %19 = vector.broadcast %cst_9 : f32 to vector<8x128xf32>
    %20 = arith.addf %19, %18 : vector<8x128xf32>
    %21 = arith.divf %19, %20 : vector<8x128xf32>
    %22 = vector.extract_strided_slice %10 {offsets = [0, 128], sizes = [8, 128], strides = [1, 1]} : vector<8x384xf32> to vector<8x128xf32>
    %23 = vector.extract_strided_slice %13 {offsets = [0, 128], sizes = [8, 128], strides = [1, 1]} : vector<8x384xf32> to vector<8x128xf32>
    %24 = arith.addf %22, %23 : vector<8x128xf32>
    %25 = arith.negf %24 : vector<8x128xf32>
    %26 = math.exp %25 : vector<8x128xf32>
    %cst_10 = arith.constant 1.000000e+00 : f32
    %27 = vector.broadcast %cst_10 : f32 to vector<8x128xf32>
    %28 = arith.addf %27, %26 : vector<8x128xf32>
    %29 = arith.divf %27, %28 : vector<8x128xf32>
    %30 = vector.extract_strided_slice %10 {offsets = [0, 256], sizes = [8, 128], strides = [1, 1]} : vector<8x384xf32> to vector<8x128xf32>
    %31 = vector.extract_strided_slice %13 {offsets = [0, 256], sizes = [8, 128], strides = [1, 1]} : vector<8x384xf32> to vector<8x128xf32>
    %32 = arith.addf %31, %5 : vector<8x128xf32>
    %33 = arith.mulf %21, %32 : vector<8x128xf32>
    %34 = arith.addf %30, %33 : vector<8x128xf32>
    %35 = math.tanh %34 : vector<8x128xf32>
    %cst_11 = arith.constant 1.000000e+00 : f32
    %36 = vector.broadcast %cst_11 : f32 to vector<8x128xf32>
    %37 = arith.subf %36, %29 : vector<8x128xf32>
    %38 = arith.mulf %37, %35 : vector<8x128xf32>
    %39 = arith.mulf %29, %6 : vector<8x128xf32>
    %40 = arith.addf %38, %39 : vector<8x128xf32>
    %41 = arith.truncf %40 : vector<8x128xf32> to vector<8x128xbf16>
    %42 = arith.index_cast %c0_i32_4 : i32 to index
    %c0_12 = arith.constant 0 : index
    %c0_13 = arith.constant 0 : index
    %43 = vector.load %arg5[%42, %c0_12, %c0_13] : memref<8x8x128xbf16, #tpu.memory_space<vmem>>, vector<1x8x128xbf16>
    %44 = vector.shape_cast %43 : vector<1x8x128xbf16> to vector<8x128xbf16>
    %45 = vector.shape_cast %41 : vector<8x128xbf16> to vector<1x8x128xbf16>
    tpu.vector_store %arg5[%42, %c0_12, %c0_13], %45 {strides = array<i32>} : memref<8x8x128xbf16, #tpu.memory_space<vmem>>, vector<1x8x128xbf16>,
    %c1_i32 = arith.constant 1 : i32
    %46 = arith.index_cast %c1_i32 : i32 to index
    %c0_14 = arith.constant 0 : index
    %c0_15 = arith.constant 0 : index
    %47 = vector.load %arg1[%46, %c0_14, %c0_15] : memref<8x8x384xbf16, #tpu.memory_space<vmem>>, vector<1x8x384xbf16>
    %48 = vector.shape_cast %47 : vector<1x8x384xbf16> to vector<8x384xbf16>
    %49 = arith.extf %48 : vector<8x384xbf16> to vector<8x384xf32>
    %50 = arith.truncf %40 : vector<8x128xf32> to vector<8x128xbf16>
    %c0_16 = arith.constant 0 : index
    %c0_17 = arith.constant 0 : index
    %51 = vector.load %arg3[%c0_16, %c0_17] : memref<128x384xbf16, #tpu.memory_space<vmem>>, vector<128x384xbf16>
    %cst_18 = arith.constant dense<0.000000e+00> : vector<8x384xf32>
    %52 = tpu.matmul %50, %51, %cst_18 {dimension_numbers = #tpu.dot_dimension_numbers<[1], [0], [0], [1], [0, 0, 1, 1], [], []>} : vector<8x128xbf16>, vector<128x384xbf16>, vector<8x384xf32> -> vector<8x384xf32>
    %53 = vector.extract_strided_slice %49 {offsets = [0, 0], sizes = [8, 128], strides = [1, 1]} : vector<8x384xf32> to vector<8x128xf32>
    %54 = vector.extract_strided_slice %52 {offsets = [0, 0], sizes = [8, 128], strides = [1, 1]} : vector<8x384xf32> to vector<8x128xf32>
    %55 = arith.addf %53, %54 : vector<8x128xf32>
    %56 = arith.negf %55 : vector<8x128xf32>
    %57 = math.exp %56 : vector<8x128xf32>
    %cst_19 = arith.constant 1.000000e+00 : f32
    %58 = vector.broadcast %cst_19 : f32 to vector<8x128xf32>
    %59 = arith.addf %58, %57 : vector<8x128xf32>
    %60 = arith.divf %58, %59 : vector<8x128xf32>
    %61 = vector.extract_strided_slice %49 {offsets = [0, 128], sizes = [8, 128], strides = [1, 1]} : vector<8x384xf32> to vector<8x128xf32>
    %62 = vector.extract_strided_slice %52 {offsets = [0, 128], sizes = [8, 128], strides = [1, 1]} : vector<8x384xf32> to vector<8x128xf32>
    %63 = arith.addf %61, %62 : vector<8x128xf32>
    %64 = arith.negf %63 : vector<8x128xf32>
    %65 = math.exp %64 : vector<8x128xf32>
    %cst_20 = arith.constant 1.000000e+00 : f32
    %66 = vector.broadcast %cst_20 : f32 to vector<8x128xf32>
    %67 = arith.addf %66, %65 : vector<8x128xf32>
    %68 = arith.divf %66, %67 : vector<8x128xf32>
    %69 = vector.extract_strided_slice %49 {offsets = [0, 256], sizes = [8, 128], strides = [1, 1]} : vector<8x384xf32> to vector<8x128xf32>
    %70 = vector.extract_strided_slice %52 {offsets = [0, 256], sizes = [8, 128], strides = [1, 1]} : vector<8x384xf32> to vector<8x128xf32>
    %71 = arith.addf %70, %5 : vector<8x128xf32>
    %72 = arith.mulf %60, %71 : vector<8x128xf32>
    %73 = arith.addf %69, %72 : vector<8x128xf32>
    %74 = math.tanh %73 : vector<8x128xf32>
    %cst_21 = arith.constant 1.000000e+00 : f32
    %75 = vector.broadcast %cst_21 : f32 to vector<8x128xf32>
    %76 = arith.subf %75, %68 : vector<8x128xf32>
    %77 = arith.mulf %76, %74 : vector<8x128xf32>
    %78 = arith.mulf %68, %40 : vector<8x128xf32>
    %79 = arith.addf %77, %78 : vector<8x128xf32>
    %80 = arith.truncf %79 : vector<8x128xf32> to vector<8x128xbf16>
    %81 = arith.index_cast %c1_i32 : i32 to index
    %c0_22 = arith.constant 0 : index
    %c0_23 = arith.constant 0 : index
    %82 = vector.load %arg5[%81, %c0_22, %c0_23] : memref<8x8x128xbf16, #tpu.memory_space<vmem>>, vector<1x8x128xbf16>
    %83 = vector.shape_cast %82 : vector<1x8x128xbf16> to vector<8x128xbf16>
    %84 = vector.shape_cast %80 : vector<8x128xbf16> to vector<1x8x128xbf16>
    tpu.vector_store %arg5[%81, %c0_22, %c0_23], %84 {strides = array<i32>} : memref<8x8x128xbf16, #tpu.memory_space<vmem>>, vector<1x8x128xbf16>,
    %c2_i32 = arith.constant 2 : i32
    %85 = arith.index_cast %c2_i32 : i32 to index
    %c0_24 = arith.constant 0 : index
    %c0_25 = arith.constant 0 : index
    %86 = vector.load %arg1[%85, %c0_24, %c0_25] : memref<8x8x384xbf16, #tpu.memory_space<vmem>>, vector<1x8x384xbf16>
    %87 = vector.shape_cast %86 : vector<1x8x384xbf16> to vector<8x384xbf16>
    %88 = arith.extf %87 : vector<8x384xbf16> to vector<8x384xf32>
    %89 = arith.truncf %79 : vector<8x128xf32> to vector<8x128xbf16>
    %c0_26 = arith.constant 0 : index
    %c0_27 = arith.constant 0 : index
    %90 = vector.load %arg3[%c0_26, %c0_27] : memref<128x384xbf16, #tpu.memory_space<vmem>>, vector<128x384xbf16>
    %cst_28 = arith.constant dense<0.000000e+00> : vector<8x384xf32>
    %91 = tpu.matmul %89, %90, %cst_28 {dimension_numbers = #tpu.dot_dimension_numbers<[1], [0], [0], [1], [0, 0, 1, 1], [], []>} : vector<8x128xbf16>, vector<128x384xbf16>, vector<8x384xf32> -> vector<8x384xf32>
    %92 = vector.extract_strided_slice %88 {offsets = [0, 0], sizes = [8, 128], strides = [1, 1]} : vector<8x384xf32> to vector<8x128xf32>
    %93 = vector.extract_strided_slice %91 {offsets = [0, 0], sizes = [8, 128], strides = [1, 1]} : vector<8x384xf32> to vector<8x128xf32>
    %94 = arith.addf %92, %93 : vector<8x128xf32>
    %95 = arith.negf %94 : vector<8x128xf32>
    %96 = math.exp %95 : vector<8x128xf32>
    %cst_29 = arith.constant 1.000000e+00 : f32
    %97 = vector.broadcast %cst_29 : f32 to vector<8x128xf32>
    %98 = arith.addf %97, %96 : vector<8x128xf32>
    %99 = arith.divf %97, %98 : vector<8x128xf32>
    %100 = vector.extract_strided_slice %88 {offsets = [0, 128], sizes = [8, 128], strides = [1, 1]} : vector<8x384xf32> to vector<8x128xf32>
    %101 = vector.extract_strided_slice %91 {offsets = [0, 128], sizes = [8, 128], strides = [1, 1]} : vector<8x384xf32> to vector<8x128xf32>
    %102 = arith.addf %100, %101 : vector<8x128xf32>
    %103 = arith.negf %102 : vector<8x128xf32>
    %104 = math.exp %103 : vector<8x128xf32>
    %cst_30 = arith.constant 1.000000e+00 : f32
    %105 = vector.broadcast %cst_30 : f32 to vector<8x128xf32>
    %106 = arith.addf %105, %104 : vector<8x128xf32>
    %107 = arith.divf %105, %106 : vector<8x128xf32>
    %108 = vector.extract_strided_slice %88 {offsets = [0, 256], sizes = [8, 128], strides = [1, 1]} : vector<8x384xf32> to vector<8x128xf32>
    %109 = vector.extract_strided_slice %91 {offsets = [0, 256], sizes = [8, 128], strides = [1, 1]} : vector<8x384xf32> to vector<8x128xf32>
    %110 = arith.addf %109, %5 : vector<8x128xf32>
    %111 = arith.mulf %99, %110 : vector<8x128xf32>
    %112 = arith.addf %108, %111 : vector<8x128xf32>
    %113 = math.tanh %112 : vector<8x128xf32>
    %cst_31 = arith.constant 1.000000e+00 : f32
    %114 = vector.broadcast %cst_31 : f32 to vector<8x128xf32>
    %115 = arith.subf %114, %107 : vector<8x128xf32>
    %116 = arith.mulf %115, %113 : vector<8x128xf32>
    %117 = arith.mulf %107, %79 : vector<8x128xf32>
    %118 = arith.addf %116, %117 : vector<8x128xf32>
    %119 = arith.truncf %118 : vector<8x128xf32> to vector<8x128xbf16>
    %120 = arith.index_cast %c2_i32 : i32 to index
    %c0_32 = arith.constant 0 : index
    %c0_33 = arith.constant 0 : index
    %121 = vector.load %arg5[%120, %c0_32, %c0_33] : memref<8x8x128xbf16, #tpu.memory_space<vmem>>, vector<1x8x128xbf16>
    %122 = vector.shape_cast %121 : vector<1x8x128xbf16> to vector<8x128xbf16>
    %123 = vector.shape_cast %119 : vector<8x128xbf16> to vector<1x8x128xbf16>
    tpu.vector_store %arg5[%120, %c0_32, %c0_33], %123 {strides = array<i32>} : memref<8x8x128xbf16, #tpu.memory_space<vmem>>, vector<1x8x128xbf16>,
    %c3_i32 = arith.constant 3 : i32
    %124 = arith.index_cast %c3_i32 : i32 to index
    %c0_34 = arith.constant 0 : index
    %c0_35 = arith.constant 0 : index
    %125 = vector.load %arg1[%124, %c0_34, %c0_35] : memref<8x8x384xbf16, #tpu.memory_space<vmem>>, vector<1x8x384xbf16>
    %126 = vector.shape_cast %125 : vector<1x8x384xbf16> to vector<8x384xbf16>
    %127 = arith.extf %126 : vector<8x384xbf16> to vector<8x384xf32>
    %128 = arith.truncf %118 : vector<8x128xf32> to vector<8x128xbf16>
    %c0_36 = arith.constant 0 : index
    %c0_37 = arith.constant 0 : index
    %129 = vector.load %arg3[%c0_36, %c0_37] : memref<128x384xbf16, #tpu.memory_space<vmem>>, vector<128x384xbf16>
    %cst_38 = arith.constant dense<0.000000e+00> : vector<8x384xf32>
    %130 = tpu.matmul %128, %129, %cst_38 {dimension_numbers = #tpu.dot_dimension_numbers<[1], [0], [0], [1], [0, 0, 1, 1], [], []>} : vector<8x128xbf16>, vector<128x384xbf16>, vector<8x384xf32> -> vector<8x384xf32>
    %131 = vector.extract_strided_slice %127 {offsets = [0, 0], sizes = [8, 128], strides = [1, 1]} : vector<8x384xf32> to vector<8x128xf32>
    %132 = vector.extract_strided_slice %130 {offsets = [0, 0], sizes = [8, 128], strides = [1, 1]} : vector<8x384xf32> to vector<8x128xf32>
    %133 = arith.addf %131, %132 : vector<8x128xf32>
    %134 = arith.negf %133 : vector<8x128xf32>
    %135 = math.exp %134 : vector<8x128xf32>
    %cst_39 = arith.constant 1.000000e+00 : f32
    %136 = vector.broadcast %cst_39 : f32 to vector<8x128xf32>
    %137 = arith.addf %136, %135 : vector<8x128xf32>
    %138 = arith.divf %136, %137 : vector<8x128xf32>
    %139 = vector.extract_strided_slice %127 {offsets = [0, 128], sizes = [8, 128], strides = [1, 1]} : vector<8x384xf32> to vector<8x128xf32>
    %140 = vector.extract_strided_slice %130 {offsets = [0, 128], sizes = [8, 128], strides = [1, 1]} : vector<8x384xf32> to vector<8x128xf32>
    %141 = arith.addf %139, %140 : vector<8x128xf32>
    %142 = arith.negf %141 : vector<8x128xf32>
    %143 = math.exp %142 : vector<8x128xf32>
    %cst_40 = arith.constant 1.000000e+00 : f32
    %144 = vector.broadcast %cst_40 : f32 to vector<8x128xf32>
    %145 = arith.addf %144, %143 : vector<8x128xf32>
    %146 = arith.divf %144, %145 : vector<8x128xf32>
    %147 = vector.extract_strided_slice %127 {offsets = [0, 256], sizes = [8, 128], strides = [1, 1]} : vector<8x384xf32> to vector<8x128xf32>
    %148 = vector.extract_strided_slice %130 {offsets = [0, 256], sizes = [8, 128], strides = [1, 1]} : vector<8x384xf32> to vector<8x128xf32>
    %149 = arith.addf %148, %5 : vector<8x128xf32>
    %150 = arith.mulf %138, %149 : vector<8x128xf32>
    %151 = arith.addf %147, %150 : vector<8x128xf32>
    %152 = math.tanh %151 : vector<8x128xf32>
    %cst_41 = arith.constant 1.000000e+00 : f32
    %153 = vector.broadcast %cst_41 : f32 to vector<8x128xf32>
    %154 = arith.subf %153, %146 : vector<8x128xf32>
    %155 = arith.mulf %154, %152 : vector<8x128xf32>
    %156 = arith.mulf %146, %118 : vector<8x128xf32>
    %157 = arith.addf %155, %156 : vector<8x128xf32>
    %158 = arith.truncf %157 : vector<8x128xf32> to vector<8x128xbf16>
    %159 = arith.index_cast %c3_i32 : i32 to index
    %c0_42 = arith.constant 0 : index
    %c0_43 = arith.constant 0 : index
    %160 = vector.load %arg5[%159, %c0_42, %c0_43] : memref<8x8x128xbf16, #tpu.memory_space<vmem>>, vector<1x8x128xbf16>
    %161 = vector.shape_cast %160 : vector<1x8x128xbf16> to vector<8x128xbf16>
    %162 = vector.shape_cast %158 : vector<8x128xbf16> to vector<1x8x128xbf16>
    tpu.vector_store %arg5[%159, %c0_42, %c0_43], %162 {strides = array<i32>} : memref<8x8x128xbf16, #tpu.memory_space<vmem>>, vector<1x8x128xbf16>,
    %c4_i32 = arith.constant 4 : i32
    %163 = arith.index_cast %c4_i32 : i32 to index
    %c0_44 = arith.constant 0 : index
    %c0_45 = arith.constant 0 : index
    %164 = vector.load %arg1[%163, %c0_44, %c0_45] : memref<8x8x384xbf16, #tpu.memory_space<vmem>>, vector<1x8x384xbf16>
    %165 = vector.shape_cast %164 : vector<1x8x384xbf16> to vector<8x384xbf16>
    %166 = arith.extf %165 : vector<8x384xbf16> to vector<8x384xf32>
    %167 = arith.truncf %157 : vector<8x128xf32> to vector<8x128xbf16>
    %c0_46 = arith.constant 0 : index
    %c0_47 = arith.constant 0 : index
    %168 = vector.load %arg3[%c0_46, %c0_47] : memref<128x384xbf16, #tpu.memory_space<vmem>>, vector<128x384xbf16>
    %cst_48 = arith.constant dense<0.000000e+00> : vector<8x384xf32>
    %169 = tpu.matmul %167, %168, %cst_48 {dimension_numbers = #tpu.dot_dimension_numbers<[1], [0], [0], [1], [0, 0, 1, 1], [], []>} : vector<8x128xbf16>, vector<128x384xbf16>, vector<8x384xf32> -> vector<8x384xf32>
    %170 = vector.extract_strided_slice %166 {offsets = [0, 0], sizes = [8, 128], strides = [1, 1]} : vector<8x384xf32> to vector<8x128xf32>
    %171 = vector.extract_strided_slice %169 {offsets = [0, 0], sizes = [8, 128], strides = [1, 1]} : vector<8x384xf32> to vector<8x128xf32>
    %172 = arith.addf %170, %171 : vector<8x128xf32>
    %173 = arith.negf %172 : vector<8x128xf32>
    %174 = math.exp %173 : vector<8x128xf32>
    %cst_49 = arith.constant 1.000000e+00 : f32
    %175 = vector.broadcast %cst_49 : f32 to vector<8x128xf32>
    %176 = arith.addf %175, %174 : vector<8x128xf32>
    %177 = arith.divf %175, %176 : vector<8x128xf32>
    %178 = vector.extract_strided_slice %166 {offsets = [0, 128], sizes = [8, 128], strides = [1, 1]} : vector<8x384xf32> to vector<8x128xf32>
    %179 = vector.extract_strided_slice %169 {offsets = [0, 128], sizes = [8, 128], strides = [1, 1]} : vector<8x384xf32> to vector<8x128xf32>
    %180 = arith.addf %178, %179 : vector<8x128xf32>
    %181 = arith.negf %180 : vector<8x128xf32>
    %182 = math.exp %181 : vector<8x128xf32>
    %cst_50 = arith.constant 1.000000e+00 : f32
    %183 = vector.broadcast %cst_50 : f32 to vector<8x128xf32>
    %184 = arith.addf %183, %182 : vector<8x128xf32>
    %185 = arith.divf %183, %184 : vector<8x128xf32>
    %186 = vector.extract_strided_slice %166 {offsets = [0, 256], sizes = [8, 128], strides = [1, 1]} : vector<8x384xf32> to vector<8x128xf32>
    %187 = vector.extract_strided_slice %169 {offsets = [0, 256], sizes = [8, 128], strides = [1, 1]} : vector<8x384xf32> to vector<8x128xf32>
    %188 = arith.addf %187, %5 : vector<8x128xf32>
    %189 = arith.mulf %177, %188 : vector<8x128xf32>
    %190 = arith.addf %186, %189 : vector<8x128xf32>
    %191 = math.tanh %190 : vector<8x128xf32>
    %cst_51 = arith.constant 1.000000e+00 : f32
    %192 = vector.broadcast %cst_51 : f32 to vector<8x128xf32>
    %193 = arith.subf %192, %185 : vector<8x128xf32>
    %194 = arith.mulf %193, %191 : vector<8x128xf32>
    %195 = arith.mulf %185, %157 : vector<8x128xf32>
    %196 = arith.addf %194, %195 : vector<8x128xf32>
    %197 = arith.truncf %196 : vector<8x128xf32> to vector<8x128xbf16>
    %198 = arith.index_cast %c4_i32 : i32 to index
    %c0_52 = arith.constant 0 : index
    %c0_53 = arith.constant 0 : index
    %199 = vector.load %arg5[%198, %c0_52, %c0_53] : memref<8x8x128xbf16, #tpu.memory_space<vmem>>, vector<1x8x128xbf16>
    %200 = vector.shape_cast %199 : vector<1x8x128xbf16> to vector<8x128xbf16>
    %201 = vector.shape_cast %197 : vector<8x128xbf16> to vector<1x8x128xbf16>
    tpu.vector_store %arg5[%198, %c0_52, %c0_53], %201 {strides = array<i32>} : memref<8x8x128xbf16, #tpu.memory_space<vmem>>, vector<1x8x128xbf16>,
    %c5_i32 = arith.constant 5 : i32
    %202 = arith.index_cast %c5_i32 : i32 to index
    %c0_54 = arith.constant 0 : index
    %c0_55 = arith.constant 0 : index
    %203 = vector.load %arg1[%202, %c0_54, %c0_55] : memref<8x8x384xbf16, #tpu.memory_space<vmem>>, vector<1x8x384xbf16>
    %204 = vector.shape_cast %203 : vector<1x8x384xbf16> to vector<8x384xbf16>
    %205 = arith.extf %204 : vector<8x384xbf16> to vector<8x384xf32>
    %206 = arith.truncf %196 : vector<8x128xf32> to vector<8x128xbf16>
    %c0_56 = arith.constant 0 : index
    %c0_57 = arith.constant 0 : index
    %207 = vector.load %arg3[%c0_56, %c0_57] : memref<128x384xbf16, #tpu.memory_space<vmem>>, vector<128x384xbf16>
    %cst_58 = arith.constant dense<0.000000e+00> : vector<8x384xf32>
    %208 = tpu.matmul %206, %207, %cst_58 {dimension_numbers = #tpu.dot_dimension_numbers<[1], [0], [0], [1], [0, 0, 1, 1], [], []>} : vector<8x128xbf16>, vector<128x384xbf16>, vector<8x384xf32> -> vector<8x384xf32>
    %209 = vector.extract_strided_slice %205 {offsets = [0, 0], sizes = [8, 128], strides = [1, 1]} : vector<8x384xf32> to vector<8x128xf32>
    %210 = vector.extract_strided_slice %208 {offsets = [0, 0], sizes = [8, 128], strides = [1, 1]} : vector<8x384xf32> to vector<8x128xf32>
    %211 = arith.addf %209, %210 : vector<8x128xf32>
    %212 = arith.negf %211 : vector<8x128xf32>
    %213 = math.exp %212 : vector<8x128xf32>
    %cst_59 = arith.constant 1.000000e+00 : f32
    %214 = vector.broadcast %cst_59 : f32 to vector<8x128xf32>
    %215 = arith.addf %214, %213 : vector<8x128xf32>
    %216 = arith.divf %214, %215 : vector<8x128xf32>
    %217 = vector.extract_strided_slice %205 {offsets = [0, 128], sizes = [8, 128], strides = [1, 1]} : vector<8x384xf32> to vector<8x128xf32>
    %218 = vector.extract_strided_slice %208 {offsets = [0, 128], sizes = [8, 128], strides = [1, 1]} : vector<8x384xf32> to vector<8x128xf32>
    %219 = arith.addf %217, %218 : vector<8x128xf32>
    %220 = arith.negf %219 : vector<8x128xf32>
    %221 = math.exp %220 : vector<8x128xf32>
    %cst_60 = arith.constant 1.000000e+00 : f32
    %222 = vector.broadcast %cst_60 : f32 to vector<8x128xf32>
    %223 = arith.addf %222, %221 : vector<8x128xf32>
    %224 = arith.divf %222, %223 : vector<8x128xf32>
    %225 = vector.extract_strided_slice %205 {offsets = [0, 256], sizes = [8, 128], strides = [1, 1]} : vector<8x384xf32> to vector<8x128xf32>
    %226 = vector.extract_strided_slice %208 {offsets = [0, 256], sizes = [8, 128], strides = [1, 1]} : vector<8x384xf32> to vector<8x128xf32>
    %227 = arith.addf %226, %5 : vector<8x128xf32>
    %228 = arith.mulf %216, %227 : vector<8x128xf32>
    %229 = arith.addf %225, %228 : vector<8x128xf32>
    %230 = math.tanh %229 : vector<8x128xf32>
    %cst_61 = arith.constant 1.000000e+00 : f32
    %231 = vector.broadcast %cst_61 : f32 to vector<8x128xf32>
    %232 = arith.subf %231, %224 : vector<8x128xf32>
    %233 = arith.mulf %232, %230 : vector<8x128xf32>
    %234 = arith.mulf %224, %196 : vector<8x128xf32>
    %235 = arith.addf %233, %234 : vector<8x128xf32>
    %236 = arith.truncf %235 : vector<8x128xf32> to vector<8x128xbf16>
    %237 = arith.index_cast %c5_i32 : i32 to index
    %c0_62 = arith.constant 0 : index
    %c0_63 = arith.constant 0 : index
    %238 = vector.load %arg5[%237, %c0_62, %c0_63] : memref<8x8x128xbf16, #tpu.memory_space<vmem>>, vector<1x8x128xbf16>
    %239 = vector.shape_cast %238 : vector<1x8x128xbf16> to vector<8x128xbf16>
    %240 = vector.shape_cast %236 : vector<8x128xbf16> to vector<1x8x128xbf16>
    tpu.vector_store %arg5[%237, %c0_62, %c0_63], %240 {strides = array<i32>} : memref<8x8x128xbf16, #tpu.memory_space<vmem>>, vector<1x8x128xbf16>,
    %c6_i32 = arith.constant 6 : i32
    %241 = arith.index_cast %c6_i32 : i32 to index
    %c0_64 = arith.constant 0 : index
    %c0_65 = arith.constant 0 : index
    %242 = vector.load %arg1[%241, %c0_64, %c0_65] : memref<8x8x384xbf16, #tpu.memory_space<vmem>>, vector<1x8x384xbf16>
    %243 = vector.shape_cast %242 : vector<1x8x384xbf16> to vector<8x384xbf16>
    %244 = arith.extf %243 : vector<8x384xbf16> to vector<8x384xf32>
    %245 = arith.truncf %235 : vector<8x128xf32> to vector<8x128xbf16>
    %c0_66 = arith.constant 0 : index
    %c0_67 = arith.constant 0 : index
    %246 = vector.load %arg3[%c0_66, %c0_67] : memref<128x384xbf16, #tpu.memory_space<vmem>>, vector<128x384xbf16>
    %cst_68 = arith.constant dense<0.000000e+00> : vector<8x384xf32>
    %247 = tpu.matmul %245, %246, %cst_68 {dimension_numbers = #tpu.dot_dimension_numbers<[1], [0], [0], [1], [0, 0, 1, 1], [], []>} : vector<8x128xbf16>, vector<128x384xbf16>, vector<8x384xf32> -> vector<8x384xf32>
    %248 = vector.extract_strided_slice %244 {offsets = [0, 0], sizes = [8, 128], strides = [1, 1]} : vector<8x384xf32> to vector<8x128xf32>
    %249 = vector.extract_strided_slice %247 {offsets = [0, 0], sizes = [8, 128], strides = [1, 1]} : vector<8x384xf32> to vector<8x128xf32>
    %250 = arith.addf %248, %249 : vector<8x128xf32>
    %251 = arith.negf %250 : vector<8x128xf32>
    %252 = math.exp %251 : vector<8x128xf32>
    %cst_69 = arith.constant 1.000000e+00 : f32
    %253 = vector.broadcast %cst_69 : f32 to vector<8x128xf32>
    %254 = arith.addf %253, %252 : vector<8x128xf32>
    %255 = arith.divf %253, %254 : vector<8x128xf32>
    %256 = vector.extract_strided_slice %244 {offsets = [0, 128], sizes = [8, 128], strides = [1, 1]} : vector<8x384xf32> to vector<8x128xf32>
    %257 = vector.extract_strided_slice %247 {offsets = [0, 128], sizes = [8, 128], strides = [1, 1]} : vector<8x384xf32> to vector<8x128xf32>
    %258 = arith.addf %256, %257 : vector<8x128xf32>
    %259 = arith.negf %258 : vector<8x128xf32>
    %260 = math.exp %259 : vector<8x128xf32>
    %cst_70 = arith.constant 1.000000e+00 : f32
    %261 = vector.broadcast %cst_70 : f32 to vector<8x128xf32>
    %262 = arith.addf %261, %260 : vector<8x128xf32>
    %263 = arith.divf %261, %262 : vector<8x128xf32>
    %264 = vector.extract_strided_slice %244 {offsets = [0, 256], sizes = [8, 128], strides = [1, 1]} : vector<8x384xf32> to vector<8x128xf32>
    %265 = vector.extract_strided_slice %247 {offsets = [0, 256], sizes = [8, 128], strides = [1, 1]} : vector<8x384xf32> to vector<8x128xf32>
    %266 = arith.addf %265, %5 : vector<8x128xf32>
    %267 = arith.mulf %255, %266 : vector<8x128xf32>
    %268 = arith.addf %264, %267 : vector<8x128xf32>
    %269 = math.tanh %268 : vector<8x128xf32>
    %cst_71 = arith.constant 1.000000e+00 : f32
    %270 = vector.broadcast %cst_71 : f32 to vector<8x128xf32>
    %271 = arith.subf %270, %263 : vector<8x128xf32>
    %272 = arith.mulf %271, %269 : vector<8x128xf32>
    %273 = arith.mulf %263, %235 : vector<8x128xf32>
    %274 = arith.addf %272, %273 : vector<8x128xf32>
    %275 = arith.truncf %274 : vector<8x128xf32> to vector<8x128xbf16>
    %276 = arith.index_cast %c6_i32 : i32 to index
    %c0_72 = arith.constant 0 : index
    %c0_73 = arith.constant 0 : index
    %277 = vector.load %arg5[%276, %c0_72, %c0_73] : memref<8x8x128xbf16, #tpu.memory_space<vmem>>, vector<1x8x128xbf16>
    %278 = vector.shape_cast %277 : vector<1x8x128xbf16> to vector<8x128xbf16>
    %279 = vector.shape_cast %275 : vector<8x128xbf16> to vector<1x8x128xbf16>
    tpu.vector_store %arg5[%276, %c0_72, %c0_73], %279 {strides = array<i32>} : memref<8x8x128xbf16, #tpu.memory_space<vmem>>, vector<1x8x128xbf16>,
    %c7_i32 = arith.constant 7 : i32
    %280 = arith.index_cast %c7_i32 : i32 to index
    %c0_74 = arith.constant 0 : index
    %c0_75 = arith.constant 0 : index
    %281 = vector.load %arg1[%280, %c0_74, %c0_75] : memref<8x8x384xbf16, #tpu.memory_space<vmem>>, vector<1x8x384xbf16>
    %282 = vector.shape_cast %281 : vector<1x8x384xbf16> to vector<8x384xbf16>
    %283 = arith.extf %282 : vector<8x384xbf16> to vector<8x384xf32>
    %284 = arith.truncf %274 : vector<8x128xf32> to vector<8x128xbf16>
    %c0_76 = arith.constant 0 : index
    %c0_77 = arith.constant 0 : index
    %285 = vector.load %arg3[%c0_76, %c0_77] : memref<128x384xbf16, #tpu.memory_space<vmem>>, vector<128x384xbf16>
    %cst_78 = arith.constant dense<0.000000e+00> : vector<8x384xf32>
    %286 = tpu.matmul %284, %285, %cst_78 {dimension_numbers = #tpu.dot_dimension_numbers<[1], [0], [0], [1], [0, 0, 1, 1], [], []>} : vector<8x128xbf16>, vector<128x384xbf16>, vector<8x384xf32> -> vector<8x384xf32>
    %287 = vector.extract_strided_slice %283 {offsets = [0, 0], sizes = [8, 128], strides = [1, 1]} : vector<8x384xf32> to vector<8x128xf32>
    %288 = vector.extract_strided_slice %286 {offsets = [0, 0], sizes = [8, 128], strides = [1, 1]} : vector<8x384xf32> to vector<8x128xf32>
    %289 = arith.addf %287, %288 : vector<8x128xf32>
    %290 = arith.negf %289 : vector<8x128xf32>
    %291 = math.exp %290 : vector<8x128xf32>
    %cst_79 = arith.constant 1.000000e+00 : f32
    %292 = vector.broadcast %cst_79 : f32 to vector<8x128xf32>
    %293 = arith.addf %292, %291 : vector<8x128xf32>
    %294 = arith.divf %292, %293 : vector<8x128xf32>
    %295 = vector.extract_strided_slice %283 {offsets = [0, 128], sizes = [8, 128], strides = [1, 1]} : vector<8x384xf32> to vector<8x128xf32>
    %296 = vector.extract_strided_slice %286 {offsets = [0, 128], sizes = [8, 128], strides = [1, 1]} : vector<8x384xf32> to vector<8x128xf32>
    %297 = arith.addf %295, %296 : vector<8x128xf32>
    %298 = arith.negf %297 : vector<8x128xf32>
    %299 = math.exp %298 : vector<8x128xf32>
    %cst_80 = arith.constant 1.000000e+00 : f32
    %300 = vector.broadcast %cst_80 : f32 to vector<8x128xf32>
    %301 = arith.addf %300, %299 : vector<8x128xf32>
    %302 = arith.divf %300, %301 : vector<8x128xf32>
    %303 = vector.extract_strided_slice %283 {offsets = [0, 256], sizes = [8, 128], strides = [1, 1]} : vector<8x384xf32> to vector<8x128xf32>
    %304 = vector.extract_strided_slice %286 {offsets = [0, 256], sizes = [8, 128], strides = [1, 1]} : vector<8x384xf32> to vector<8x128xf32>
    %305 = arith.addf %304, %5 : vector<8x128xf32>
    %306 = arith.mulf %294, %305 : vector<8x128xf32>
    %307 = arith.addf %303, %306 : vector<8x128xf32>
    %308 = math.tanh %307 : vector<8x128xf32>
    %cst_81 = arith.constant 1.000000e+00 : f32
    %309 = vector.broadcast %cst_81 : f32 to vector<8x128xf32>
    %310 = arith.subf %309, %302 : vector<8x128xf32>
    %311 = arith.mulf %310, %308 : vector<8x128xf32>
    %312 = arith.mulf %302, %274 : vector<8x128xf32>
    %313 = arith.addf %311, %312 : vector<8x128xf32>
    %314 = arith.truncf %313 : vector<8x128xf32> to vector<8x128xbf16>
    %315 = arith.index_cast %c7_i32 : i32 to index
    %c0_82 = arith.constant 0 : index
    %c0_83 = arith.constant 0 : index
    %316 = vector.load %arg5[%315, %c0_82, %c0_83] : memref<8x8x128xbf16, #tpu.memory_space<vmem>>, vector<1x8x128xbf16>
    %317 = vector.shape_cast %316 : vector<1x8x128xbf16> to vector<8x128xbf16>
    %318 = vector.shape_cast %314 : vector<8x128xbf16> to vector<1x8x128xbf16>
    tpu.vector_store %arg5[%315, %c0_82, %c0_83], %318 {strides = array<i32>} : memref<8x8x128xbf16, #tpu.memory_space<vmem>>, vector<1x8x128xbf16>,
    %c8_i32 = arith.constant 8 : i32
    %c0_84 = arith.constant 0 : index
    %c0_85 = arith.constant 0 : index
    %319 = vector.load %arg6[%c0_84, %c0_85] : memref<8x128xf32, #tpu.memory_space<vmem>>, vector<8x128xf32>
    tpu.vector_store %arg6[%c0_84, %c0_85], %313 {strides = array<i32>} : memref<8x128xf32, #tpu.memory_space<vmem>>, vector<8x128xf32>,
    return
  }
  func.func @transform_0(%arg0: i32) -> (i32, i32, i32) {
    %c0_i32 = arith.constant 0 : i32
    %c0_i32_0 = arith.constant 0 : i32
    %c0_i32_1 = arith.constant 0 : i32
    return %arg0, %c0_i32, %c0_i32_0 : i32, i32, i32
  }
  func.func @transform_1(%arg0: i32) -> (i32, i32) {
    %c0_i32 = arith.constant 0 : i32
    %c0_i32_0 = arith.constant 0 : i32
    %c0_i32_1 = arith.constant 0 : i32
    return %c0_i32, %c0_i32_0 : i32, i32
  }
  func.func @transform_2(%arg0: i32) -> (i32, i32) {
    %c0_i32 = arith.constant 0 : i32
    %c0_i32_0 = arith.constant 0 : i32
    %c0_i32_1 = arith.constant 0 : i32
    return %c0_i32, %c0_i32_0 : i32, i32
  }
  func.func @transform_3(%arg0: i32) -> (i32, i32) {
    %c0_i32 = arith.constant 0 : i32
    %c0_i32_0 = arith.constant 0 : i32
    %c0_i32_1 = arith.constant 0 : i32
    return %c0_i32, %c0_i32_0 : i32, i32
  }
  func.func @transform_4(%arg0: i32) -> (i32, i32, i32) {
    %c0_i32 = arith.constant 0 : i32
    %c0_i32_0 = arith.constant 0 : i32
    %c0_i32_1 = arith.constant 0 : i32
    return %arg0, %c0_i32, %c0_i32_0 : i32, i32, i32
  }
}

module attributes {stable_mosaic.version = 11 : i64} {
  func.func @_linear_kernel(%arg0: i32, %arg1: i32, %arg2: memref<16x128xbf16, #tpu.memory_space<vmem>>, %arg3: memref<128x128xbf16, #tpu.memory_space<vmem>>, %arg4: memref<1x128xf32, #tpu.memory_space<vmem>>, %arg5: memref<16x128xf32, #tpu.memory_space<vmem>>) attributes {dimension_semantics = [#tpu.dimension_semantics<parallel>, #tpu.dimension_semantics<parallel>], iteration_bounds = array<i64: 1, 1>, scalar_prefetch = 0 : i64, scratch_operands = 0 : i64, tpu.core_type = #tpu.core_type<tc>, window_params = [{transform_indices = @transform_0, window_bounds = array<i64: 16, 128>}, {transform_indices = @transform_1, window_bounds = array<i64: 128, 128>}, {transform_indices = @transform_2, window_bounds = array<i64: 1, 128>}, {transform_indices = @transform_3, window_bounds = array<i64: 16, 128>}]} {
    %c0 = arith.constant 0 : index
    %c0_0 = arith.constant 0 : index
    %0 = vector.load %arg2[%c0, %c0_0] : memref<16x128xbf16, #tpu.memory_space<vmem>>, vector<16x128xbf16>
    %c0_1 = arith.constant 0 : index
    %c0_2 = arith.constant 0 : index
    %1 = vector.load %arg3[%c0_1, %c0_2] : memref<128x128xbf16, #tpu.memory_space<vmem>>, vector<128x128xbf16>
    %cst = arith.constant dense<0.000000e+00> : vector<16x128xf32>
    %2 = tpu.matmul %0, %1, %cst {dimension_numbers = #tpu.dot_dimension_numbers<[1], [0], [0], [1], [0, 0, 1, 1], [], []>} : vector<16x128xbf16>, vector<128x128xbf16>, vector<16x128xf32> -> vector<16x128xf32>
    %c0_3 = arith.constant 0 : index
    %c0_4 = arith.constant 0 : index
    %3 = vector.load %arg4[%c0_3, %c0_4] : memref<1x128xf32, #tpu.memory_space<vmem>>, vector<1x128xf32>
    %4 = vector.broadcast %3 : vector<1x128xf32> to vector<16x128xf32>
    %5 = arith.addf %2, %4 : vector<16x128xf32>
    %c0_5 = arith.constant 0 : index
    %c0_6 = arith.constant 0 : index
    %6 = vector.load %arg5[%c0_5, %c0_6] : memref<16x128xf32, #tpu.memory_space<vmem>>, vector<16x128xf32>
    tpu.vector_store %arg5[%c0_5, %c0_6], %5 {strides = array<i32>} : memref<16x128xf32, #tpu.memory_space<vmem>>, vector<16x128xf32>,
    return
  }
  func.func @transform_0(%arg0: i32, %arg1: i32) -> (i32, i32) {
    %c0_i32 = arith.constant 0 : i32
    %c0_i32_0 = arith.constant 0 : i32
    return %arg0, %c0_i32 : i32, i32
  }
  func.func @transform_1(%arg0: i32, %arg1: i32) -> (i32, i32) {
    %c0_i32 = arith.constant 0 : i32
    %c0_i32_0 = arith.constant 0 : i32
    return %c0_i32, %arg1 : i32, i32
  }
  func.func @transform_2(%arg0: i32, %arg1: i32) -> (i32, i32) {
    %c0_i32 = arith.constant 0 : i32
    %c0_i32_0 = arith.constant 0 : i32
    return %c0_i32, %arg1 : i32, i32
  }
  func.func @transform_3(%arg0: i32, %arg1: i32) -> (i32, i32) {
    %c0_i32 = arith.constant 0 : i32
    return %arg0, %arg1 : i32, i32
  }
}

</mosaic_0001>

<llo_original>
// kernel: fast_decoder_gru_forward.4
$region0: #{fast_decoder_gru_forward.4}
  #allocation0 [shape = 'u32[]', space=smem, size = 0x4, offset = 0x4, fixed_abs, tag = 'smem constant byte address 0x4 - core index']
  #allocation1 [shape = 'u32[144,128]{1,0:T(1,128)}', space=vmem, size = 0x12000, scoped, tag = 'internal scratch']
  %s0 = inlined_call_operand.hbm [shape: bf16[8,32], index: 0, kind: input, shape index: {}]
  %s1 = inlined_call_operand.hbm [shape: bf16[32,128], index: 1, kind: input, shape index: {}]
  %s2 = inlined_call_operand.hbm [shape: f32[1,128], index: 2, kind: input, shape index: {}]
  %s3 = inlined_call_operand.hbm [shape: f32[8,128], index: 3, kind: output, shape index: {}]
  %s4 = sld [smem:[#allocation0]]
  $region34: #{fast_decoder_gru_forward.4} parent=0
    _
  %s6 = ssub.s32 1, %s4
  %s7 = scalar_select 0, %s6, %s4
  $region1: #{fast_decoder_gru_forward.4} parent=0
    #allocation2 [shape = 'u8[2048]{0}', space=vmem, size = 0x800, scoped, tag = 'input window, operand 0, single buffered']
    #allocation3 [shape = 's32[1]{0}', space=sflag, size = 0x4, scoped, tag = 'scoped memory for fast_decoder_gru_forward.4']
    #allocation4 [shape = 's32[1]{0}', space=sflag, size = 0x4, scoped, tag = 'scoped memory for fast_decoder_gru_forward.4']
    #allocation5 [shape = 'u8[8192]{0}', space=vmem, size = 0x2000, scoped, tag = 'input window, operand 1, single buffered']
    #allocation6 [shape = 's32[1]{0}', space=sflag, size = 0x4, scoped, tag = 'scoped memory for fast_decoder_gru_forward.4']
    #allocation7 [shape = 'u8[512]{0}', space=vmem, size = 0x400, scoped, tag = 'input window, operand 2, single buffered']
    #allocation8 [shape = 'u8[4096]{0}', space=vmem, size = 0x1000, scoped, tag = 'output window, operand 0, single buffered']
    %8 = vsyncpa [#allocation3], 0
    %9 = vsyncpa [#allocation6], 0
    %10 = vsyncpa [#allocation4], 0
    // Predicated region
    $region2: #{fast_decoder_gru_forward.4} parent=1 // pred_check
      _
    $region3: #{fast_decoder_gru_forward.4} parent=1 // pred_check_branch
      %12 = sbr.rel (0) target = $region5
    $region4: #{fast_decoder_gru_forward.4} parent=1 // pred_region
      %s14 = ssub.s32 64, 64
      %15 = vsyncadd [#allocation3], %s14
      %s17 = sshll.u32 [#allocation2], 4
      %s18 = int_to_ptr.vmem [resolvable:$true] %s17
      %20 = dma.hbm_to_vmem [thread:$0]  %s0, 64, %s18, [#allocation3]
    $region5: #{fast_decoder_gru_forward.4} parent=1 // pred_fallthru
      _
    // Predicated region
    $region6: #{fast_decoder_gru_forward.4} parent=1 // pred_check
      _
    $region7: #{fast_decoder_gru_forward.4} parent=1 // pred_check_branch
      %22 = sbr.rel (0) target = $region9
    $region8: #{fast_decoder_gru_forward.4} parent=1 // pred_region
      %s24 = ssub.s32 256, 256
      %25 = vsyncadd [#allocation6], %s24
      %s26 = sshll.u32 [#allocation5], 4
      %s27 = int_to_ptr.vmem [resolvable:$true] %s26
      %32 = dma.hbm_to_vmem [thread:$0]  %s1, 256, %s27, [#allocation6], 64, 64, 4
    $region9: #{fast_decoder_gru_forward.4} parent=1 // pred_fallthru
      _
    // Predicated region
    $region10: #{fast_decoder_gru_forward.4} parent=1 // pred_check
      _
    $region11: #{fast_decoder_gru_forward.4} parent=1 // pred_check_branch
      %34 = sbr.rel (0) target = $region13
    $region12: #{fast_decoder_gru_forward.4} parent=1 // pred_region
      %s36 = ssub.s32 16, 16
      %37 = vsyncadd [#allocation6], %s36
      %s39 = sshll.u32 [#allocation7], 4
      %s40 = int_to_ptr.vmem [resolvable:$true] %s39
      %42 = dma.hbm_to_vmem [thread:$0]  %s2, 16, %s40, [#allocation6]
    $region13: #{fast_decoder_gru_forward.4} parent=1 // pred_fallthru
      _
    // Predicated region
    $region14: #{fast_decoder_gru_forward.4} parent=1 // pred_check
      _
    $region15: #{fast_decoder_gru_forward.4} parent=1 // pred_check_branch
      %44 = sbr.rel (0) target = $region17
    $region16: #{fast_decoder_gru_forward.4} parent=1 // pred_region
      %45 = dma.done [#allocation3], 64
    $region17: #{fast_decoder_gru_forward.4} parent=1 // pred_fallthru
      _
    // Predicated region
    $region18: #{fast_decoder_gru_forward.4} parent=1 // pred_check
      _
    $region19: #{fast_decoder_gru_forward.4} parent=1 // pred_check_branch
      %47 = sbr.rel (0) target = $region21
    $region20: #{fast_decoder_gru_forward.4} parent=1 // pred_region
      %48 = dma.done [#allocation6], 256
    $region21: #{fast_decoder_gru_forward.4} parent=1 // pred_fallthru
      _
    // Predicated region
    $region22: #{fast_decoder_gru_forward.4} parent=1 // pred_check
      _
    $region23: #{fast_decoder_gru_forward.4} parent=1 // pred_check_branch
      %50 = sbr.rel (0) target = $region25
    $region24: #{fast_decoder_gru_forward.4} parent=1 // pred_region
      %51 = dma.done [#allocation6], 16
    $region25: #{fast_decoder_gru_forward.4} parent=1 // pred_fallthru
      _
    %v53 = vld [vmem:[#allocation2] sm:$0xf]
    %v54 = vld [vmem:[#allocation5] sm:$0xf]
    %v55 = vld [vmem:[#allocation5 + $0x4] sm:$0xf]
    %v56 = vld [vmem:[#allocation5 + $0x8] sm:$0xf]
    %v57 = vld [vmem:[#allocation5 + $0xc] sm:$0xf]
    %v58 = vld [vmem:[#allocation7] sm:$0x1]
    %v60 = vlaneseq
    %v61 = vshrl.u32 %v60, 7
    %v62 = vsub.s32 0, %v61
    %v63 = vrot.slane %v58, %v62
    %v69 = vunpack.c.l.b16 %v54
    %v70 = vunpack.c.l.b16 %v55
    %v71 = vunpack.c.l.b16 %v56
    %v72 = vunpack.c.l.b16 %v57
    %v73 = vpack.c.b16 %v70, %v69
    %v74 = vpack.c.b16 %v72, %v71
    %vm77 = vcmask 261120
    %v79 = vsel %vm77, %v53, 0
    %81 = vmatprep.subr.bf16.mxu0 0
    %82 = vmatpush1.bf16.msra.mxu0 %v73
    %83 = vmatprep.subr.bf16.mxu0 0
    %84 = vmatpush1.bf16.msra.mxu0 %v74
    %85 = vmatprep.subr.bf16.mxu0 0
    %86 = vmatpush1.bf16.msra.mxu0 0
    %87 = vmatprep.subr.bf16.mxu0 0
    %88 = vmatpush1.bf16.msra.mxu0 0
    %89 = vmatprep.subr.bf16.mxu0 0
    %90 = vmatpush1.bf16.msra.mxu0 0
    %91 = vmatprep.subr.bf16.mxu0 0
    %92 = vmatpush1.bf16.msra.mxu0 0
    %93 = vmatprep.subr.bf16.mxu0 0
    %94 = vmatpush1.bf16.msra.mxu0 0
    %95 = vmatprep.subr.bf16.mxu0 0
    %96 = vmatpush1.bf16.msra.mxu0 0
    %97 = vmatprep.subr.bf16.mxu0 0
    %98 = vmatpush1.bf16.msra.mxu0 0
    %99 = vmatprep.subr.bf16.mxu0 0
    %100 = vmatpush1.bf16.msra.mxu0 0
    %101 = vmatprep.subr.bf16.mxu0 0
    %102 = vmatpush1.bf16.msra.mxu0 0
    %103 = vmatprep.subr.bf16.mxu0 0
    %104 = vmatpush1.bf16.msra.mxu0 0
    %105 = vmatprep.subr.bf16.mxu0 0
    %106 = vmatpush1.bf16.msra.mxu0 0
    %107 = vmatprep.subr.bf16.mxu0 0
    %108 = vmatpush1.bf16.msra.mxu0 0
    %109 = vmatprep.subr.bf16.mxu0 0
    %110 = vmatpush1.bf16.msra.mxu0 0
    %111 = vmatprep.subr.bf16.mxu0 0
    %112 = vmatpush1.bf16.msra.mxu0 0
    %113 = vmatprep.mubr.bf16.mxu0 0
    %114 = vmatmul.mubr.bf16.gmra.mrb[0].mxu0 %v79
    %v115 = vpop.f32.mrb[0].mxu0
    %v116 = vadd.f32 %v63, %v115
    %v117 = vpop.f32.mrb[0].mxu0
    %v118 = vpop.f32.mrb[0].mxu0
    %v119 = vpop.f32.mrb[0].mxu0
    %120 = vdwg.mxu0
    %121 = vst [vmem:[#allocation8] sm:$0xff] %v116
    // Predicated region
    $region26: #{fast_decoder_gru_forward.4} parent=1 // pred_check
      _
    $region27: #{fast_decoder_gru_forward.4} parent=1 // pred_check_branch
      %123 = sbr.rel (0) target = $region29
    $region28: #{fast_decoder_gru_forward.4} parent=1 // pred_region
      %s125 = ssub.s32 128, 128
      %126 = vsyncadd [#allocation4], %s125
      %s128 = sshll.u32 [#allocation8], 4
      %s129 = int_to_ptr.vmem [resolvable:$true] %s128
      %131 = dma.vmem_to_hbm [thread:$0]  %s129, 128, %s3, [#allocation4]
    $region29: #{fast_decoder_gru_forward.4} parent=1 // pred_fallthru
      _
    // Predicated region
    $region30: #{fast_decoder_gru_forward.4} parent=1 // pred_check
      _
    $region31: #{fast_decoder_gru_forward.4} parent=1 // pred_check_branch
      %133 = sbr.rel (0) target = $region33
    $region32: #{fast_decoder_gru_forward.4} parent=1 // pred_region
      %134 = dma.done [#allocation4], 128
    $region33: #{fast_decoder_gru_forward.4} parent=1 // pred_fallthru
      _
    %135 = vsyncpa [#allocation3], 1
    %136 = vsyncpa [#allocation6], 1
    %137 = vsyncpa [#allocation4], 1

// kernel: fast_decoder_gru_forward.5
$region0: #{fast_decoder_gru_forward.5}
  #allocation0 [shape = 'u32[]', space=smem, size = 0x4, offset = 0x4, fixed_abs, tag = 'smem constant byte address 0x4 - core index']
  #allocation1 [shape = 'u32[144,128]{1,0:T(1,128)}', space=vmem, size = 0x12000, scoped, tag = 'internal scratch']
  %s0 = inlined_call_operand.hbm [shape: bf16[64,32], index: 0, kind: input, shape index: {}]
  %s1 = inlined_call_operand.hbm [shape: bf16[32,384], index: 1, kind: input, shape index: {}]
  %s2 = inlined_call_operand.hbm [shape: f32[1,384], index: 2, kind: input, shape index: {}]
  %s3 = inlined_call_operand.hbm [shape: bf16[64,384], index: 3, kind: output, shape index: {}]
  %s4 = sld [smem:[#allocation0]]
  $region34: #{fast_decoder_gru_forward.5} parent=0
    _
  %s6 = ssub.s32 1, %s4
  %s7 = scalar_select 0, %s6, %s4
  $region1: #{fast_decoder_gru_forward.5} parent=0
    #allocation2 [shape = 'u8[16384]{0}', space=vmem, size = 0x4000, scoped, tag = 'input window, operand 0, single buffered']
    #allocation3 [shape = 's32[1]{0}', space=sflag, size = 0x4, scoped, tag = 'scoped memory for fast_decoder_gru_forward.5']
    #allocation4 [shape = 's32[1]{0}', space=sflag, size = 0x4, scoped, tag = 'scoped memory for fast_decoder_gru_forward.5']
    #allocation5 [shape = 'u8[24576]{0}', space=vmem, size = 0x6000, scoped, tag = 'input window, operand 1, single buffered']
    #allocation6 [shape = 's32[1]{0}', space=sflag, size = 0x4, scoped, tag = 'scoped memory for fast_decoder_gru_forward.5']
    #allocation7 [shape = 'u8[1536]{0}', space=vmem, size = 0x800, scoped, tag = 'input window, operand 2, single buffered']
    #allocation8 [shape = 'u8[49152]{0}', space=vmem, size = 0xc000, scoped, tag = 'output window, operand 0, single buffered']
    %8 = vsyncpa [#allocation3], 0
    %9 = vsyncpa [#allocation6], 0
    %10 = vsyncpa [#allocation4], 0
    // Predicated region
    $region2: #{fast_decoder_gru_forward.5} parent=1 // pred_check
      _
    $region3: #{fast_decoder_gru_forward.5} parent=1 // pred_check_branch
      %12 = sbr.rel (0) target = $region5
    $region4: #{fast_decoder_gru_forward.5} parent=1 // pred_region
      %s14 = ssub.s32 512, 512
      %15 = vsyncadd [#allocation3], %s14
      %s16 = sshll.u32 [#allocation2], 4
      %s17 = int_to_ptr.vmem [resolvable:$true] %s16
      %22 = dma.hbm_to_vmem [thread:$0]  %s0, 512, %s17, [#allocation3], 64, 64, 4
    $region5: #{fast_decoder_gru_forward.5} parent=1 // pred_fallthru
      _
    // Predicated region
    $region6: #{fast_decoder_gru_forward.5} parent=1 // pred_check
      _
    $region7: #{fast_decoder_gru_forward.5} parent=1 // pred_check_branch
      %24 = sbr.rel (0) target = $region9
    $region8: #{fast_decoder_gru_forward.5} parent=1 // pred_region
      %s26 = ssub.s32 768, 768
      %27 = vsyncadd [#allocation6], %s26
      %s28 = sshll.u32 [#allocation5], 4
      %s29 = int_to_ptr.vmem [resolvable:$true] %s28
      %34 = dma.hbm_to_vmem [thread:$0]  %s1, 768, %s29, [#allocation6], 192, 192, 12
    $region9: #{fast_decoder_gru_forward.5} parent=1 // pred_fallthru
      _
    // Predicated region
    $region10: #{fast_decoder_gru_forward.5} parent=1 // pred_check
      _
    $region11: #{fast_decoder_gru_forward.5} parent=1 // pred_check_branch
      %36 = sbr.rel (0) target = $region13
    $region12: #{fast_decoder_gru_forward.5} parent=1 // pred_region
      %s38 = ssub.s32 48, 48
      %39 = vsyncadd [#allocation6], %s38
      %s41 = sshll.u32 [#allocation7], 4
      %s42 = int_to_ptr.vmem [resolvable:$true] %s41
      %44 = dma.hbm_to_vmem [thread:$0]  %s2, 48, %s42, [#allocation6]
    $region13: #{fast_decoder_gru_forward.5} parent=1 // pred_fallthru
      _
    // Predicated region
    $region14: #{fast_decoder_gru_forward.5} parent=1 // pred_check
      _
    $region15: #{fast_decoder_gru_forward.5} parent=1 // pred_check_branch
      %46 = sbr.rel (0) target = $region17
    $region16: #{fast_decoder_gru_forward.5} parent=1 // pred_region
      %47 = dma.done [#allocation3], 512
    $region17: #{fast_decoder_gru_forward.5} parent=1 // pred_fallthru
      _
    // Predicated region
    $region18: #{fast_decoder_gru_forward.5} parent=1 // pred_check
      _
    $region19: #{fast_decoder_gru_forward.5} parent=1 // pred_check_branch
      %49 = sbr.rel (0) target = $region21
    $region20: #{fast_decoder_gru_forward.5} parent=1 // pred_region
      %50 = dma.done [#allocation6], 768
    $region21: #{fast_decoder_gru_forward.5} parent=1 // pred_fallthru
      _
    // Predicated region
    $region22: #{fast_decoder_gru_forward.5} parent=1 // pred_check
      _
    $region23: #{fast_decoder_gru_forward.5} parent=1 // pred_check_branch
      %52 = sbr.rel (0) target = $region25
    $region24: #{fast_decoder_gru_forward.5} parent=1 // pred_region
      %53 = dma.done [#allocation6], 48
    $region25: #{fast_decoder_gru_forward.5} parent=1 // pred_fallthru
      _
    %v55 = vld [vmem:[#allocation2] sm:$0xf]
    %v56 = vld [vmem:[#allocation2 + $0x4] sm:$0xf]
    %v57 = vld [vmem:[#allocation2 + $0x8] sm:$0xf]
    %v58 = vld [vmem:[#allocation2 + $0xc] sm:$0xf]
    %v59 = vld [vmem:[#allocation2 + $0x10] sm:$0xf]
    %v60 = vld [vmem:[#allocation2 + $0x14] sm:$0xf]
    %v61 = vld [vmem:[#allocation2 + $0x18] sm:$0xf]
    %v62 = vld [vmem:[#allocation2 + $0x1c] sm:$0xf]
    %v63 = vld [vmem:[#allocation5] sm:$0xff]
    %v64 = vld [vmem:[#allocation5 + $0x8] sm:$0xf]
    %v65 = vld [vmem:[#allocation5 + $0xc] sm:$0xff]
    %v66 = vld [vmem:[#allocation5 + $0x14] sm:$0xf]
    %v67 = vld [vmem:[#allocation5 + $0x18] sm:$0xff]
    %v68 = vld [vmem:[#allocation5 + $0x20] sm:$0xf]
    %v69 = vld [vmem:[#allocation5 + $0x24] sm:$0xff]
    %v70 = vld [vmem:[#allocation5 + $0x2c] sm:$0xf]
    %v71 = vld [vmem:[#allocation7] sm:$0x7]
    %v73 = vlaneseq
    %v74 = vshrl.u32 %v73, 7
    %v75 = vsub.s32 0, %v74
    %v76 = vrot.slane %v71, %v75
    %v77 = vlaneseq
    %v78 = vshrl.u32 %v77, 7
    %v79 = vsub.s32 1, %v78
    %v80 = vrot.slane %v71, %v79
    %v81 = vlaneseq
    %v82 = vshrl.u32 %v81, 7
    %v83 = vsub.s32 2, %v82
    %v84 = vrot.slane %v71, %v83
    %v96 = vunpack.c.l.b16 %v55
    %v97 = vunpack.c.l.b16 %v56
    %v98 = vunpack.c.l.b16 %v57
    %v99 = vunpack.c.l.b16 %v58
    %v100 = vunpack.c.l.b16 %v59
    %v101 = vunpack.c.l.b16 %v60
    %v102 = vunpack.c.l.b16 %v61
    %v103 = vunpack.c.l.b16 %v62
    %v104 = vpack.c.b16 %v97, %v96
    %v105 = vpack.c.b16 %v99, %v98
    %v106 = vpack.c.b16 %v101, %v100
    %v107 = vpack.c.b16 %v103, %v102
    %v116 = vunpack.c.l.b16 %v63
    %v117 = vunpack.c.h.b16 %v63
    %v118 = vunpack.c.l.b16 %v64
    %v119 = vunpack.c.l.b16 %v65
    %v120 = vunpack.c.h.b16 %v65
    %v121 = vunpack.c.l.b16 %v66
    %v122 = vunpack.c.l.b16 %v67
    %v123 = vunpack.c.h.b16 %v67
    %v124 = vunpack.c.l.b16 %v68
    %v125 = vunpack.c.l.b16 %v69
    %v126 = vunpack.c.h.b16 %v69
    %v127 = vunpack.c.l.b16 %v70
    %v128 = vpack.c.b16 %v119, %v116
    %v129 = vpack.c.b16 %v120, %v117
    %v130 = vpack.c.b16 %v121, %v118
    %v131 = vpack.c.b16 %v125, %v122
    %v132 = vpack.c.b16 %v126, %v123
    %v133 = vpack.c.b16 %v127, %v124
    %vm140 = vcmask 261120
    %v142 = vsel %vm140, %v104, 0
    %v145 = vsel %vm140, %v105, 0
    %v148 = vsel %vm140, %v106, 0
    %v151 = vsel %vm140, %v107, 0
    %153 = vmatprep.subr.bf16.mxu0 %v129
    %154 = vmatpush1.bf16.msra.mxu0 %v128
    %155 = vmatprep.subr.bf16.mxu0 %v132
    %156 = vmatpush1.bf16.msra.mxu0 %v131
    %157 = vmatprep.subr.bf16.mxu0 0
    %158 = vmatpush1.bf16.msra.mxu0 0
    %159 = vmatprep.subr.bf16.mxu0 0
    %160 = vmatpush1.bf16.msra.mxu0 0
    %161 = vmatprep.subr.bf16.mxu0 0
    %162 = vmatpush1.bf16.msra.mxu0 0
    %163 = vmatprep.subr.bf16.mxu0 0
    %164 = vmatpush1.bf16.msra.mxu0 0
    %165 = vmatprep.subr.bf16.mxu0 0
    %166 = vmatpush1.bf16.msra.mxu0 0
    %167 = vmatprep.subr.bf16.mxu0 0
    %168 = vmatpush1.bf16.msra.mxu0 0
    %169 = vmatprep.subr.bf16.mxu0 0
    %170 = vmatpush1.bf16.msra.mxu0 0
    %171 = vmatprep.subr.bf16.mxu0 0
    %172 = vmatpush1.bf16.msra.mxu0 0
    %173 = vmatprep.subr.bf16.mxu0 0
    %174 = vmatpush1.bf16.msra.mxu0 0
    %175 = vmatprep.subr.bf16.mxu0 0
    %176 = vmatpush1.bf16.msra.mxu0 0
    %177 = vmatprep.subr.bf16.mxu0 0
    %178 = vmatpush1.bf16.msra.mxu0 0
    %179 = vmatprep.subr.bf16.mxu0 0
    %180 = vmatpush1.bf16.msra.mxu0 0
    %181 = vmatprep.subr.bf16.mxu0 0
    %182 = vmatpush1.bf16.msra.mxu0 0
    %183 = vmatprep.subr.bf16.mxu0 0
    %184 = vmatpush1.bf16.msra.mxu0 0
    %185 = vmatprep.mubr.bf16.mxu0 0
    %186 = vmatmul.mubr.bf16.gmra.mrb[0].mxu0 %v142
    %v187 = vpop.f32.mrb[0].mxu0
    %v188 = vadd.f32 %v76, %v187
    %v189 = vpop.f32.mrb[0].mxu0
    %v190 = vadd.f32 %v80, %v189
    %v191 = vpop.f32.mrb[0].mxu0
    %v192 = vadd.f32 %v76, %v191
    %v193 = vpop.f32.mrb[0].mxu0
    %v194 = vadd.f32 %v80, %v193
    %195 = vmatprep.mubr.bf16.mxu0 0
    %196 = vmatmul.mubr.bf16.gmra.mrb[0].mxu0 %v145
    %v197 = vpop.f32.mrb[0].mxu0
    %v198 = vadd.f32 %v76, %v197
    %v199 = vpop.f32.mrb[0].mxu0
    %v200 = vadd.f32 %v80, %v199
    %v201 = vpop.f32.mrb[0].mxu0
    %v202 = vadd.f32 %v76, %v201
    %v203 = vpop.f32.mrb[0].mxu0
    %v204 = vadd.f32 %v80, %v203
    %205 = vmatprep.mubr.bf16.mxu0 0
    %206 = vmatmul.mubr.bf16.gmra.mrb[0].mxu0 %v148
    %v207 = vpop.f32.mrb[0].mxu0
    %v208 = vadd.f32 %v76, %v207
    %v209 = vpop.f32.mrb[0].mxu0
    %v210 = vadd.f32 %v80, %v209
    %v211 = vpop.f32.mrb[0].mxu0
    %v212 = vadd.f32 %v76, %v211
    %v213 = vpop.f32.mrb[0].mxu0
    %v214 = vadd.f32 %v80, %v213
    %215 = vmatprep.mubr.bf16.mxu0 0
    %216 = vmatmul.mubr.bf16.gmra.mrb[0].mxu0 %v151
    %v217 = vpop.f32.mrb[0].mxu0
    %v218 = vadd.f32 %v76, %v217
    %v219 = vpop.f32.mrb[0].mxu0
    %v220 = vadd.f32 %v80, %v219
    %v221 = vpop.f32.mrb[0].mxu0
    %v222 = vadd.f32 %v76, %v221
    %v223 = vpop.f32.mrb[0].mxu0
    %v224 = vadd.f32 %v80, %v223
    %225 = vdwg.mxu0
    %226 = vmatprep.subr.bf16.mxu0 0
    %227 = vmatpush1.bf16.msra.mxu0 %v130
    %228 = vmatprep.subr.bf16.mxu0 0
    %229 = vmatpush1.bf16.msra.mxu0 %v133
    %230 = vmatprep.subr.bf16.mxu0 0
    %231 = vmatpush1.bf16.msra.mxu0 0
    %232 = vmatprep.subr.bf16.mxu0 0
    %233 = vmatpush1.bf16.msra.mxu0 0
    %234 = vmatprep.subr.bf16.mxu0 0
    %235 = vmatpush1.bf16.msra.mxu0 0
    %236 = vmatprep.subr.bf16.mxu0 0
    %237 = vmatpush1.bf16.msra.mxu0 0
    %238 = vmatprep.subr.bf16.mxu0 0
    %239 = vmatpush1.bf16.msra.mxu0 0
    %240 = vmatprep.subr.bf16.mxu0 0
    %241 = vmatpush1.bf16.msra.mxu0 0
    %242 = vmatprep.subr.bf16.mxu0 0
    %243 = vmatpush1.bf16.msra.mxu0 0
    %244 = vmatprep.subr.bf16.mxu0 0
    %245 = vmatpush1.bf16.msra.mxu0 0
    %246 = vmatprep.subr.bf16.mxu0 0
    %247 = vmatpush1.bf16.msra.mxu0 0
    %248 = vmatprep.subr.bf16.mxu0 0
    %249 = vmatpush1.bf16.msra.mxu0 0
    %250 = vmatprep.subr.bf16.mxu0 0
    %251 = vmatpush1.bf16.msra.mxu0 0
    %252 = vmatprep.subr.bf16.mxu0 0
    %253 = vmatpush1.bf16.msra.mxu0 0
    %254 = vmatprep.subr.bf16.mxu0 0
    %255 = vmatpush1.bf16.msra.mxu0 0
    %256 = vmatprep.subr.bf16.mxu0 0
    %257 = vmatpush1.bf16.msra.mxu0 0
    %258 = vmatprep.mubr.bf16.mxu0 0
    %259 = vmatmul.mubr.bf16.gmra.mrb[0].mxu0 %v142
    %v260 = vpop.f32.mrb[0].mxu0
    %v261 = vadd.f32 %v84, %v260
    %v262 = vpop.f32.mrb[0].mxu0
    %v263 = vpop.f32.mrb[0].mxu0
    %v264 = vadd.f32 %v84, %v263
    %v265 = vpop.f32.mrb[0].mxu0
    %266 = vmatprep.mubr.bf16.mxu0 0
    %267 = vmatmul.mubr.bf16.gmra.mrb[0].mxu0 %v145
    %v268 = vpop.f32.mrb[0].mxu0
    %v269 = vadd.f32 %v84, %v268
    %v270 = vpop.f32.mrb[0].mxu0
    %v271 = vpop.f32.mrb[0].mxu0
    %v272 = vadd.f32 %v84, %v271
    %v273 = vpop.f32.mrb[0].mxu0
    %274 = vmatprep.mubr.bf16.mxu0 0
    %275 = vmatmul.mubr.bf16.gmra.mrb[0].mxu0 %v148
    %v276 = vpop.f32.mrb[0].mxu0
    %v277 = vadd.f32 %v84, %v276
    %v278 = vpop.f32.mrb[0].mxu0
    %v279 = vpop.f32.mrb[0].mxu0
    %v280 = vadd.f32 %v84, %v279
    %v281 = vpop.f32.mrb[0].mxu0
    %282 = vmatprep.mubr.bf16.mxu0 0
    %283 = vmatmul.mubr.bf16.gmra.mrb[0].mxu0 %v151
    %v284 = vpop.f32.mrb[0].mxu0
    %v285 = vadd.f32 %v84, %v284
    %v286 = vpop.f32.mrb[0].mxu0
    %v287 = vpop.f32.mrb[0].mxu0
    %v288 = vadd.f32 %v84, %v287
    %v289 = vpop.f32.mrb[0].mxu0
    %290 = vdwg.mxu0
    %v291 = vpack.c.bf16 %v192, %v188
    %v292 = vpack.c.bf16 %v194, %v190
    %v293 = vpack.c.bf16 %v264, %v261
    %v294 = vpack.c.bf16 %v202, %v198
    %v295 = vpack.c.bf16 %v204, %v200
    %v296 = vpack.c.bf16 %v272, %v269
    %v297 = vpack.c.bf16 %v212, %v208
    %v298 = vpack.c.bf16 %v214, %v210
    %v299 = vpack.c.bf16 %v280, %v277
    %v300 = vpack.c.bf16 %v222, %v218
    %v301 = vpack.c.bf16 %v224, %v220
    %v302 = vpack.c.bf16 %v288, %v285
    %v315 = vunpack.c.l.b16 %v291
    %v316 = vunpack.c.l.b16 %v292
    %v317 = vunpack.c.l.b16 %v293
    %v318 = vunpack.c.h.b16 %v291
    %v319 = vunpack.c.h.b16 %v292
    %v320 = vunpack.c.h.b16 %v293
    %v321 = vunpack.c.l.b16 %v294
    %v322 = vunpack.c.l.b16 %v295
    %v323 = vunpack.c.l.b16 %v296
    %v324 = vunpack.c.h.b16 %v294
    %v325 = vunpack.c.h.b16 %v295
    %v326 = vunpack.c.h.b16 %v296
    %v327 = vunpack.c.l.b16 %v297
    %v328 = vunpack.c.l.b16 %v298
    %v329 = vunpack.c.l.b16 %v299
    %v330 = vunpack.c.h.b16 %v297
    %v331 = vunpack.c.h.b16 %v298
    %v332 = vunpack.c.h.b16 %v299
    %v333 = vunpack.c.l.b16 %v300
    %v334 = vunpack.c.l.b16 %v301
    %v335 = vunpack.c.l.b16 %v302
    %v336 = vunpack.c.h.b16 %v300
    %v337 = vunpack.c.h.b16 %v301
    %v338 = vunpack.c.h.b16 %v302
    %v339 = vpack.c.b16 %v316, %v315
    %v340 = vpack.c.b16 %v317, %v317
    %v341 = vpack.c.b16 %v319, %v318
    %v342 = vpack.c.b16 %v320, %v320
    %v343 = vpack.c.b16 %v322, %v321
    %v344 = vpack.c.b16 %v323, %v323
    %v345 = vpack.c.b16 %v325, %v324
    %v346 = vpack.c.b16 %v326, %v326
    %v347 = vpack.c.b16 %v328, %v327
    %v348 = vpack.c.b16 %v329, %v329
    %v349 = vpack.c.b16 %v331, %v330
    %v350 = vpack.c.b16 %v332, %v332
    %v351 = vpack.c.b16 %v334, %v333
    %v352 = vpack.c.b16 %v335, %v335
    %v353 = vpack.c.b16 %v337, %v336
    %v354 = vpack.c.b16 %v338, %v338
    %371 = vst [vmem:[#allocation8] sm:$0xff] %v339
    %372 = vst [vmem:[#allocation8 + $0x8] sm:$0xf] %v340
    %373 = vst [vmem:[#allocation8 + $0xc] sm:$0xff] %v341
    %374 = vst [vmem:[#allocation8 + $0x14] sm:$0xf] %v342
    %375 = vst [vmem:[#allocation8 + $0x18] sm:$0xff] %v343
    %376 = vst [vmem:[#allocation8 + $0x20] sm:$0xf] %v344
    %377 = vst [vmem:[#allocation8 + $0x24] sm:$0xff] %v345
    %378 = vst [vmem:[#allocation8 + $0x2c] sm:$0xf] %v346
    %379 = vst [vmem:[#allocation8 + $0x30] sm:$0xff] %v347
    %380 = vst [vmem:[#allocation8 + $0x38] sm:$0xf] %v348
    %381 = vst [vmem:[#allocation8 + $0x3c] sm:$0xff] %v349
    %382 = vst [vmem:[#allocation8 + $0x44] sm:$0xf] %v350
    %383 = vst [vmem:[#allocation8 + $0x48] sm:$0xff] %v351
    %384 = vst [vmem:[#allocation8 + $0x50] sm:$0xf] %v352
    %385 = vst [vmem:[#allocation8 + $0x54] sm:$0xff] %v353
    %386 = vst [vmem:[#allocation8 + $0x5c] sm:$0xf] %v354
    // Predicated region
    $region26: #{fast_decoder_gru_forward.5} parent=1 // pred_check
      _
    $region27: #{fast_decoder_gru_forward.5} parent=1 // pred_check_branch
      %388 = sbr.rel (0) target = $region29
    $region28: #{fast_decoder_gru_forward.5} parent=1 // pred_region
      %s390 = ssub.s32 1536, 1536
      %391 = vsyncadd [#allocation4], %s390
      %s392 = sshll.u32 [#allocation8], 4
      %s393 = int_to_ptr.vmem [resolvable:$true] %s392
      %398 = dma.vmem_to_hbm [thread:$0]  %s393, 1536, %s3, [#allocation4], 192, 192, 12
    $region29: #{fast_decoder_gru_forward.5} parent=1 // pred_fallthru
      _
    // Predicated region
    $region30: #{fast_decoder_gru_forward.5} parent=1 // pred_check
      _
    $region31: #{fast_decoder_gru_forward.5} parent=1 // pred_check_branch
      %400 = sbr.rel (0) target = $region33
    $region32: #{fast_decoder_gru_forward.5} parent=1 // pred_region
      %401 = dma.done [#allocation4], 1536
    $region33: #{fast_decoder_gru_forward.5} parent=1 // pred_fallthru
      _
    %402 = vsyncpa [#allocation3], 1
    %403 = vsyncpa [#allocation6], 1
    %404 = vsyncpa [#allocation4], 1

// kernel: fast_decoder_gru_forward.7
$region0: #{fast_decoder_gru_forward.7}
  #allocation0 [shape = 'u32[]', space=smem, size = 0x4, offset = 0x4, fixed_abs, tag = 'smem constant byte address 0x4 - core index']
  #allocation1 [shape = 'u32[144,128]{1,0:T(1,128)}', space=vmem, size = 0x12000, scoped, tag = 'internal scratch']
  %s0 = inlined_call_operand.hbm [shape: bf16[16,128], index: 0, kind: input, shape index: {}]
  %s1 = inlined_call_operand.hbm [shape: bf16[128,128], index: 1, kind: input, shape index: {}]
  %s2 = inlined_call_operand.hbm [shape: f32[1,128], index: 2, kind: input, shape index: {}]
  %s3 = inlined_call_operand.hbm [shape: f32[16,128], index: 3, kind: output, shape index: {}]
  %s4 = sld [smem:[#allocation0]]
  $region34: #{fast_decoder_gru_forward.7} parent=0
    _
  %s6 = ssub.s32 1, %s4
  %s7 = scalar_select 0, %s6, %s4
  $region1: #{fast_decoder_gru_forward.7} parent=0
    #allocation2 [shape = 'u8[4096]{0}', space=vmem, size = 0x1000, scoped, tag = 'input window, operand 0, single buffered']
    #allocation3 [shape = 's32[1]{0}', space=sflag, size = 0x4, scoped, tag = 'scoped memory for fast_decoder_gru_forward.7']
    #allocation4 [shape = 's32[1]{0}', space=sflag, size = 0x4, scoped, tag = 'scoped memory for fast_decoder_gru_forward.7']
    #allocation5 [shape = 'u8[32768]{0}', space=vmem, size = 0x8000, scoped, tag = 'input window, operand 1, single buffered']
    #allocation6 [shape = 's32[1]{0}', space=sflag, size = 0x4, scoped, tag = 'scoped memory for fast_decoder_gru_forward.7']
    #allocation7 [shape = 'u8[512]{0}', space=vmem, size = 0x400, scoped, tag = 'input window, operand 2, single buffered']
    #allocation8 [shape = 'u8[8192]{0}', space=vmem, size = 0x2000, scoped, tag = 'output window, operand 0, single buffered']
    %8 = vsyncpa [#allocation3], 0
    %9 = vsyncpa [#allocation6], 0
    %10 = vsyncpa [#allocation4], 0
    // Predicated region
    $region2: #{fast_decoder_gru_forward.7} parent=1 // pred_check
      _
    $region3: #{fast_decoder_gru_forward.7} parent=1 // pred_check_branch
      %12 = sbr.rel (0) target = $region5
    $region4: #{fast_decoder_gru_forward.7} parent=1 // pred_region
      %s14 = ssub.s32 128, 128
      %15 = vsyncadd [#allocation3], %s14
      %s16 = sshll.u32 [#allocation2], 4
      %s17 = int_to_ptr.vmem [resolvable:$true] %s16
      %22 = dma.hbm_to_vmem [thread:$0]  %s0, 128, %s17, [#allocation3], 64, 64, 4
    $region5: #{fast_decoder_gru_forward.7} parent=1 // pred_fallthru
      _
    // Predicated region
    $region6: #{fast_decoder_gru_forward.7} parent=1 // pred_check
      _
    $region7: #{fast_decoder_gru_forward.7} parent=1 // pred_check_branch
      %24 = sbr.rel (0) target = $region9
    $region8: #{fast_decoder_gru_forward.7} parent=1 // pred_region
      %s26 = ssub.s32 1024, 1024
      %27 = vsyncadd [#allocation6], %s26
      %s28 = sshll.u32 [#allocation5], 4
      %s29 = int_to_ptr.vmem [resolvable:$true] %s28
      %34 = dma.hbm_to_vmem [thread:$0]  %s1, 1024, %s29, [#allocation6], 64, 64, 4
    $region9: #{fast_decoder_gru_forward.7} parent=1 // pred_fallthru
      _
    // Predicated region
    $region10: #{fast_decoder_gru_forward.7} parent=1 // pred_check
      _
    $region11: #{fast_decoder_gru_forward.7} parent=1 // pred_check_branch
      %36 = sbr.rel (0) target = $region13
    $region12: #{fast_decoder_gru_forward.7} parent=1 // pred_region
      %s38 = ssub.s32 16, 16
      %39 = vsyncadd [#allocation6], %s38
      %s41 = sshll.u32 [#allocation7], 4
      %s42 = int_to_ptr.vmem [resolvable:$true] %s41
      %44 = dma.hbm_to_vmem [thread:$0]  %s2, 16, %s42, [#allocation6]
    $region13: #{fast_decoder_gru_forward.7} parent=1 // pred_fallthru
      _
    // Predicated region
    $region14: #{fast_decoder_gru_forward.7} parent=1 // pred_check
      _
    $region15: #{fast_decoder_gru_forward.7} parent=1 // pred_check_branch
      %46 = sbr.rel (0) target = $region17
    $region16: #{fast_decoder_gru_forward.7} parent=1 // pred_region
      %47 = dma.done [#allocation3], 128
    $region17: #{fast_decoder_gru_forward.7} parent=1 // pred_fallthru
      _
    // Predicated region
    $region18: #{fast_decoder_gru_forward.7} parent=1 // pred_check
      _
    $region19: #{fast_decoder_gru_forward.7} parent=1 // pred_check_branch
      %49 = sbr.rel (0) target = $region21
    $region20: #{fast_decoder_gru_forward.7} parent=1 // pred_region
      %50 = dma.done [#allocation6], 1024
    $region21: #{fast_decoder_gru_forward.7} parent=1 // pred_fallthru
      _
    // Predicated region
    $region22: #{fast_decoder_gru_forward.7} parent=1 // pred_check
      _
    $region23: #{fast_decoder_gru_forward.7} parent=1 // pred_check_branch
      %52 = sbr.rel (0) target = $region25
    $region24: #{fast_decoder_gru_forward.7} parent=1 // pred_region
      %53 = dma.done [#allocation6], 16
    $region25: #{fast_decoder_gru_forward.7} parent=1 // pred_fallthru
      _
    %v55 = vld [vmem:[#allocation2] sm:$0xf]
    %v56 = vld [vmem:[#allocation2 + $0x4] sm:$0xf]
    %v57 = vld [vmem:[#allocation5] sm:$0xf]
    %v58 = vld [vmem:[#allocation5 + $0x4] sm:$0xf]
    %v59 = vld [vmem:[#allocation5 + $0x8] sm:$0xf]
    %v60 = vld [vmem:[#allocation5 + $0xc] sm:$0xf]
    %v61 = vld [vmem:[#allocation5 + $0x10] sm:$0xf]
    %v62 = vld [vmem:[#allocation5 + $0x14] sm:$0xf]
    %v63 = vld [vmem:[#allocation5 + $0x18] sm:$0xf]
    %v64 = vld [vmem:[#allocation5 + $0x1c] sm:$0xf]
    %v65 = vld [vmem:[#allocation5 + $0x20] sm:$0xf]
    %v66 = vld [vmem:[#allocation5 + $0x24] sm:$0xf]
    %v67 = vld [vmem:[#allocation5 + $0x28] sm:$0xf]
    %v68 = vld [vmem:[#allocation5 + $0x2c] sm:$0xf]
    %v69 = vld [vmem:[#allocation5 + $0x30] sm:$0xf]
    %v70 = vld [vmem:[#allocation5 + $0x34] sm:$0xf]
    %v71 = vld [vmem:[#allocation5 + $0x38] sm:$0xf]
    %v72 = vld [vmem:[#allocation5 + $0x3c] sm:$0xf]
    %v73 = vld [vmem:[#allocation7] sm:$0x1]
    %v75 = vlaneseq
    %v76 = vshrl.u32 %v75, 7
    %v77 = vsub.s32 0, %v76
    %v78 = vrot.slane %v73, %v77
    %v82 = vunpack.c.l.b16 %v55
    %v83 = vunpack.c.l.b16 %v56
    %v84 = vpack.c.b16 %v83, %v82
    %v102 = vunpack.c.l.b16 %v57
    %v103 = vunpack.c.l.b16 %v58
    %v104 = vunpack.c.l.b16 %v59
    %v105 = vunpack.c.l.b16 %v60
    %v106 = vunpack.c.l.b16 %v61
    %v107 = vunpack.c.l.b16 %v62
    %v108 = vunpack.c.l.b16 %v63
    %v109 = vunpack.c.l.b16 %v64
    %v110 = vunpack.c.l.b16 %v65
    %v111 = vunpack.c.l.b16 %v66
    %v112 = vunpack.c.l.b16 %v67
    %v113 = vunpack.c.l.b16 %v68
    %v114 = vunpack.c.l.b16 %v69
    %v115 = vunpack.c.l.b16 %v70
    %v116 = vunpack.c.l.b16 %v71
    %v117 = vunpack.c.l.b16 %v72
    %v118 = vpack.c.b16 %v103, %v102
    %v119 = vpack.c.b16 %v105, %v104
    %v120 = vpack.c.b16 %v107, %v106
    %v121 = vpack.c.b16 %v109, %v108
    %v122 = vpack.c.b16 %v111, %v110
    %v123 = vpack.c.b16 %v113, %v112
    %v124 = vpack.c.b16 %v115, %v114
    %v125 = vpack.c.b16 %v117, %v116
    %134 = vmatprep.subr.bf16.mxu0 0
    %135 = vmatpush1.bf16.msra.mxu0 %v118
    %136 = vmatprep.subr.bf16.mxu0 0
    %137 = vmatpush1.bf16.msra.mxu0 %v119
    %138 = vmatprep.subr.bf16.mxu0 0
    %139 = vmatpush1.bf16.msra.mxu0 %v120
    %140 = vmatprep.subr.bf16.mxu0 0
    %141 = vmatpush1.bf16.msra.mxu0 %v121
    %142 = vmatprep.subr.bf16.mxu0 0
    %143 = vmatpush1.bf16.msra.mxu0 %v122
    %144 = vmatprep.subr.bf16.mxu0 0
    %145 = vmatpush1.bf16.msra.mxu0 %v123
    %146 = vmatprep.subr.bf16.mxu0 0
    %147 = vmatpush1.bf16.msra.mxu0 %v124
    %148 = vmatprep.subr.bf16.mxu0 0
    %149 = vmatpush1.bf16.msra.mxu0 %v125
    %150 = vmatprep.subr.bf16.mxu0 0
    %151 = vmatpush1.bf16.msra.mxu0 0
    %152 = vmatprep.subr.bf16.mxu0 0
    %153 = vmatpush1.bf16.msra.mxu0 0
    %154 = vmatprep.subr.bf16.mxu0 0
    %155 = vmatpush1.bf16.msra.mxu0 0
    %156 = vmatprep.subr.bf16.mxu0 0
    %157 = vmatpush1.bf16.msra.mxu0 0
    %158 = vmatprep.subr.bf16.mxu0 0
    %159 = vmatpush1.bf16.msra.mxu0 0
    %160 = vmatprep.subr.bf16.mxu0 0
    %161 = vmatpush1.bf16.msra.mxu0 0
    %162 = vmatprep.subr.bf16.mxu0 0
    %163 = vmatpush1.bf16.msra.mxu0 0
    %164 = vmatprep.subr.bf16.mxu0 0
    %165 = vmatpush1.bf16.msra.mxu0 0
    %166 = vmatprep.mubr.bf16.mxu0 0
    %167 = vmatmul.mubr.bf16.gmra.mrb[0].mxu0 %v84
    %v168 = vpop.f32.mrb[0].mxu0
    %v169 = vadd.f32 %v78, %v168
    %v170 = vpop.f32.mrb[0].mxu0
    %v171 = vpop.f32.mrb[0].mxu0
    %v172 = vadd.f32 %v78, %v171
    %v173 = vpop.f32.mrb[0].mxu0
    %174 = vdwg.mxu0
    %175 = vst [vmem:[#allocation8] sm:$0xff] %v169
    %176 = vst [vmem:[#allocation8 + $0x8] sm:$0xff] %v172
    // Predicated region
    $region26: #{fast_decoder_gru_forward.7} parent=1 // pred_check
      _
    $region27: #{fast_decoder_gru_forward.7} parent=1 // pred_check_branch
      %178 = sbr.rel (0) target = $region29
    $region28: #{fast_decoder_gru_forward.7} parent=1 // pred_region
      %s180 = ssub.s32 256, 256
      %181 = vsyncadd [#allocation4], %s180
      %s182 = sshll.u32 [#allocation8], 4
      %s183 = int_to_ptr.vmem [resolvable:$true] %s182
      %188 = dma.vmem_to_hbm [thread:$0]  %s183, 256, %s3, [#allocation4], 128, 128, 8
    $region29: #{fast_decoder_gru_forward.7} parent=1 // pred_fallthru
      _
    // Predicated region
    $region30: #{fast_decoder_gru_forward.7} parent=1 // pred_check
      _
    $region31: #{fast_decoder_gru_forward.7} parent=1 // pred_check_branch
      %190 = sbr.rel (0) target = $region33
    $region32: #{fast_decoder_gru_forward.7} parent=1 // pred_region
      %191 = dma.done [#allocation4], 256
    $region33: #{fast_decoder_gru_forward.7} parent=1 // pred_fallthru
      _
    %192 = vsyncpa [#allocation3], 1
    %193 = vsyncpa [#allocation6], 1
    %194 = vsyncpa [#allocation4], 1

// kernel: fast_decoder_gru_forward.6
$region0: #{fast_decoder_gru_forward.6}
  #allocation0 [shape = 'u32[]', space=smem, size = 0x4, offset = 0x4, fixed_abs, tag = 'smem constant byte address 0x4 - core index']
  #allocation1 [shape = 'u32[144,128]{1,0:T(1,128)}', space=vmem, size = 0x12000, scoped, tag = 'internal scratch']
  #allocation2 [shape = 'f32[8,128]{1,0:T(8,128)}', space=vmem, size = 0x1000, scoped, tag = 'scratch operand']
  %s0 = inlined_call_operand.hbm [shape: bf16[8,8,384], index: 0, kind: input, shape index: {}]
  %s1 = inlined_call_operand.hbm [shape: f32[8,128], index: 1, kind: input, shape index: {}]
  %s2 = inlined_call_operand.hbm [shape: bf16[128,384], index: 2, kind: input, shape index: {}]
  %s3 = inlined_call_operand.hbm [shape: f32[1,128], index: 3, kind: input, shape index: {}]
  %s4 = inlined_call_operand.hbm [shape: bf16[8,8,128], index: 4, kind: output, shape index: {}]
  %s5 = sld [smem:[#allocation0]]
  $region46: #{fast_decoder_gru_forward.6} parent=0
    _
  %s7 = ssub.s32 1, %s5
  %s8 = scalar_select 0, %s7, %s5
  $region1: #{fast_decoder_gru_forward.6} parent=0
    #allocation3 [shape = 'u8[49152]{0}', space=vmem, size = 0xc000, scoped, tag = 'input window, operand 0, single buffered']
    #allocation4 [shape = 's32[1]{0}', space=sflag, size = 0x4, scoped, tag = 'scoped memory for fast_decoder_gru_forward.6']
    #allocation5 [shape = 's32[1]{0}', space=sflag, size = 0x4, scoped, tag = 'scoped memory for fast_decoder_gru_forward.6']
    #allocation6 [shape = 'u8[4096]{0}', space=vmem, size = 0x1000, scoped, tag = 'input window, operand 1, single buffered']
    #allocation7 [shape = 's32[1]{0}', space=sflag, size = 0x4, scoped, tag = 'scoped memory for fast_decoder_gru_forward.6']
    #allocation8 [shape = 'u8[98304]{0}', space=vmem, size = 0x18000, scoped, tag = 'input window, operand 2, single buffered']
    #allocation9 [shape = 'u8[512]{0}', space=vmem, size = 0x400, scoped, tag = 'input window, operand 3, single buffered']
    #allocation10 [shape = 's32[1]{0}', space=sflag, size = 0x4, scoped, tag = 'scoped memory for fast_decoder_gru_forward.6']
    #allocation11 [shape = 'u8[16384]{0}', space=vmem, size = 0x4000, scoped, tag = 'output window, operand 0, single buffered']
    %9 = vsyncpa [#allocation4], 0
    %10 = vsyncpa [#allocation7], 0
    %11 = vsyncpa [#allocation10], 0
    %12 = vsyncpa [#allocation5], 0
    // Predicated region
    $region2: #{fast_decoder_gru_forward.6} parent=1 // pred_check
      _
    $region3: #{fast_decoder_gru_forward.6} parent=1 // pred_check_branch
      %14 = sbr.rel (0) target = $region5
    $region4: #{fast_decoder_gru_forward.6} parent=1 // pred_region
      %s16 = ssub.s32 1536, 1536
      %17 = vsyncadd [#allocation4], %s16
      %s18 = sshll.u32 [#allocation3], 4
      %s19 = int_to_ptr.vmem [resolvable:$true] %s18
      %24 = dma.hbm_to_vmem [thread:$0]  %s0, 1536, %s19, [#allocation4], 192, 192, 12
    $region5: #{fast_decoder_gru_forward.6} parent=1 // pred_fallthru
      _
    // Predicated region
    $region6: #{fast_decoder_gru_forward.6} parent=1 // pred_check
      _
    $region7: #{fast_decoder_gru_forward.6} parent=1 // pred_check_branch
      %26 = sbr.rel (0) target = $region9
    $region8: #{fast_decoder_gru_forward.6} parent=1 // pred_region
      %s28 = ssub.s32 128, 128
      %29 = vsyncadd [#allocation7], %s28
      %s31 = sshll.u32 [#allocation6], 4
      %s32 = int_to_ptr.vmem [resolvable:$true] %s31
      %34 = dma.hbm_to_vmem [thread:$0]  %s1, 128, %s32, [#allocation7]
    $region9: #{fast_decoder_gru_forward.6} parent=1 // pred_fallthru
      _
    // Predicated region
    $region10: #{fast_decoder_gru_forward.6} parent=1 // pred_check
      _
    $region11: #{fast_decoder_gru_forward.6} parent=1 // pred_check_branch
      %36 = sbr.rel (0) target = $region13
    $region12: #{fast_decoder_gru_forward.6} parent=1 // pred_region
      %s38 = ssub.s32 3072, 3072
      %39 = vsyncadd [#allocation7], %s38
      %s40 = sshll.u32 [#allocation8], 4
      %s41 = int_to_ptr.vmem [resolvable:$true] %s40
      %46 = dma.hbm_to_vmem [thread:$0]  %s2, 3072, %s41, [#allocation7], 192, 192, 12
    $region13: #{fast_decoder_gru_forward.6} parent=1 // pred_fallthru
      _
    // Predicated region
    $region14: #{fast_decoder_gru_forward.6} parent=1 // pred_check
      _
    $region15: #{fast_decoder_gru_forward.6} parent=1 // pred_check_branch
      %48 = sbr.rel (0) target = $region17
    $region16: #{fast_decoder_gru_forward.6} parent=1 // pred_region
      %s50 = ssub.s32 16, 16
      %51 = vsyncadd [#allocation10], %s50
      %s53 = sshll.u32 [#allocation9], 4
      %s54 = int_to_ptr.vmem [resolvable:$true] %s53
      %56 = dma.hbm_to_vmem [thread:$0]  %s3, 16, %s54, [#allocation10]
    $region17: #{fast_decoder_gru_forward.6} parent=1 // pred_fallthru
      _
    // Predicated region
    $region18: #{fast_decoder_gru_forward.6} parent=1 // pred_check
      _
    $region19: #{fast_decoder_gru_forward.6} parent=1 // pred_check_branch
      %58 = sbr.rel (0) target = $region21
    $region20: #{fast_decoder_gru_forward.6} parent=1 // pred_region
      %59 = dma.done [#allocation4], 1536
    $region21: #{fast_decoder_gru_forward.6} parent=1 // pred_fallthru
      _
    // Predicated region
    $region22: #{fast_decoder_gru_forward.6} parent=1 // pred_check
      _
    $region23: #{fast_decoder_gru_forward.6} parent=1 // pred_check_branch
      %61 = sbr.rel (0) target = $region25
    $region24: #{fast_decoder_gru_forward.6} parent=1 // pred_region
      %62 = dma.done [#allocation7], 128
    $region25: #{fast_decoder_gru_forward.6} parent=1 // pred_fallthru
      _
    // Predicated region
    $region26: #{fast_decoder_gru_forward.6} parent=1 // pred_check
      _
    $region27: #{fast_decoder_gru_forward.6} parent=1 // pred_check_branch
      %64 = sbr.rel (0) target = $region29
    $region28: #{fast_decoder_gru_forward.6} parent=1 // pred_region
      %65 = dma.done [#allocation7], 3072
    $region29: #{fast_decoder_gru_forward.6} parent=1 // pred_fallthru
      _
    // Predicated region
    $region30: #{fast_decoder_gru_forward.6} parent=1 // pred_check
      _
    $region31: #{fast_decoder_gru_forward.6} parent=1 // pred_check_branch
      %67 = sbr.rel (0) target = $region33
    $region32: #{fast_decoder_gru_forward.6} parent=1 // pred_region
      %68 = dma.done [#allocation10], 16
    $region33: #{fast_decoder_gru_forward.6} parent=1 // pred_fallthru
      _
    %p70 = scmp.eq.s32.totalorder 0, 0
    // Predicated region
    $region34: #{fast_decoder_gru_forward.6} parent=1 // pred_check
      %p71 = pneg %p70
    $region35: #{fast_decoder_gru_forward.6} parent=1 // pred_check_branch
      %73 = sbr.rel (%p71) target = $region37
    $region36: #{fast_decoder_gru_forward.6} parent=1 // pred_region
      %v74 = vld [vmem:[#allocation6] sm:$0xff]
      %75 = vst [vmem:[#allocation2] sm:$0xff] %v74
    $region37: #{fast_decoder_gru_forward.6} parent=1 // pred_fallthru
      _
    %v76 = vld [vmem:[#allocation9] sm:$0x1]
    %v78 = vlaneseq
    %v79 = vshrl.u32 %v78, 7
    %v80 = vsub.s32 0, %v79
    %v81 = vrot.slane %v76, %v80
    %v83 = vld [vmem:[#allocation2] sm:$0xff]
    %v84 = vld [vmem:[#allocation3] sm:$0xff]
    %v85 = vld [vmem:[#allocation3 + $0x8] sm:$0xf]
    %v86 = vunpack.c.l.bf16 %v84
    %v87 = vunpack.c.h.bf16 %v84
    %v88 = vunpack.c.l.bf16 %v85
    %v89 = vpack.c.bf16 %v83, %v83
    %v90 = vld [vmem:[#allocation8] sm:$0xff]
    %v91 = vld [vmem:[#allocation8 + $0x8] sm:$0xf]
    %v92 = vld [vmem:[#allocation8 + $0xc] sm:$0xff]
    %v93 = vld [vmem:[#allocation8 + $0x14] sm:$0xf]
    %v94 = vld [vmem:[#allocation8 + $0x18] sm:$0xff]
    %v95 = vld [vmem:[#allocation8 + $0x20] sm:$0xf]
    %v96 = vld [vmem:[#allocation8 + $0x24] sm:$0xff]
    %v97 = vld [vmem:[#allocation8 + $0x2c] sm:$0xf]
    %v98 = vld [vmem:[#allocation8 + $0x30] sm:$0xff]
    %v99 = vld [vmem:[#allocation8 + $0x38] sm:$0xf]
    %v100 = vld [vmem:[#allocation8 + $0x3c] sm:$0xff]
    %v101 = vld [vmem:[#allocation8 + $0x44] sm:$0xf]
    %v102 = vld [vmem:[#allocation8 + $0x48] sm:$0xff]
    %v103 = vld [vmem:[#allocation8 + $0x50] sm:$0xf]
    %v104 = vld [vmem:[#allocation8 + $0x54] sm:$0xff]
    %v105 = vld [vmem:[#allocation8 + $0x5c] sm:$0xf]
    %v106 = vld [vmem:[#allocation8 + $0x60] sm:$0xff]
    %v107 = vld [vmem:[#allocation8 + $0x68] sm:$0xf]
    %v108 = vld [vmem:[#allocation8 + $0x6c] sm:$0xff]
    %v109 = vld [vmem:[#allocation8 + $0x74] sm:$0xf]
    %v110 = vld [vmem:[#allocation8 + $0x78] sm:$0xff]
    %v111 = vld [vmem:[#allocation8 + $0x80] sm:$0xf]
    %v112 = vld [vmem:[#allocation8 + $0x84] sm:$0xff]
    %v113 = vld [vmem:[#allocation8 + $0x8c] sm:$0xf]
    %v114 = vld [vmem:[#allocation8 + $0x90] sm:$0xff]
    %v115 = vld [vmem:[#allocation8 + $0x98] sm:$0xf]
    %v116 = vld [vmem:[#allocation8 + $0x9c] sm:$0xff]
    %v117 = vld [vmem:[#allocation8 + $0xa4] sm:$0xf]
    %v118 = vld [vmem:[#allocation8 + $0xa8] sm:$0xff]
    %v119 = vld [vmem:[#allocation8 + $0xb0] sm:$0xf]
    %v120 = vld [vmem:[#allocation8 + $0xb4] sm:$0xff]
    %v121 = vld [vmem:[#allocation8 + $0xbc] sm:$0xf]
    %v154 = vunpack.c.l.b16 %v90
    %v155 = vunpack.c.h.b16 %v90
    %v156 = vunpack.c.l.b16 %v91
    %v157 = vunpack.c.l.b16 %v92
    %v158 = vunpack.c.h.b16 %v92
    %v159 = vunpack.c.l.b16 %v93
    %v160 = vunpack.c.l.b16 %v94
    %v161 = vunpack.c.h.b16 %v94
    %v162 = vunpack.c.l.b16 %v95
    %v163 = vunpack.c.l.b16 %v96
    %v164 = vunpack.c.h.b16 %v96
    %v165 = vunpack.c.l.b16 %v97
    %v166 = vunpack.c.l.b16 %v98
    %v167 = vunpack.c.h.b16 %v98
    %v168 = vunpack.c.l.b16 %v99
    %v169 = vunpack.c.l.b16 %v100
    %v170 = vunpack.c.h.b16 %v100
    %v171 = vunpack.c.l.b16 %v101
    %v172 = vunpack.c.l.b16 %v102
    %v173 = vunpack.c.h.b16 %v102
    %v174 = vunpack.c.l.b16 %v103
    %v175 = vunpack.c.l.b16 %v104
    %v176 = vunpack.c.h.b16 %v104
    %v177 = vunpack.c.l.b16 %v105
    %v178 = vunpack.c.l.b16 %v106
    %v179 = vunpack.c.h.b16 %v106
    %v180 = vunpack.c.l.b16 %v107
    %v181 = vunpack.c.l.b16 %v108
    %v182 = vunpack.c.h.b16 %v108
    %v183 = vunpack.c.l.b16 %v109
    %v184 = vunpack.c.l.b16 %v110
    %v185 = vunpack.c.h.b16 %v110
    %v186 = vunpack.c.l.b16 %v111
    %v187 = vunpack.c.l.b16 %v112
    %v188 = vunpack.c.h.b16 %v112
    %v189 = vunpack.c.l.b16 %v113
    %v190 = vunpack.c.l.b16 %v114
    %v191 = vunpack.c.h.b16 %v114
    %v192 = vunpack.c.l.b16 %v115
    %v193 = vunpack.c.l.b16 %v116
    %v194 = vunpack.c.h.b16 %v116
    %v195 = vunpack.c.l.b16 %v117
    %v196 = vunpack.c.l.b16 %v118
    %v197 = vunpack.c.h.b16 %v118
    %v198 = vunpack.c.l.b16 %v119
    %v199 = vunpack.c.l.b16 %v120
    %v200 = vunpack.c.h.b16 %v120
    %v201 = vunpack.c.l.b16 %v121
    %v202 = vpack.c.b16 %v157, %v154
    %v203 = vpack.c.b16 %v158, %v155
    %v204 = vpack.c.b16 %v159, %v156
    %v205 = vpack.c.b16 %v163, %v160
    %v206 = vpack.c.b16 %v164, %v161
    %v207 = vpack.c.b16 %v165, %v162
    %v208 = vpack.c.b16 %v169, %v166
    %v209 = vpack.c.b16 %v170, %v167
    %v210 = vpack.c.b16 %v171, %v168
    %v211 = vpack.c.b16 %v175, %v172
    %v212 = vpack.c.b16 %v176, %v173
    %v213 = vpack.c.b16 %v177, %v174
    %v214 = vpack.c.b16 %v181, %v178
    %v215 = vpack.c.b16 %v182, %v179
    %v216 = vpack.c.b16 %v183, %v180
    %v217 = vpack.c.b16 %v187, %v184
    %v218 = vpack.c.b16 %v188, %v185
    %v219 = vpack.c.b16 %v189, %v186
    %v220 = vpack.c.b16 %v193, %v190
    %v221 = vpack.c.b16 %v194, %v191
    %v222 = vpack.c.b16 %v195, %v192
    %v223 = vpack.c.b16 %v199, %v196
    %v224 = vpack.c.b16 %v200, %v197
    %v225 = vpack.c.b16 %v201, %v198
    %250 = vmatprep.subr.bf16.mxu0 %v203
    %251 = vmatpush1.bf16.msra.mxu0 %v202
    %252 = vmatprep.subr.bf16.mxu0 %v206
    %253 = vmatpush1.bf16.msra.mxu0 %v205
    %254 = vmatprep.subr.bf16.mxu0 %v209
    %255 = vmatpush1.bf16.msra.mxu0 %v208
    %256 = vmatprep.subr.bf16.mxu0 %v212
    %257 = vmatpush1.bf16.msra.mxu0 %v211
    %258 = vmatprep.subr.bf16.mxu0 %v215
    %259 = vmatpush1.bf16.msra.mxu0 %v214
    %260 = vmatprep.subr.bf16.mxu0 %v218
    %261 = vmatpush1.bf16.msra.mxu0 %v217
    %262 = vmatprep.subr.bf16.mxu0 %v221
    %263 = vmatpush1.bf16.msra.mxu0 %v220
    %264 = vmatprep.subr.bf16.mxu0 %v224
    %265 = vmatpush1.bf16.msra.mxu0 %v223
    %266 = vmatprep.subr.bf16.mxu0 0
    %267 = vmatpush1.bf16.msra.mxu0 0
    %268 = vmatprep.subr.bf16.mxu0 0
    %269 = vmatpush1.bf16.msra.mxu0 0
    %270 = vmatprep.subr.bf16.mxu0 0
    %271 = vmatpush1.bf16.msra.mxu0 0
    %272 = vmatprep.subr.bf16.mxu0 0
    %273 = vmatpush1.bf16.msra.mxu0 0
    %274 = vmatprep.subr.bf16.mxu0 0
    %275 = vmatpush1.bf16.msra.mxu0 0
    %276 = vmatprep.subr.bf16.mxu0 0
    %277 = vmatpush1.bf16.msra.mxu0 0
    %278 = vmatprep.subr.bf16.mxu0 0
    %279 = vmatpush1.bf16.msra.mxu0 0
    %280 = vmatprep.subr.bf16.mxu0 0
    %281 = vmatpush1.bf16.msra.mxu0 0
    %282 = vmatprep.mubr.bf16.mxu0 0
    %283 = vmatmul.mubr.bf16.gmra.mrb[0].mxu0 %v89
    %v284 = vpop.f32.mrb[0].mxu0
    %v285 = vadd.f32 0.0, %v284
    %v286 = vpop.f32.mrb[0].mxu0
    %v287 = vadd.f32 0.0, %v286
    %v288 = vpop.f32.mrb[0].mxu0
    %v289 = vpop.f32.mrb[0].mxu0
    %290 = vdwg.mxu0
    %291 = vmatprep.subr.bf16.mxu0 0
    %292 = vmatpush1.bf16.msra.mxu0 %v204
    %293 = vmatprep.subr.bf16.mxu0 0
    %294 = vmatpush1.bf16.msra.mxu0 %v207
    %295 = vmatprep.subr.bf16.mxu0 0
    %296 = vmatpush1.bf16.msra.mxu0 %v210
    %297 = vmatprep.subr.bf16.mxu0 0
    %298 = vmatpush1.bf16.msra.mxu0 %v213
    %299 = vmatprep.subr.bf16.mxu0 0
    %300 = vmatpush1.bf16.msra.mxu0 %v216
    %301 = vmatprep.subr.bf16.mxu0 0
    %302 = vmatpush1.bf16.msra.mxu0 %v219
    %303 = vmatprep.subr.bf16.mxu0 0
    %304 = vmatpush1.bf16.msra.mxu0 %v222
    %305 = vmatprep.subr.bf16.mxu0 0
    %306 = vmatpush1.bf16.msra.mxu0 %v225
    %307 = vmatprep.subr.bf16.mxu0 0
    %308 = vmatpush1.bf16.msra.mxu0 0
    %309 = vmatprep.subr.bf16.mxu0 0
    %310 = vmatpush1.bf16.msra.mxu0 0
    %311 = vmatprep.subr.bf16.mxu0 0
    %312 = vmatpush1.bf16.msra.mxu0 0
    %313 = vmatprep.subr.bf16.mxu0 0
    %314 = vmatpush1.bf16.msra.mxu0 0
    %315 = vmatprep.subr.bf16.mxu0 0
    %316 = vmatpush1.bf16.msra.mxu0 0
    %317 = vmatprep.subr.bf16.mxu0 0
    %318 = vmatpush1.bf16.msra.mxu0 0
    %319 = vmatprep.subr.bf16.mxu0 0
    %320 = vmatpush1.bf16.msra.mxu0 0
    %321 = vmatprep.subr.bf16.mxu0 0
    %322 = vmatpush1.bf16.msra.mxu0 0
    %323 = vmatprep.mubr.bf16.mxu0 0
    %324 = vmatmul.mubr.bf16.gmra.mrb[0].mxu0 %v89
    %v325 = vpop.f32.mrb[0].mxu0
    %v326 = vadd.f32 0.0, %v325
    %v327 = vpop.f32.mrb[0].mxu0
    %v328 = vpop.f32.mrb[0].mxu0
    %v329 = vpop.f32.mrb[0].mxu0
    %330 = vdwg.mxu0
    %v331 = vadd.f32 %v86, %v285
    %v332 = vxor.u32 %v331, 2147483648
    %v333 = vmul.f32 %v332, 1.442695
    %v334 = vpow.pop %v333
    %v335 = vadd.f32 %v334, 1.0
    %v336 = vrcp.pop %v335
    %v337 = vmul.f32 1.0, %v336
    %v338 = vadd.f32 %v87, %v287
    %v339 = vxor.u32 %v338, 2147483648
    %v340 = vmul.f32 %v339, 1.442695
    %v341 = vpow.pop %v340
    %v342 = vadd.f32 %v341, 1.0
    %v343 = vrcp.pop %v342
    %v344 = vmul.f32 1.0, %v343
    %v345 = vadd.f32 %v326, %v81
    %v346 = vmul.f32 %v337, %v345
    %v347 = vadd.f32 %v88, %v346
    %v348 = vtanh.pop %v347
    %v349 = vsub.f32 1.0, %v344
    %v350 = vmul.f32 %v349, %v348
    %v351 = vmul.f32 %v344, %v83
    %v352 = vadd.f32 %v350, %v351
    %v353 = vpack.c.bf16 %v352, %v352
    %354 = vst [vmem:[#allocation11] sm:$0xf] %v353
    %s355 = scalar_lea.vmem [#allocation3], 12
    %v356 = vld [vmem:[%s355] sm:$0xff]
    %v357 = vld [vmem:[%s355 + $0x8] sm:$0xf]
    %v358 = vunpack.c.l.bf16 %v356
    %v359 = vunpack.c.h.bf16 %v356
    %v360 = vunpack.c.l.bf16 %v357
    %v361 = vld [vmem:[#allocation8] sm:$0xff]
    %v362 = vld [vmem:[#allocation8 + $0x8] sm:$0xf]
    %v363 = vld [vmem:[#allocation8 + $0xc] sm:$0xff]
    %v364 = vld [vmem:[#allocation8 + $0x14] sm:$0xf]
    %v365 = vld [vmem:[#allocation8 + $0x18] sm:$0xff]
    %v366 = vld [vmem:[#allocation8 + $0x20] sm:$0xf]
    %v367 = vld [vmem:[#allocation8 + $0x24] sm:$0xff]
    %v368 = vld [vmem:[#allocation8 + $0x2c] sm:$0xf]
    %v369 = vld [vmem:[#allocation8 + $0x30] sm:$0xff]
    %v370 = vld [vmem:[#allocation8 + $0x38] sm:$0xf]
    %v371 = vld [vmem:[#allocation8 + $0x3c] sm:$0xff]
    %v372 = vld [vmem:[#allocation8 + $0x44] sm:$0xf]
    %v373 = vld [vmem:[#allocation8 + $0x48] sm:$0xff]
    %v374 = vld [vmem:[#allocation8 + $0x50] sm:$0xf]
    %v375 = vld [vmem:[#allocation8 + $0x54] sm:$0xff]
    %v376 = vld [vmem:[#allocation8 + $0x5c] sm:$0xf]
    %v377 = vld [vmem:[#allocation8 + $0x60] sm:$0xff]
    %v378 = vld [vmem:[#allocation8 + $0x68] sm:$0xf]
    %v379 = vld [vmem:[#allocation8 + $0x6c] sm:$0xff]
    %v380 = vld [vmem:[#allocation8 + $0x74] sm:$0xf]
    %v381 = vld [vmem:[#allocation8 + $0x78] sm:$0xff]
    %v382 = vld [vmem:[#allocation8 + $0x80] sm:$0xf]
    %v383 = vld [vmem:[#allocation8 + $0x84] sm:$0xff]
    %v384 = vld [vmem:[#allocation8 + $0x8c] sm:$0xf]
    %v385 = vld [vmem:[#allocation8 + $0x90] sm:$0xff]
    %v386 = vld [vmem:[#allocation8 + $0x98] sm:$0xf]
    %v387 = vld [vmem:[#allocation8 + $0x9c] sm:$0xff]
    %v388 = vld [vmem:[#allocation8 + $0xa4] sm:$0xf]
    %v389 = vld [vmem:[#allocation8 + $0xa8] sm:$0xff]
    %v390 = vld [vmem:[#allocation8 + $0xb0] sm:$0xf]
    %v391 = vld [vmem:[#allocation8 + $0xb4] sm:$0xff]
    %v392 = vld [vmem:[#allocation8 + $0xbc] sm:$0xf]
    %v425 = vunpack.c.l.b16 %v361
    %v426 = vunpack.c.h.b16 %v361
    %v427 = vunpack.c.l.b16 %v362
    %v428 = vunpack.c.l.b16 %v363
    %v429 = vunpack.c.h.b16 %v363
    %v430 = vunpack.c.l.b16 %v364
    %v431 = vunpack.c.l.b16 %v365
    %v432 = vunpack.c.h.b16 %v365
    %v433 = vunpack.c.l.b16 %v366
    %v434 = vunpack.c.l.b16 %v367
    %v435 = vunpack.c.h.b16 %v367
    %v436 = vunpack.c.l.b16 %v368
    %v437 = vunpack.c.l.b16 %v369
    %v438 = vunpack.c.h.b16 %v369
    %v439 = vunpack.c.l.b16 %v370
    %v440 = vunpack.c.l.b16 %v371
    %v441 = vunpack.c.h.b16 %v371
    %v442 = vunpack.c.l.b16 %v372
    %v443 = vunpack.c.l.b16 %v373
    %v444 = vunpack.c.h.b16 %v373
    %v445 = vunpack.c.l.b16 %v374
    %v446 = vunpack.c.l.b16 %v375
    %v447 = vunpack.c.h.b16 %v375
    %v448 = vunpack.c.l.b16 %v376
    %v449 = vunpack.c.l.b16 %v377
    %v450 = vunpack.c.h.b16 %v377
    %v451 = vunpack.c.l.b16 %v378
    %v452 = vunpack.c.l.b16 %v379
    %v453 = vunpack.c.h.b16 %v379
    %v454 = vunpack.c.l.b16 %v380
    %v455 = vunpack.c.l.b16 %v381
    %v456 = vunpack.c.h.b16 %v381
    %v457 = vunpack.c.l.b16 %v382
    %v458 = vunpack.c.l.b16 %v383
    %v459 = vunpack.c.h.b16 %v383
    %v460 = vunpack.c.l.b16 %v384
    %v461 = vunpack.c.l.b16 %v385
    %v462 = vunpack.c.h.b16 %v385
    %v463 = vunpack.c.l.b16 %v386
    %v464 = vunpack.c.l.b16 %v387
    %v465 = vunpack.c.h.b16 %v387
    %v466 = vunpack.c.l.b16 %v388
    %v467 = vunpack.c.l.b16 %v389
    %v468 = vunpack.c.h.b16 %v389
    %v469 = vunpack.c.l.b16 %v390
    %v470 = vunpack.c.l.b16 %v391
    %v471 = vunpack.c.h.b16 %v391
    %v472 = vunpack.c.l.b16 %v392
    %v473 = vpack.c.b16 %v428, %v425
    %v474 = vpack.c.b16 %v429, %v426
    %v475 = vpack.c.b16 %v430, %v427
    %v476 = vpack.c.b16 %v434, %v431
    %v477 = vpack.c.b16 %v435, %v432
    %v478 = vpack.c.b16 %v436, %v433
    %v479 = vpack.c.b16 %v440, %v437
    %v480 = vpack.c.b16 %v441, %v438
    %v481 = vpack.c.b16 %v442, %v439
    %v482 = vpack.c.b16 %v446, %v443
    %v483 = vpack.c.b16 %v447, %v444
    %v484 = vpack.c.b16 %v448, %v445
    %v485 = vpack.c.b16 %v452, %v449
    %v486 = vpack.c.b16 %v453, %v450
    %v487 = vpack.c.b16 %v454, %v451
    %v488 = vpack.c.b16 %v458, %v455
    %v489 = vpack.c.b16 %v459, %v456
    %v490 = vpack.c.b16 %v460, %v457
    %v491 = vpack.c.b16 %v464, %v461
    %v492 = vpack.c.b16 %v465, %v462
    %v493 = vpack.c.b16 %v466, %v463
    %v494 = vpack.c.b16 %v470, %v467
    %v495 = vpack.c.b16 %v471, %v468
    %v496 = vpack.c.b16 %v472, %v469
    %521 = vmatprep.subr.bf16.mxu0 %v474
    %522 = vmatpush1.bf16.msra.mxu0 %v473
    %523 = vmatprep.subr.bf16.mxu0 %v477
    %524 = vmatpush1.bf16.msra.mxu0 %v476
    %525 = vmatprep.subr.bf16.mxu0 %v480
    %526 = vmatpush1.bf16.msra.mxu0 %v479
    %527 = vmatprep.subr.bf16.mxu0 %v483
    %528 = vmatpush1.bf16.msra.mxu0 %v482
    %529 = vmatprep.subr.bf16.mxu0 %v486
    %530 = vmatpush1.bf16.msra.mxu0 %v485
    %531 = vmatprep.subr.bf16.mxu0 %v489
    %532 = vmatpush1.bf16.msra.mxu0 %v488
    %533 = vmatprep.subr.bf16.mxu0 %v492
    %534 = vmatpush1.bf16.msra.mxu0 %v491
    %535 = vmatprep.subr.bf16.mxu0 %v495
    %536 = vmatpush1.bf16.msra.mxu0 %v494
    %537 = vmatprep.subr.bf16.mxu0 0
    %538 = vmatpush1.bf16.msra.mxu0 0
    %539 = vmatprep.subr.bf16.mxu0 0
    %540 = vmatpush1.bf16.msra.mxu0 0
    %541 = vmatprep.subr.bf16.mxu0 0
    %542 = vmatpush1.bf16.msra.mxu0 0
    %543 = vmatprep.subr.bf16.mxu0 0
    %544 = vmatpush1.bf16.msra.mxu0 0
    %545 = vmatprep.subr.bf16.mxu0 0
    %546 = vmatpush1.bf16.msra.mxu0 0
    %547 = vmatprep.subr.bf16.mxu0 0
    %548 = vmatpush1.bf16.msra.mxu0 0
    %549 = vmatprep.subr.bf16.mxu0 0
    %550 = vmatpush1.bf16.msra.mxu0 0
    %551 = vmatprep.subr.bf16.mxu0 0
    %552 = vmatpush1.bf16.msra.mxu0 0
    %553 = vmatprep.mubr.bf16.mxu0 0
    %554 = vmatmul.mubr.bf16.gmra.mrb[0].mxu0 %v353
    %v555 = vpop.f32.mrb[0].mxu0
    %v556 = vadd.f32 0.0, %v555
    %v557 = vpop.f32.mrb[0].mxu0
    %v558 = vadd.f32 0.0, %v557
    %v559 = vpop.f32.mrb[0].mxu0
    %v560 = vpop.f32.mrb[0].mxu0
    %561 = vdwg.mxu0
    %562 = vmatprep.subr.bf16.mxu0 0
    %563 = vmatpush1.bf16.msra.mxu0 %v475
    %564 = vmatprep.subr.bf16.mxu0 0
    %565 = vmatpush1.bf16.msra.mxu0 %v478
    %566 = vmatprep.subr.bf16.mxu0 0
    %567 = vmatpush1.bf16.msra.mxu0 %v481
    %568 = vmatprep.subr.bf16.mxu0 0
    %569 = vmatpush1.bf16.msra.mxu0 %v484
    %570 = vmatprep.subr.bf16.mxu0 0
    %571 = vmatpush1.bf16.msra.mxu0 %v487
    %572 = vmatprep.subr.bf16.mxu0 0
    %573 = vmatpush1.bf16.msra.mxu0 %v490
    %574 = vmatprep.subr.bf16.mxu0 0
    %575 = vmatpush1.bf16.msra.mxu0 %v493
    %576 = vmatprep.subr.bf16.mxu0 0
    %577 = vmatpush1.bf16.msra.mxu0 %v496
    %578 = vmatprep.subr.bf16.mxu0 0
    %579 = vmatpush1.bf16.msra.mxu0 0
    %580 = vmatprep.subr.bf16.mxu0 0
    %581 = vmatpush1.bf16.msra.mxu0 0
    %582 = vmatprep.subr.bf16.mxu0 0
    %583 = vmatpush1.bf16.msra.mxu0 0
    %584 = vmatprep.subr.bf16.mxu0 0
    %585 = vmatpush1.bf16.msra.mxu0 0
    %586 = vmatprep.subr.bf16.mxu0 0
    %587 = vmatpush1.bf16.msra.mxu0 0
    %588 = vmatprep.subr.bf16.mxu0 0
    %589 = vmatpush1.bf16.msra.mxu0 0
    %590 = vmatprep.subr.bf16.mxu0 0
    %591 = vmatpush1.bf16.msra.mxu0 0
    %592 = vmatprep.subr.bf16.mxu0 0
    %593 = vmatpush1.bf16.msra.mxu0 0
    %594 = vmatprep.mubr.bf16.mxu0 0
    %595 = vmatmul.mubr.bf16.gmra.mrb[0].mxu0 %v353
    %v596 = vpop.f32.mrb[0].mxu0
    %v597 = vadd.f32 0.0, %v596
    %v598 = vpop.f32.mrb[0].mxu0
    %v599 = vpop.f32.mrb[0].mxu0
    %v600 = vpop.f32.mrb[0].mxu0
    %601 = vdwg.mxu0
    %v602 = vadd.f32 %v358, %v556
    %v603 = vxor.u32 %v602, 2147483648
    %v604 = vmul.f32 %v603, 1.442695
    %v605 = vpow.pop %v604
    %v606 = vadd.f32 %v605, 1.0
    %v607 = vrcp.pop %v606
    %v608 = vmul.f32 1.0, %v607
    %v609 = vadd.f32 %v359, %v558
    %v610 = vxor.u32 %v609, 2147483648
    %v611 = vmul.f32 %v610, 1.442695
    %v612 = vpow.pop %v611
    %v613 = vadd.f32 %v612, 1.0
    %v614 = vrcp.pop %v613
    %v615 = vmul.f32 1.0, %v614
    %v616 = vadd.f32 %v597, %v81
    %v617 = vmul.f32 %v608, %v616
    %v618 = vadd.f32 %v360, %v617
    %v619 = vtanh.pop %v618
    %v620 = vsub.f32 1.0, %v615
    %v621 = vmul.f32 %v620, %v619
    %v622 = vmul.f32 %v615, %v352
    %v623 = vadd.f32 %v621, %v622
    %v624 = vpack.c.bf16 %v623, %v623
    %s625 = scalar_lea.vmem [#allocation11], 4
    %626 = vst [vmem:[%s625] sm:$0xf] %v624
    %s627 = scalar_lea.vmem [#allocation3], 24
    %v628 = vld [vmem:[%s627] sm:$0xff]
    %v629 = vld [vmem:[%s627 + $0x8] sm:$0xf]
    %v630 = vunpack.c.l.bf16 %v628
    %v631 = vunpack.c.h.bf16 %v628
    %v632 = vunpack.c.l.bf16 %v629
    %v633 = vld [vmem:[#allocation8] sm:$0xff]
    %v634 = vld [vmem:[#allocation8 + $0x8] sm:$0xf]
    %v635 = vld [vmem:[#allocation8 + $0xc] sm:$0xff]
    %v636 = vld [vmem:[#allocation8 + $0x14] sm:$0xf]
    %v637 = vld [vmem:[#allocation8 + $0x18] sm:$0xff]
    %v638 = vld [vmem:[#allocation8 + $0x20] sm:$0xf]
    %v639 = vld [vmem:[#allocation8 + $0x24] sm:$0xff]
    %v640 = vld [vmem:[#allocation8 + $0x2c] sm:$0xf]
    %v641 = vld [vmem:[#allocation8 + $0x30] sm:$0xff]
    %v642 = vld [vmem:[#allocation8 + $0x38] sm:$0xf]
    %v643 = vld [vmem:[#allocation8 + $0x3c] sm:$0xff]
    %v644 = vld [vmem:[#allocation8 + $0x44] sm:$0xf]
    %v645 = vld [vmem:[#allocation8 + $0x48] sm:$0xff]
    %v646 = vld [vmem:[#allocation8 + $0x50] sm:$0xf]
    %v647 = vld [vmem:[#allocation8 + $0x54] sm:$0xff]
    %v648 = vld [vmem:[#allocation8 + $0x5c] sm:$0xf]
    %v649 = vld [vmem:[#allocation8 + $0x60] sm:$0xff]
    %v650 = vld [vmem:[#allocation8 + $0x68] sm:$0xf]
    %v651 = vld [vmem:[#allocation8 + $0x6c] sm:$0xff]
    %v652 = vld [vmem:[#allocation8 + $0x74] sm:$0xf]
    %v653 = vld [vmem:[#allocation8 + $0x78] sm:$0xff]
    %v654 = vld [vmem:[#allocation8 + $0x80] sm:$0xf]
    %v655 = vld [vmem:[#allocation8 + $0x84] sm:$0xff]
    %v656 = vld [vmem:[#allocation8 + $0x8c] sm:$0xf]
    %v657 = vld [vmem:[#allocation8 + $0x90] sm:$0xff]
    %v658 = vld [vmem:[#allocation8 + $0x98] sm:$0xf]
    %v659 = vld [vmem:[#allocation8 + $0x9c] sm:$0xff]
    %v660 = vld [vmem:[#allocation8 + $0xa4] sm:$0xf]
    %v661 = vld [vmem:[#allocation8 + $0xa8] sm:$0xff]
    %v662 = vld [vmem:[#allocation8 + $0xb0] sm:$0xf]
    %v663 = vld [vmem:[#allocation8 + $0xb4] sm:$0xff]
    %v664 = vld [vmem:[#allocation8 + $0xbc] sm:$0xf]
    %v697 = vunpack.c.l.b16 %v633
    %v698 = vunpack.c.h.b16 %v633
    %v699 = vunpack.c.l.b16 %v634
    %v700 = vunpack.c.l.b16 %v635
    %v701 = vunpack.c.h.b16 %v635
    %v702 = vunpack.c.l.b16 %v636
    %v703 = vunpack.c.l.b16 %v637
    %v704 = vunpack.c.h.b16 %v637
    %v705 = vunpack.c.l.b16 %v638
    %v706 = vunpack.c.l.b16 %v639
    %v707 = vunpack.c.h.b16 %v639
    %v708 = vunpack.c.l.b16 %v640
    %v709 = vunpack.c.l.b16 %v641
    %v710 = vunpack.c.h.b16 %v641
    %v711 = vunpack.c.l.b16 %v642
    %v712 = vunpack.c.l.b16 %v643
    %v713 = vunpack.c.h.b16 %v643
    %v714 = vunpack.c.l.b16 %v644
    %v715 = vunpack.c.l.b16 %v645
    %v716 = vunpack.c.h.b16 %v645
    %v717 = vunpack.c.l.b16 %v646
    %v718 = vunpack.c.l.b16 %v647
    %v719 = vunpack.c.h.b16 %v647
    %v720 = vunpack.c.l.b16 %v648
    %v721 = vunpack.c.l.b16 %v649
    %v722 = vunpack.c.h.b16 %v649
    %v723 = vunpack.c.l.b16 %v650
    %v724 = vunpack.c.l.b16 %v651
    %v725 = vunpack.c.h.b16 %v651
    %v726 = vunpack.c.l.b16 %v652
    %v727 = vunpack.c.l.b16 %v653
    %v728 = vunpack.c.h.b16 %v653
    %v729 = vunpack.c.l.b16 %v654
    %v730 = vunpack.c.l.b16 %v655
    %v731 = vunpack.c.h.b16 %v655
    %v732 = vunpack.c.l.b16 %v656
    %v733 = vunpack.c.l.b16 %v657
    %v734 = vunpack.c.h.b16 %v657
    %v735 = vunpack.c.l.b16 %v658
    %v736 = vunpack.c.l.b16 %v659
    %v737 = vunpack.c.h.b16 %v659
    %v738 = vunpack.c.l.b16 %v660
    %v739 = vunpack.c.l.b16 %v661
    %v740 = vunpack.c.h.b16 %v661
    %v741 = vunpack.c.l.b16 %v662
    %v742 = vunpack.c.l.b16 %v663
    %v743 = vunpack.c.h.b16 %v663
    %v744 = vunpack.c.l.b16 %v664
    %v745 = vpack.c.b16 %v700, %v697
    %v746 = vpack.c.b16 %v701, %v698
    %v747 = vpack.c.b16 %v702, %v699
    %v748 = vpack.c.b16 %v706, %v703
    %v749 = vpack.c.b16 %v707, %v704
    %v750 = vpack.c.b16 %v708, %v705
    %v751 = vpack.c.b16 %v712, %v709
    %v752 = vpack.c.b16 %v713, %v710
    %v753 = vpack.c.b16 %v714, %v711
    %v754 = vpack.c.b16 %v718, %v715
    %v755 = vpack.c.b16 %v719, %v716
    %v756 = vpack.c.b16 %v720, %v717
    %v757 = vpack.c.b16 %v724, %v721
    %v758 = vpack.c.b16 %v725, %v722
    %v759 = vpack.c.b16 %v726, %v723
    %v760 = vpack.c.b16 %v730, %v727
    %v761 = vpack.c.b16 %v731, %v728
    %v762 = vpack.c.b16 %v732, %v729
    %v763 = vpack.c.b16 %v736, %v733
    %v764 = vpack.c.b16 %v737, %v734
    %v765 = vpack.c.b16 %v738, %v735
    %v766 = vpack.c.b16 %v742, %v739
    %v767 = vpack.c.b16 %v743, %v740
    %v768 = vpack.c.b16 %v744, %v741
    %793 = vmatprep.subr.bf16.mxu0 %v746
    %794 = vmatpush1.bf16.msra.mxu0 %v745
    %795 = vmatprep.subr.bf16.mxu0 %v749
    %796 = vmatpush1.bf16.msra.mxu0 %v748
    %797 = vmatprep.subr.bf16.mxu0 %v752
    %798 = vmatpush1.bf16.msra.mxu0 %v751
    %799 = vmatprep.subr.bf16.mxu0 %v755
    %800 = vmatpush1.bf16.msra.mxu0 %v754
    %801 = vmatprep.subr.bf16.mxu0 %v758
    %802 = vmatpush1.bf16.msra.mxu0 %v757
    %803 = vmatprep.subr.bf16.mxu0 %v761
    %804 = vmatpush1.bf16.msra.mxu0 %v760
    %805 = vmatprep.subr.bf16.mxu0 %v764
    %806 = vmatpush1.bf16.msra.mxu0 %v763
    %807 = vmatprep.subr.bf16.mxu0 %v767
    %808 = vmatpush1.bf16.msra.mxu0 %v766
    %809 = vmatprep.subr.bf16.mxu0 0
    %810 = vmatpush1.bf16.msra.mxu0 0
    %811 = vmatprep.subr.bf16.mxu0 0
    %812 = vmatpush1.bf16.msra.mxu0 0
    %813 = vmatprep.subr.bf16.mxu0 0
    %814 = vmatpush1.bf16.msra.mxu0 0
    %815 = vmatprep.subr.bf16.mxu0 0
    %816 = vmatpush1.bf16.msra.mxu0 0
    %817 = vmatprep.subr.bf16.mxu0 0
    %818 = vmatpush1.bf16.msra.mxu0 0
    %819 = vmatprep.subr.bf16.mxu0 0
    %820 = vmatpush1.bf16.msra.mxu0 0
    %821 = vmatprep.subr.bf16.mxu0 0
    %822 = vmatpush1.bf16.msra.mxu0 0
    %823 = vmatprep.subr.bf16.mxu0 0
    %824 = vmatpush1.bf16.msra.mxu0 0
    %825 = vmatprep.mubr.bf16.mxu0 0
    %826 = vmatmul.mubr.bf16.gmra.mrb[0].mxu0 %v624
    %v827 = vpop.f32.mrb[0].mxu0
    %v828 = vadd.f32 0.0, %v827
    %v829 = vpop.f32.mrb[0].mxu0
    %v830 = vadd.f32 0.0, %v829
    %v831 = vpop.f32.mrb[0].mxu0
    %v832 = vpop.f32.mrb[0].mxu0
    %833 = vdwg.mxu0
    %834 = vmatprep.subr.bf16.mxu0 0
    %835 = vmatpush1.bf16.msra.mxu0 %v747
    %836 = vmatprep.subr.bf16.mxu0 0
    %837 = vmatpush1.bf16.msra.mxu0 %v750
    %838 = vmatprep.subr.bf16.mxu0 0
    %839 = vmatpush1.bf16.msra.mxu0 %v753
    %840 = vmatprep.subr.bf16.mxu0 0
    %841 = vmatpush1.bf16.msra.mxu0 %v756
    %842 = vmatprep.subr.bf16.mxu0 0
    %843 = vmatpush1.bf16.msra.mxu0 %v759
    %844 = vmatprep.subr.bf16.mxu0 0
    %845 = vmatpush1.bf16.msra.mxu0 %v762
    %846 = vmatprep.subr.bf16.mxu0 0
    %847 = vmatpush1.bf16.msra.mxu0 %v765
    %848 = vmatprep.subr.bf16.mxu0 0
    %849 = vmatpush1.bf16.msra.mxu0 %v768
    %850 = vmatprep.subr.bf16.mxu0 0
    %851 = vmatpush1.bf16.msra.mxu0 0
    %852 = vmatprep.subr.bf16.mxu0 0
    %853 = vmatpush1.bf16.msra.mxu0 0
    %854 = vmatprep.subr.bf16.mxu0 0
    %855 = vmatpush1.bf16.msra.mxu0 0
    %856 = vmatprep.subr.bf16.mxu0 0
    %857 = vmatpush1.bf16.msra.mxu0 0
    %858 = vmatprep.subr.bf16.mxu0 0
    %859 = vmatpush1.bf16.msra.mxu0 0
    %860 = vmatprep.subr.bf16.mxu0 0
    %861 = vmatpush1.bf16.msra.mxu0 0
    %862 = vmatprep.subr.bf16.mxu0 0
    %863 = vmatpush1.bf16.msra.mxu0 0
    %864 = vmatprep.subr.bf16.mxu0 0
    %865 = vmatpush1.bf16.msra.mxu0 0
    %866 = vmatprep.mubr.bf16.mxu0 0
    %867 = vmatmul.mubr.bf16.gmra.mrb[0].mxu0 %v624
    %v868 = vpop.f32.mrb[0].mxu0
    %v869 = vadd.f32 0.0, %v868
    %v870 = vpop.f32.mrb[0].mxu0
    %v871 = vpop.f32.mrb[0].mxu0
    %v872 = vpop.f32.mrb[0].mxu0
    %873 = vdwg.mxu0
    %v874 = vadd.f32 %v630, %v828
    %v875 = vxor.u32 %v874, 2147483648
    %v876 = vmul.f32 %v875, 1.442695
    %v877 = vpow.pop %v876
    %v878 = vadd.f32 %v877, 1.0
    %v879 = vrcp.pop %v878
    %v880 = vmul.f32 1.0, %v879
    %v881 = vadd.f32 %v631, %v830
    %v882 = vxor.u32 %v881, 2147483648
    %v883 = vmul.f32 %v882, 1.442695
    %v884 = vpow.pop %v883
    %v885 = vadd.f32 %v884, 1.0
    %v886 = vrcp.pop %v885
    %v887 = vmul.f32 1.0, %v886
    %v888 = vadd.f32 %v869, %v81
    %v889 = vmul.f32 %v880, %v888
    %v890 = vadd.f32 %v632, %v889
    %v891 = vtanh.pop %v890
    %v892 = vsub.f32 1.0, %v887
    %v893 = vmul.f32 %v892, %v891
    %v894 = vmul.f32 %v887, %v623
    %v895 = vadd.f32 %v893, %v894
    %v896 = vpack.c.bf16 %v895, %v895
    %s897 = scalar_lea.vmem [#allocation11], 8
    %898 = vst [vmem:[%s897] sm:$0xf] %v896
    %s899 = scalar_lea.vmem [#allocation3], 36
    %v900 = vld [vmem:[%s899] sm:$0xff]
    %v901 = vld [vmem:[%s899 + $0x8] sm:$0xf]
    %v902 = vunpack.c.l.bf16 %v900
    %v903 = vunpack.c.h.bf16 %v900
    %v904 = vunpack.c.l.bf16 %v901
    %v905 = vld [vmem:[#allocation8] sm:$0xff]
    %v906 = vld [vmem:[#allocation8 + $0x8] sm:$0xf]
    %v907 = vld [vmem:[#allocation8 + $0xc] sm:$0xff]
    %v908 = vld [vmem:[#allocation8 + $0x14] sm:$0xf]
    %v909 = vld [vmem:[#allocation8 + $0x18] sm:$0xff]
    %v910 = vld [vmem:[#allocation8 + $0x20] sm:$0xf]
    %v911 = vld [vmem:[#allocation8 + $0x24] sm:$0xff]
    %v912 = vld [vmem:[#allocation8 + $0x2c] sm:$0xf]
    %v913 = vld [vmem:[#allocation8 + $0x30] sm:$0xff]
    %v914 = vld [vmem:[#allocation8 + $0x38] sm:$0xf]
    %v915 = vld [vmem:[#allocation8 + $0x3c] sm:$0xff]
    %v916 = vld [vmem:[#allocation8 + $0x44] sm:$0xf]
    %v917 = vld [vmem:[#allocation8 + $0x48] sm:$0xff]
    %v918 = vld [vmem:[#allocation8 + $0x50] sm:$0xf]
    %v919 = vld [vmem:[#allocation8 + $0x54] sm:$0xff]
    %v920 = vld [vmem:[#allocation8 + $0x5c] sm:$0xf]
    %v921 = vld [vmem:[#allocation8 + $0x60] sm:$0xff]
    %v922 = vld [vmem:[#allocation8 + $0x68] sm:$0xf]
    %v923 = vld [vmem:[#allocation8 + $0x6c] sm:$0xff]
    %v924 = vld [vmem:[#allocation8 + $0x74] sm:$0xf]
    %v925 = vld [vmem:[#allocation8 + $0x78] sm:$0xff]
    %v926 = vld [vmem:[#allocation8 + $0x80] sm:$0xf]
    %v927 = vld [vmem:[#allocation8 + $0x84] sm:$0xff]
    %v928 = vld [vmem:[#allocation8 + $0x8c] sm:$0xf]
    %v929 = vld [vmem:[#allocation8 + $0x90] sm:$0xff]
    %v930 = vld [vmem:[#allocation8 + $0x98] sm:$0xf]
    %v931 = vld [vmem:[#allocation8 + $0x9c] sm:$0xff]
    %v932 = vld [vmem:[#allocation8 + $0xa4] sm:$0xf]
    %v933 = vld [vmem:[#allocation8 + $0xa8] sm:$0xff]
    %v934 = vld [vmem:[#allocation8 + $0xb0] sm:$0xf]
    %v935 = vld [vmem:[#allocation8 + $0xb4] sm:$0xff]
    %v936 = vld [vmem:[#allocation8 + $0xbc] sm:$0xf]
    %v969 = vunpack.c.l.b16 %v905
    %v970 = vunpack.c.h.b16 %v905
    %v971 = vunpack.c.l.b16 %v906
    %v972 = vunpack.c.l.b16 %v907
    %v973 = vunpack.c.h.b16 %v907
    %v974 = vunpack.c.l.b16 %v908
    %v975 = vunpack.c.l.b16 %v909
    %v976 = vunpack.c.h.b16 %v909
    %v977 = vunpack.c.l.b16 %v910
    %v978 = vunpack.c.l.b16 %v911
    %v979 = vunpack.c.h.b16 %v911
    %v980 = vunpack.c.l.b16 %v912
    %v981 = vunpack.c.l.b16 %v913
    %v982 = vunpack.c.h.b16 %v913
    %v983 = vunpack.c.l.b16 %v914
    %v984 = vunpack.c.l.b16 %v915
    %v985 = vunpack.c.h.b16 %v915
    %v986 = vunpack.c.l.b16 %v916
    %v987 = vunpack.c.l.b16 %v917
    %v988 = vunpack.c.h.b16 %v917
    %v989 = vunpack.c.l.b16 %v918
    %v990 = vunpack.c.l.b16 %v919
    %v991 = vunpack.c.h.b16 %v919
    %v992 = vunpack.c.l.b16 %v920
    %v993 = vunpack.c.l.b16 %v921
    %v994 = vunpack.c.h.b16 %v921
    %v995 = vunpack.c.l.b16 %v922
    %v996 = vunpack.c.l.b16 %v923
    %v997 = vunpack.c.h.b16 %v923
    %v998 = vunpack.c.l.b16 %v924
    %v999 = vunpack.c.l.b16 %v925
    %v1000 = vunpack.c.h.b16 %v925
    %v1001 = vunpack.c.l.b16 %v926
    %v1002 = vunpack.c.l.b16 %v927
    %v1003 = vunpack.c.h.b16 %v927
    %v1004 = vunpack.c.l.b16 %v928
    %v1005 = vunpack.c.l.b16 %v929
    %v1006 = vunpack.c.h.b16 %v929
    %v1007 = vunpack.c.l.b16 %v930
    %v1008 = vunpack.c.l.b16 %v931
    %v1009 = vunpack.c.h.b16 %v931
    %v1010 = vunpack.c.l.b16 %v932
    %v1011 = vunpack.c.l.b16 %v933
    %v1012 = vunpack.c.h.b16 %v933
    %v1013 = vunpack.c.l.b16 %v934
    %v1014 = vunpack.c.l.b16 %v935
    %v1015 = vunpack.c.h.b16 %v935
    %v1016 = vunpack.c.l.b16 %v936
    %v1017 = vpack.c.b16 %v972, %v969
    %v1018 = vpack.c.b16 %v973, %v970
    %v1019 = vpack.c.b16 %v974, %v971
    %v1020 = vpack.c.b16 %v978, %v975
    %v1021 = vpack.c.b16 %v979, %v976
    %v1022 = vpack.c.b16 %v980, %v977
    %v1023 = vpack.c.b16 %v984, %v981
    %v1024 = vpack.c.b16 %v985, %v982
    %v1025 = vpack.c.b16 %v986, %v983
    %v1026 = vpack.c.b16 %v990, %v987
    %v1027 = vpack.c.b16 %v991, %v988
    %v1028 = vpack.c.b16 %v992, %v989
    %v1029 = vpack.c.b16 %v996, %v993
    %v1030 = vpack.c.b16 %v997, %v994
    %v1031 = vpack.c.b16 %v998, %v995
    %v1032 = vpack.c.b16 %v1002, %v999
    %v1033 = vpack.c.b16 %v1003, %v1000
    %v1034 = vpack.c.b16 %v1004, %v1001
    %v1035 = vpack.c.b16 %v1008, %v1005
    %v1036 = vpack.c.b16 %v1009, %v1006
    %v1037 = vpack.c.b16 %v1010, %v1007
    %v1038 = vpack.c.b16 %v1014, %v1011
    %v1039 = vpack.c.b16 %v1015, %v1012
    %v1040 = vpack.c.b16 %v1016, %v1013
    %1065 = vmatprep.subr.bf16.mxu0 %v1018
    %1066 = vmatpush1.bf16.msra.mxu0 %v1017
    %1067 = vmatprep.subr.bf16.mxu0 %v1021
    %1068 = vmatpush1.bf16.msra.mxu0 %v1020
    %1069 = vmatprep.subr.bf16.mxu0 %v1024
    %1070 = vmatpush1.bf16.msra.mxu0 %v1023
    %1071 = vmatprep.subr.bf16.mxu0 %v1027
    %1072 = vmatpush1.bf16.msra.mxu0 %v1026
    %1073 = vmatprep.subr.bf16.mxu0 %v1030
    %1074 = vmatpush1.bf16.msra.mxu0 %v1029
    %1075 = vmatprep.subr.bf16.mxu0 %v1033
    %1076 = vmatpush1.bf16.msra.mxu0 %v1032
    %1077 = vmatprep.subr.bf16.mxu0 %v1036
    %1078 = vmatpush1.bf16.msra.mxu0 %v1035
    %1079 = vmatprep.subr.bf16.mxu0 %v1039
    %1080 = vmatpush1.bf16.msra.mxu0 %v1038
    %1081 = vmatprep.subr.bf16.mxu0 0
    %1082 = vmatpush1.bf16.msra.mxu0 0
    %1083 = vmatprep.subr.bf16.mxu0 0
    %1084 = vmatpush1.bf16.msra.mxu0 0
    %1085 = vmatprep.subr.bf16.mxu0 0
    %1086 = vmatpush1.bf16.msra.mxu0 0
    %1087 = vmatprep.subr.bf16.mxu0 0
    %1088 = vmatpush1.bf16.msra.mxu0 0
    %1089 = vmatprep.subr.bf16.mxu0 0
    %1090 = vmatpush1.bf16.msra.mxu0 0
    %1091 = vmatprep.subr.bf16.mxu0 0
    %1092 = vmatpush1.bf16.msra.mxu0 0
    %1093 = vmatprep.subr.bf16.mxu0 0
    %1094 = vmatpush1.bf16.msra.mxu0 0
    %1095 = vmatprep.subr.bf16.mxu0 0
    %1096 = vmatpush1.bf16.msra.mxu0 0
    %1097 = vmatprep.mubr.bf16.mxu0 0
    %1098 = vmatmul.mubr.bf16.gmra.mrb[0].mxu0 %v896
    %v1099 = vpop.f32.mrb[0].mxu0
    %v1100 = vadd.f32 0.0, %v1099
    %v1101 = vpop.f32.mrb[0].mxu0
    %v1102 = vadd.f32 0.0, %v1101
    %v1103 = vpop.f32.mrb[0].mxu0
    %v1104 = vpop.f32.mrb[0].mxu0
    %1105 = vdwg.mxu0
    %1106 = vmatprep.subr.bf16.mxu0 0
    %1107 = vmatpush1.bf16.msra.mxu0 %v1019
    %1108 = vmatprep.subr.bf16.mxu0 0
    %1109 = vmatpush1.bf16.msra.mxu0 %v1022
    %1110 = vmatprep.subr.bf16.mxu0 0
    %1111 = vmatpush1.bf16.msra.mxu0 %v1025
    %1112 = vmatprep.subr.bf16.mxu0 0
    %1113 = vmatpush1.bf16.msra.mxu0 %v1028
    %1114 = vmatprep.subr.bf16.mxu0 0
    %1115 = vmatpush1.bf16.msra.mxu0 %v1031
    %1116 = vmatprep.subr.bf16.mxu0 0
    %1117 = vmatpush1.bf16.msra.mxu0 %v1034
    %1118 = vmatprep.subr.bf16.mxu0 0
    %1119 = vmatpush1.bf16.msra.mxu0 %v1037
    %1120 = vmatprep.subr.bf16.mxu0 0
    %1121 = vmatpush1.bf16.msra.mxu0 %v1040
    %1122 = vmatprep.subr.bf16.mxu0 0
    %1123 = vmatpush1.bf16.msra.mxu0 0
    %1124 = vmatprep.subr.bf16.mxu0 0
    %1125 = vmatpush1.bf16.msra.mxu0 0
    %1126 = vmatprep.subr.bf16.mxu0 0
    %1127 = vmatpush1.bf16.msra.mxu0 0
    %1128 = vmatprep.subr.bf16.mxu0 0
    %1129 = vmatpush1.bf16.msra.mxu0 0
    %1130 = vmatprep.subr.bf16.mxu0 0
    %1131 = vmatpush1.bf16.msra.mxu0 0
    %1132 = vmatprep.subr.bf16.mxu0 0
    %1133 = vmatpush1.bf16.msra.mxu0 0
    %1134 = vmatprep.subr.bf16.mxu0 0
    %1135 = vmatpush1.bf16.msra.mxu0 0
    %1136 = vmatprep.subr.bf16.mxu0 0
    %1137 = vmatpush1.bf16.msra.mxu0 0
    %1138 = vmatprep.mubr.bf16.mxu0 0
    %1139 = vmatmul.mubr.bf16.gmra.mrb[0].mxu0 %v896
    %v1140 = vpop.f32.mrb[0].mxu0
    %v1141 = vadd.f32 0.0, %v1140
    %v1142 = vpop.f32.mrb[0].mxu0
    %v1143 = vpop.f32.mrb[0].mxu0
    %v1144 = vpop.f32.mrb[0].mxu0
    %1145 = vdwg.mxu0
    %v1146 = vadd.f32 %v902, %v1100
    %v1147 = vxor.u32 %v1146, 2147483648
    %v1148 = vmul.f32 %v1147, 1.442695
    %v1149 = vpow.pop %v1148
    %v1150 = vadd.f32 %v1149, 1.0
    %v1151 = vrcp.pop %v1150
    %v1152 = vmul.f32 1.0, %v1151
    %v1153 = vadd.f32 %v903, %v1102
    %v1154 = vxor.u32 %v1153, 2147483648
    %v1155 = vmul.f32 %v1154, 1.442695
    %v1156 = vpow.pop %v1155
    %v1157 = vadd.f32 %v1156, 1.0
    %v1158 = vrcp.pop %v1157
    %v1159 = vmul.f32 1.0, %v1158
    %v1160 = vadd.f32 %v1141, %v81
    %v1161 = vmul.f32 %v1152, %v1160
    %v1162 = vadd.f32 %v904, %v1161
    %v1163 = vtanh.pop %v1162
    %v1164 = vsub.f32 1.0, %v1159
    %v1165 = vmul.f32 %v1164, %v1163
    %v1166 = vmul.f32 %v1159, %v895
    %v1167 = vadd.f32 %v1165, %v1166
    %v1168 = vpack.c.bf16 %v1167, %v1167
    %s1169 = scalar_lea.vmem [#allocation11], 12
    %1170 = vst [vmem:[%s1169] sm:$0xf] %v1168
    %s1171 = scalar_lea.vmem [#allocation3], 48
    %v1172 = vld [vmem:[%s1171] sm:$0xff]
    %v1173 = vld [vmem:[%s1171 + $0x8] sm:$0xf]
    %v1174 = vunpack.c.l.bf16 %v1172
    %v1175 = vunpack.c.h.bf16 %v1172
    %v1176 = vunpack.c.l.bf16 %v1173
    %v1177 = vld [vmem:[#allocation8] sm:$0xff]
    %v1178 = vld [vmem:[#allocation8 + $0x8] sm:$0xf]
    %v1179 = vld [vmem:[#allocation8 + $0xc] sm:$0xff]
    %v1180 = vld [vmem:[#allocation8 + $0x14] sm:$0xf]
    %v1181 = vld [vmem:[#allocation8 + $0x18] sm:$0xff]
    %v1182 = vld [vmem:[#allocation8 + $0x20] sm:$0xf]
    %v1183 = vld [vmem:[#allocation8 + $0x24] sm:$0xff]
    %v1184 = vld [vmem:[#allocation8 + $0x2c] sm:$0xf]
    %v1185 = vld [vmem:[#allocation8 + $0x30] sm:$0xff]
    %v1186 = vld [vmem:[#allocation8 + $0x38] sm:$0xf]
    %v1187 = vld [vmem:[#allocation8 + $0x3c] sm:$0xff]
    %v1188 = vld [vmem:[#allocation8 + $0x44] sm:$0xf]
    %v1189 = vld [vmem:[#allocation8 + $0x48] sm:$0xff]
    %v1190 = vld [vmem:[#allocation8 + $0x50] sm:$0xf]
    %v1191 = vld [vmem:[#allocation8 + $0x54] sm:$0xff]
    %v1192 = vld [vmem:[#allocation8 + $0x5c] sm:$0xf]
    %v1193 = vld [vmem:[#allocation8 + $0x60] sm:$0xff]
    %v1194 = vld [vmem:[#allocation8 + $0x68] sm:$0xf]
    %v1195 = vld [vmem:[#allocation8 + $0x6c] sm:$0xff]
    %v1196 = vld [vmem:[#allocation8 + $0x74] sm:$0xf]
    %v1197 = vld [vmem:[#allocation8 + $0x78] sm:$0xff]
    %v1198 = vld [vmem:[#allocation8 + $0x80] sm:$0xf]
    %v1199 = vld [vmem:[#allocation8 + $0x84] sm:$0xff]
    %v1200 = vld [vmem:[#allocation8 + $0x8c] sm:$0xf]
    %v1201 = vld [vmem:[#allocation8 + $0x90] sm:$0xff]
    %v1202 = vld [vmem:[#allocation8 + $0x98] sm:$0xf]
    %v1203 = vld [vmem:[#allocation8 + $0x9c] sm:$0xff]
    %v1204 = vld [vmem:[#allocation8 + $0xa4] sm:$0xf]
    %v1205 = vld [vmem:[#allocation8 + $0xa8] sm:$0xff]
    %v1206 = vld [vmem:[#allocation8 + $0xb0] sm:$0xf]
    %v1207 = vld [vmem:[#allocation8 + $0xb4] sm:$0xff]
    %v1208 = vld [vmem:[#allocation8 + $0xbc] sm:$0xf]
    %v1241 = vunpack.c.l.b16 %v1177
    %v1242 = vunpack.c.h.b16 %v1177
    %v1243 = vunpack.c.l.b16 %v1178
    %v1244 = vunpack.c.l.b16 %v1179
    %v1245 = vunpack.c.h.b16 %v1179
    %v1246 = vunpack.c.l.b16 %v1180
    %v1247 = vunpack.c.l.b16 %v1181
    %v1248 = vunpack.c.h.b16 %v1181
    %v1249 = vunpack.c.l.b16 %v1182
    %v1250 = vunpack.c.l.b16 %v1183
    %v1251 = vunpack.c.h.b16 %v1183
    %v1252 = vunpack.c.l.b16 %v1184
    %v1253 = vunpack.c.l.b16 %v1185
    %v1254 = vunpack.c.h.b16 %v1185
    %v1255 = vunpack.c.l.b16 %v1186
    %v1256 = vunpack.c.l.b16 %v1187
    %v1257 = vunpack.c.h.b16 %v1187
    %v1258 = vunpack.c.l.b16 %v1188
    %v1259 = vunpack.c.l.b16 %v1189
    %v1260 = vunpack.c.h.b16 %v1189
    %v1261 = vunpack.c.l.b16 %v1190
    %v1262 = vunpack.c.l.b16 %v1191
    %v1263 = vunpack.c.h.b16 %v1191
    %v1264 = vunpack.c.l.b16 %v1192
    %v1265 = vunpack.c.l.b16 %v1193
    %v1266 = vunpack.c.h.b16 %v1193
    %v1267 = vunpack.c.l.b16 %v1194
    %v1268 = vunpack.c.l.b16 %v1195
    %v1269 = vunpack.c.h.b16 %v1195
    %v1270 = vunpack.c.l.b16 %v1196
    %v1271 = vunpack.c.l.b16 %v1197
    %v1272 = vunpack.c.h.b16 %v1197
    %v1273 = vunpack.c.l.b16 %v1198
    %v1274 = vunpack.c.l.b16 %v1199
    %v1275 = vunpack.c.h.b16 %v1199
    %v1276 = vunpack.c.l.b16 %v1200
    %v1277 = vunpack.c.l.b16 %v1201
    %v1278 = vunpack.c.h.b16 %v1201
    %v1279 = vunpack.c.l.b16 %v1202
    %v1280 = vunpack.c.l.b16 %v1203
    %v1281 = vunpack.c.h.b16 %v1203
    %v1282 = vunpack.c.l.b16 %v1204
    %v1283 = vunpack.c.l.b16 %v1205
    %v1284 = vunpack.c.h.b16 %v1205
    %v1285 = vunpack.c.l.b16 %v1206
    %v1286 = vunpack.c.l.b16 %v1207
    %v1287 = vunpack.c.h.b16 %v1207
    %v1288 = vunpack.c.l.b16 %v1208
    %v1289 = vpack.c.b16 %v1244, %v1241
    %v1290 = vpack.c.b16 %v1245, %v1242
    %v1291 = vpack.c.b16 %v1246, %v1243
    %v1292 = vpack.c.b16 %v1250, %v1247
    %v1293 = vpack.c.b16 %v1251, %v1248
    %v1294 = vpack.c.b16 %v1252, %v1249
    %v1295 = vpack.c.b16 %v1256, %v1253
    %v1296 = vpack.c.b16 %v1257, %v1254
    %v1297 = vpack.c.b16 %v1258, %v1255
    %v1298 = vpack.c.b16 %v1262, %v1259
    %v1299 = vpack.c.b16 %v1263, %v1260
    %v1300 = vpack.c.b16 %v1264, %v1261
    %v1301 = vpack.c.b16 %v1268, %v1265
    %v1302 = vpack.c.b16 %v1269, %v1266
    %v1303 = vpack.c.b16 %v1270, %v1267
    %v1304 = vpack.c.b16 %v1274, %v1271
    %v1305 = vpack.c.b16 %v1275, %v1272
    %v1306 = vpack.c.b16 %v1276, %v1273
    %v1307 = vpack.c.b16 %v1280, %v1277
    %v1308 = vpack.c.b16 %v1281, %v1278
    %v1309 = vpack.c.b16 %v1282, %v1279
    %v1310 = vpack.c.b16 %v1286, %v1283
    %v1311 = vpack.c.b16 %v1287, %v1284
    %v1312 = vpack.c.b16 %v1288, %v1285
    %1337 = vmatprep.subr.bf16.mxu0 %v1290
    %1338 = vmatpush1.bf16.msra.mxu0 %v1289
    %1339 = vmatprep.subr.bf16.mxu0 %v1293
    %1340 = vmatpush1.bf16.msra.mxu0 %v1292
    %1341 = vmatprep.subr.bf16.mxu0 %v1296
    %1342 = vmatpush1.bf16.msra.mxu0 %v1295
    %1343 = vmatprep.subr.bf16.mxu0 %v1299
    %1344 = vmatpush1.bf16.msra.mxu0 %v1298
    %1345 = vmatprep.subr.bf16.mxu0 %v1302
    %1346 = vmatpush1.bf16.msra.mxu0 %v1301
    %1347 = vmatprep.subr.bf16.mxu0 %v1305
    %1348 = vmatpush1.bf16.msra.mxu0 %v1304
    %1349 = vmatprep.subr.bf16.mxu0 %v1308
    %1350 = vmatpush1.bf16.msra.mxu0 %v1307
    %1351 = vmatprep.subr.bf16.mxu0 %v1311
    %1352 = vmatpush1.bf16.msra.mxu0 %v1310
    %1353 = vmatprep.subr.bf16.mxu0 0
    %1354 = vmatpush1.bf16.msra.mxu0 0
    %1355 = vmatprep.subr.bf16.mxu0 0
    %1356 = vmatpush1.bf16.msra.mxu0 0
    %1357 = vmatprep.subr.bf16.mxu0 0
    %1358 = vmatpush1.bf16.msra.mxu0 0
    %1359 = vmatprep.subr.bf16.mxu0 0
    %1360 = vmatpush1.bf16.msra.mxu0 0
    %1361 = vmatprep.subr.bf16.mxu0 0
    %1362 = vmatpush1.bf16.msra.mxu0 0
    %1363 = vmatprep.subr.bf16.mxu0 0
    %1364 = vmatpush1.bf16.msra.mxu0 0
    %1365 = vmatprep.subr.bf16.mxu0 0
    %1366 = vmatpush1.bf16.msra.mxu0 0
    %1367 = vmatprep.subr.bf16.mxu0 0
    %1368 = vmatpush1.bf16.msra.mxu0 0
    %1369 = vmatprep.mubr.bf16.mxu0 0
    %1370 = vmatmul.mubr.bf16.gmra.mrb[0].mxu0 %v1168
    %v1371 = vpop.f32.mrb[0].mxu0
    %v1372 = vadd.f32 0.0, %v1371
    %v1373 = vpop.f32.mrb[0].mxu0
    %v1374 = vadd.f32 0.0, %v1373
    %v1375 = vpop.f32.mrb[0].mxu0
    %v1376 = vpop.f32.mrb[0].mxu0
    %1377 = vdwg.mxu0
    %1378 = vmatprep.subr.bf16.mxu0 0
    %1379 = vmatpush1.bf16.msra.mxu0 %v1291
    %1380 = vmatprep.subr.bf16.mxu0 0
    %1381 = vmatpush1.bf16.msra.mxu0 %v1294
    %1382 = vmatprep.subr.bf16.mxu0 0
    %1383 = vmatpush1.bf16.msra.mxu0 %v1297
    %1384 = vmatprep.subr.bf16.mxu0 0
    %1385 = vmatpush1.bf16.msra.mxu0 %v1300
    %1386 = vmatprep.subr.bf16.mxu0 0
    %1387 = vmatpush1.bf16.msra.mxu0 %v1303
    %1388 = vmatprep.subr.bf16.mxu0 0
    %1389 = vmatpush1.bf16.msra.mxu0 %v1306
    %1390 = vmatprep.subr.bf16.mxu0 0
    %1391 = vmatpush1.bf16.msra.mxu0 %v1309
    %1392 = vmatprep.subr.bf16.mxu0 0
    %1393 = vmatpush1.bf16.msra.mxu0 %v1312
    %1394 = vmatprep.subr.bf16.mxu0 0
    %1395 = vmatpush1.bf16.msra.mxu0 0
    %1396 = vmatprep.subr.bf16.mxu0 0
    %1397 = vmatpush1.bf16.msra.mxu0 0
    %1398 = vmatprep.subr.bf16.mxu0 0
    %1399 = vmatpush1.bf16.msra.mxu0 0
    %1400 = vmatprep.subr.bf16.mxu0 0
    %1401 = vmatpush1.bf16.msra.mxu0 0
    %1402 = vmatprep.subr.bf16.mxu0 0
    %1403 = vmatpush1.bf16.msra.mxu0 0
    %1404 = vmatprep.subr.bf16.mxu0 0
    %1405 = vmatpush1.bf16.msra.mxu0 0
    %1406 = vmatprep.subr.bf16.mxu0 0
    %1407 = vmatpush1.bf16.msra.mxu0 0
    %1408 = vmatprep.subr.bf16.mxu0 0
    %1409 = vmatpush1.bf16.msra.mxu0 0
    %1410 = vmatprep.mubr.bf16.mxu0 0
    %1411 = vmatmul.mubr.bf16.gmra.mrb[0].mxu0 %v1168
    %v1412 = vpop.f32.mrb[0].mxu0
    %v1413 = vadd.f32 0.0, %v1412
    %v1414 = vpop.f32.mrb[0].mxu0
    %v1415 = vpop.f32.mrb[0].mxu0
    %v1416 = vpop.f32.mrb[0].mxu0
    %1417 = vdwg.mxu0
    %v1418 = vadd.f32 %v1174, %v1372
    %v1419 = vxor.u32 %v1418, 2147483648
    %v1420 = vmul.f32 %v1419, 1.442695
    %v1421 = vpow.pop %v1420
    %v1422 = vadd.f32 %v1421, 1.0
    %v1423 = vrcp.pop %v1422
    %v1424 = vmul.f32 1.0, %v1423
    %v1425 = vadd.f32 %v1175, %v1374
    %v1426 = vxor.u32 %v1425, 2147483648
    %v1427 = vmul.f32 %v1426, 1.442695
    %v1428 = vpow.pop %v1427
    %v1429 = vadd.f32 %v1428, 1.0
    %v1430 = vrcp.pop %v1429
    %v1431 = vmul.f32 1.0, %v1430
    %v1432 = vadd.f32 %v1413, %v81
    %v1433 = vmul.f32 %v1424, %v1432
    %v1434 = vadd.f32 %v1176, %v1433
    %v1435 = vtanh.pop %v1434
    %v1436 = vsub.f32 1.0, %v1431
    %v1437 = vmul.f32 %v1436, %v1435
    %v1438 = vmul.f32 %v1431, %v1167
    %v1439 = vadd.f32 %v1437, %v1438
    %v1440 = vpack.c.bf16 %v1439, %v1439
    %s1441 = scalar_lea.vmem [#allocation11], 16
    %1442 = vst [vmem:[%s1441] sm:$0xf] %v1440
    %s1443 = scalar_lea.vmem [#allocation3], 60
    %v1444 = vld [vmem:[%s1443] sm:$0xff]
    %v1445 = vld [vmem:[%s1443 + $0x8] sm:$0xf]
    %v1446 = vunpack.c.l.bf16 %v1444
    %v1447 = vunpack.c.h.bf16 %v1444
    %v1448 = vunpack.c.l.bf16 %v1445
    %v1449 = vld [vmem:[#allocation8] sm:$0xff]
    %v1450 = vld [vmem:[#allocation8 + $0x8] sm:$0xf]
    %v1451 = vld [vmem:[#allocation8 + $0xc] sm:$0xff]
    %v1452 = vld [vmem:[#allocation8 + $0x14] sm:$0xf]
    %v1453 = vld [vmem:[#allocation8 + $0x18] sm:$0xff]
    %v1454 = vld [vmem:[#allocation8 + $0x20] sm:$0xf]
    %v1455 = vld [vmem:[#allocation8 + $0x24] sm:$0xff]
    %v1456 = vld [vmem:[#allocation8 + $0x2c] sm:$0xf]
    %v1457 = vld [vmem:[#allocation8 + $0x30] sm:$0xff]
    %v1458 = vld [vmem:[#allocation8 + $0x38] sm:$0xf]
    %v1459 = vld [vmem:[#allocation8 + $0x3c] sm:$0xff]
    %v1460 = vld [vmem:[#allocation8 + $0x44] sm:$0xf]
    %v1461 = vld [vmem:[#allocation8 + $0x48] sm:$0xff]
    %v1462 = vld [vmem:[#allocation8 + $0x50] sm:$0xf]
    %v1463 = vld [vmem:[#allocation8 + $0x54] sm:$0xff]
    %v1464 = vld [vmem:[#allocation8 + $0x5c] sm:$0xf]
    %v1465 = vld [vmem:[#allocation8 + $0x60] sm:$0xff]
    %v1466 = vld [vmem:[#allocation8 + $0x68] sm:$0xf]
    %v1467 = vld [vmem:[#allocation8 + $0x6c] sm:$0xff]
    %v1468 = vld [vmem:[#allocation8 + $0x74] sm:$0xf]
    %v1469 = vld [vmem:[#allocation8 + $0x78] sm:$0xff]
    %v1470 = vld [vmem:[#allocation8 + $0x80] sm:$0xf]
    %v1471 = vld [vmem:[#allocation8 + $0x84] sm:$0xff]
    %v1472 = vld [vmem:[#allocation8 + $0x8c] sm:$0xf]
    %v1473 = vld [vmem:[#allocation8 + $0x90] sm:$0xff]
    %v1474 = vld [vmem:[#allocation8 + $0x98] sm:$0xf]
    %v1475 = vld [vmem:[#allocation8 + $0x9c] sm:$0xff]
    %v1476 = vld [vmem:[#allocation8 + $0xa4] sm:$0xf]
    %v1477 = vld [vmem:[#allocation8 + $0xa8] sm:$0xff]
    %v1478 = vld [vmem:[#allocation8 + $0xb0] sm:$0xf]
    %v1479 = vld [vmem:[#allocation8 + $0xb4] sm:$0xff]
    %v1480 = vld [vmem:[#allocation8 + $0xbc] sm:$0xf]
    %v1513 = vunpack.c.l.b16 %v1449
    %v1514 = vunpack.c.h.b16 %v1449
    %v1515 = vunpack.c.l.b16 %v1450
    %v1516 = vunpack.c.l.b16 %v1451
    %v1517 = vunpack.c.h.b16 %v1451
    %v1518 = vunpack.c.l.b16 %v1452
    %v1519 = vunpack.c.l.b16 %v1453
    %v1520 = vunpack.c.h.b16 %v1453
    %v1521 = vunpack.c.l.b16 %v1454
    %v1522 = vunpack.c.l.b16 %v1455
    %v1523 = vunpack.c.h.b16 %v1455
    %v1524 = vunpack.c.l.b16 %v1456
    %v1525 = vunpack.c.l.b16 %v1457
    %v1526 = vunpack.c.h.b16 %v1457
    %v1527 = vunpack.c.l.b16 %v1458
    %v1528 = vunpack.c.l.b16 %v1459
    %v1529 = vunpack.c.h.b16 %v1459
    %v1530 = vunpack.c.l.b16 %v1460
    %v1531 = vunpack.c.l.b16 %v1461
    %v1532 = vunpack.c.h.b16 %v1461
    %v1533 = vunpack.c.l.b16 %v1462
    %v1534 = vunpack.c.l.b16 %v1463
    %v1535 = vunpack.c.h.b16 %v1463
    %v1536 = vunpack.c.l.b16 %v1464
    %v1537 = vunpack.c.l.b16 %v1465
    %v1538 = vunpack.c.h.b16 %v1465
    %v1539 = vunpack.c.l.b16 %v1466
    %v1540 = vunpack.c.l.b16 %v1467
    %v1541 = vunpack.c.h.b16 %v1467
    %v1542 = vunpack.c.l.b16 %v1468
    %v1543 = vunpack.c.l.b16 %v1469
    %v1544 = vunpack.c.h.b16 %v1469
    %v1545 = vunpack.c.l.b16 %v1470
    %v1546 = vunpack.c.l.b16 %v1471
    %v1547 = vunpack.c.h.b16 %v1471
    %v1548 = vunpack.c.l.b16 %v1472
    %v1549 = vunpack.c.l.b16 %v1473
    %v1550 = vunpack.c.h.b16 %v1473
    %v1551 = vunpack.c.l.b16 %v1474
    %v1552 = vunpack.c.l.b16 %v1475
    %v1553 = vunpack.c.h.b16 %v1475
    %v1554 = vunpack.c.l.b16 %v1476
    %v1555 = vunpack.c.l.b16 %v1477
    %v1556 = vunpack.c.h.b16 %v1477
    %v1557 = vunpack.c.l.b16 %v1478
    %v1558 = vunpack.c.l.b16 %v1479
    %v1559 = vunpack.c.h.b16 %v1479
    %v1560 = vunpack.c.l.b16 %v1480
    %v1561 = vpack.c.b16 %v1516, %v1513
    %v1562 = vpack.c.b16 %v1517, %v1514
    %v1563 = vpack.c.b16 %v1518, %v1515
    %v1564 = vpack.c.b16 %v1522, %v1519
    %v1565 = vpack.c.b16 %v1523, %v1520
    %v1566 = vpack.c.b16 %v1524, %v1521
    %v1567 = vpack.c.b16 %v1528, %v1525
    %v1568 = vpack.c.b16 %v1529, %v1526
    %v1569 = vpack.c.b16 %v1530, %v1527
    %v1570 = vpack.c.b16 %v1534, %v1531
    %v1571 = vpack.c.b16 %v1535, %v1532
    %v1572 = vpack.c.b16 %v1536, %v1533
    %v1573 = vpack.c.b16 %v1540, %v1537
    %v1574 = vpack.c.b16 %v1541, %v1538
    %v1575 = vpack.c.b16 %v1542, %v1539
    %v1576 = vpack.c.b16 %v1546, %v1543
    %v1577 = vpack.c.b16 %v1547, %v1544
    %v1578 = vpack.c.b16 %v1548, %v1545
    %v1579 = vpack.c.b16 %v1552, %v1549
    %v1580 = vpack.c.b16 %v1553, %v1550
    %v1581 = vpack.c.b16 %v1554, %v1551
    %v1582 = vpack.c.b16 %v1558, %v1555
    %v1583 = vpack.c.b16 %v1559, %v1556
    %v1584 = vpack.c.b16 %v1560, %v1557
    %1609 = vmatprep.subr.bf16.mxu0 %v1562
    %1610 = vmatpush1.bf16.msra.mxu0 %v1561
    %1611 = vmatprep.subr.bf16.mxu0 %v1565
    %1612 = vmatpush1.bf16.msra.mxu0 %v1564
    %1613 = vmatprep.subr.bf16.mxu0 %v1568
    %1614 = vmatpush1.bf16.msra.mxu0 %v1567
    %1615 = vmatprep.subr.bf16.mxu0 %v1571
    %1616 = vmatpush1.bf16.msra.mxu0 %v1570
    %1617 = vmatprep.subr.bf16.mxu0 %v1574
    %1618 = vmatpush1.bf16.msra.mxu0 %v1573
    %1619 = vmatprep.subr.bf16.mxu0 %v1577
    %1620 = vmatpush1.bf16.msra.mxu0 %v1576
    %1621 = vmatprep.subr.bf16.mxu0 %v1580
    %1622 = vmatpush1.bf16.msra.mxu0 %v1579
    %1623 = vmatprep.subr.bf16.mxu0 %v1583
    %1624 = vmatpush1.bf16.msra.mxu0 %v1582
    %1625 = vmatprep.subr.bf16.mxu0 0
    %1626 = vmatpush1.bf16.msra.mxu0 0
    %1627 = vmatprep.subr.bf16.mxu0 0
    %1628 = vmatpush1.bf16.msra.mxu0 0
    %1629 = vmatprep.subr.bf16.mxu0 0
    %1630 = vmatpush1.bf16.msra.mxu0 0
    %1631 = vmatprep.subr.bf16.mxu0 0
    %1632 = vmatpush1.bf16.msra.mxu0 0
    %1633 = vmatprep.subr.bf16.mxu0 0
    %1634 = vmatpush1.bf16.msra.mxu0 0
    %1635 = vmatprep.subr.bf16.mxu0 0
    %1636 = vmatpush1.bf16.msra.mxu0 0
    %1637 = vmatprep.subr.bf16.mxu0 0
    %1638 = vmatpush1.bf16.msra.mxu0 0
    %1639 = vmatprep.subr.bf16.mxu0 0
    %1640 = vmatpush1.bf16.msra.mxu0 0
    %1641 = vmatprep.mubr.bf16.mxu0 0
    %1642 = vmatmul.mubr.bf16.gmra.mrb[0].mxu0 %v1440
    %v1643 = vpop.f32.mrb[0].mxu0
    %v1644 = vadd.f32 0.0, %v1643
    %v1645 = vpop.f32.mrb[0].mxu0
    %v1646 = vadd.f32 0.0, %v1645
    %v1647 = vpop.f32.mrb[0].mxu0
    %v1648 = vpop.f32.mrb[0].mxu0
    %1649 = vdwg.mxu0
    %1650 = vmatprep.subr.bf16.mxu0 0
    %1651 = vmatpush1.bf16.msra.mxu0 %v1563
    %1652 = vmatprep.subr.bf16.mxu0 0
    %1653 = vmatpush1.bf16.msra.mxu0 %v1566
    %1654 = vmatprep.subr.bf16.mxu0 0
    %1655 = vmatpush1.bf16.msra.mxu0 %v1569
    %1656 = vmatprep.subr.bf16.mxu0 0
    %1657 = vmatpush1.bf16.msra.mxu0 %v1572
    %1658 = vmatprep.subr.bf16.mxu0 0
    %1659 = vmatpush1.bf16.msra.mxu0 %v1575
    %1660 = vmatprep.subr.bf16.mxu0 0
    %1661 = vmatpush1.bf16.msra.mxu0 %v1578
    %1662 = vmatprep.subr.bf16.mxu0 0
    %1663 = vmatpush1.bf16.msra.mxu0 %v1581
    %1664 = vmatprep.subr.bf16.mxu0 0
    %1665 = vmatpush1.bf16.msra.mxu0 %v1584
    %1666 = vmatprep.subr.bf16.mxu0 0
    %1667 = vmatpush1.bf16.msra.mxu0 0
    %1668 = vmatprep.subr.bf16.mxu0 0
    %1669 = vmatpush1.bf16.msra.mxu0 0
    %1670 = vmatprep.subr.bf16.mxu0 0
    %1671 = vmatpush1.bf16.msra.mxu0 0
    %1672 = vmatprep.subr.bf16.mxu0 0
    %1673 = vmatpush1.bf16.msra.mxu0 0
    %1674 = vmatprep.subr.bf16.mxu0 0
    %1675 = vmatpush1.bf16.msra.mxu0 0
    %1676 = vmatprep.subr.bf16.mxu0 0
    %1677 = vmatpush1.bf16.msra.mxu0 0
    %1678 = vmatprep.subr.bf16.mxu0 0
    %1679 = vmatpush1.bf16.msra.mxu0 0
    %1680 = vmatprep.subr.bf16.mxu0 0
    %1681 = vmatpush1.bf16.msra.mxu0 0
    %1682 = vmatprep.mubr.bf16.mxu0 0
    %1683 = vmatmul.mubr.bf16.gmra.mrb[0].mxu0 %v1440
    %v1684 = vpop.f32.mrb[0].mxu0
    %v1685 = vadd.f32 0.0, %v1684
    %v1686 = vpop.f32.mrb[0].mxu0
    %v1687 = vpop.f32.mrb[0].mxu0
    %v1688 = vpop.f32.mrb[0].mxu0
    %1689 = vdwg.mxu0
    %v1690 = vadd.f32 %v1446, %v1644
    %v1691 = vxor.u32 %v1690, 2147483648
    %v1692 = vmul.f32 %v1691, 1.442695
    %v1693 = vpow.pop %v1692
    %v1694 = vadd.f32 %v1693, 1.0
    %v1695 = vrcp.pop %v1694
    %v1696 = vmul.f32 1.0, %v1695
    %v1697 = vadd.f32 %v1447, %v1646
    %v1698 = vxor.u32 %v1697, 2147483648
    %v1699 = vmul.f32 %v1698, 1.442695
    %v1700 = vpow.pop %v1699
    %v1701 = vadd.f32 %v1700, 1.0
    %v1702 = vrcp.pop %v1701
    %v1703 = vmul.f32 1.0, %v1702
    %v1704 = vadd.f32 %v1685, %v81
    %v1705 = vmul.f32 %v1696, %v1704
    %v1706 = vadd.f32 %v1448, %v1705
    %v1707 = vtanh.pop %v1706
    %v1708 = vsub.f32 1.0, %v1703
    %v1709 = vmul.f32 %v1708, %v1707
    %v1710 = vmul.f32 %v1703, %v1439
    %v1711 = vadd.f32 %v1709, %v1710
    %v1712 = vpack.c.bf16 %v1711, %v1711
    %s1713 = scalar_lea.vmem [#allocation11], 20
    %1714 = vst [vmem:[%s1713] sm:$0xf] %v1712
    %s1715 = scalar_lea.vmem [#allocation3], 72
    %v1716 = vld [vmem:[%s1715] sm:$0xff]
    %v1717 = vld [vmem:[%s1715 + $0x8] sm:$0xf]
    %v1718 = vunpack.c.l.bf16 %v1716
    %v1719 = vunpack.c.h.bf16 %v1716
    %v1720 = vunpack.c.l.bf16 %v1717
    %v1721 = vld [vmem:[#allocation8] sm:$0xff]
    %v1722 = vld [vmem:[#allocation8 + $0x8] sm:$0xf]
    %v1723 = vld [vmem:[#allocation8 + $0xc] sm:$0xff]
    %v1724 = vld [vmem:[#allocation8 + $0x14] sm:$0xf]
    %v1725 = vld [vmem:[#allocation8 + $0x18] sm:$0xff]
    %v1726 = vld [vmem:[#allocation8 + $0x20] sm:$0xf]
    %v1727 = vld [vmem:[#allocation8 + $0x24] sm:$0xff]
    %v1728 = vld [vmem:[#allocation8 + $0x2c] sm:$0xf]
    %v1729 = vld [vmem:[#allocation8 + $0x30] sm:$0xff]
    %v1730 = vld [vmem:[#allocation8 + $0x38] sm:$0xf]
    %v1731 = vld [vmem:[#allocation8 + $0x3c] sm:$0xff]
    %v1732 = vld [vmem:[#allocation8 + $0x44] sm:$0xf]
    %v1733 = vld [vmem:[#allocation8 + $0x48] sm:$0xff]
    %v1734 = vld [vmem:[#allocation8 + $0x50] sm:$0xf]
    %v1735 = vld [vmem:[#allocation8 + $0x54] sm:$0xff]
    %v1736 = vld [vmem:[#allocation8 + $0x5c] sm:$0xf]
    %v1737 = vld [vmem:[#allocation8 + $0x60] sm:$0xff]
    %v1738 = vld [vmem:[#allocation8 + $0x68] sm:$0xf]
    %v1739 = vld [vmem:[#allocation8 + $0x6c] sm:$0xff]
    %v1740 = vld [vmem:[#allocation8 + $0x74] sm:$0xf]
    %v1741 = vld [vmem:[#allocation8 + $0x78] sm:$0xff]
    %v1742 = vld [vmem:[#allocation8 + $0x80] sm:$0xf]
    %v1743 = vld [vmem:[#allocation8 + $0x84] sm:$0xff]
    %v1744 = vld [vmem:[#allocation8 + $0x8c] sm:$0xf]
    %v1745 = vld [vmem:[#allocation8 + $0x90] sm:$0xff]
    %v1746 = vld [vmem:[#allocation8 + $0x98] sm:$0xf]
    %v1747 = vld [vmem:[#allocation8 + $0x9c] sm:$0xff]
    %v1748 = vld [vmem:[#allocation8 + $0xa4] sm:$0xf]
    %v1749 = vld [vmem:[#allocation8 + $0xa8] sm:$0xff]
    %v1750 = vld [vmem:[#allocation8 + $0xb0] sm:$0xf]
    %v1751 = vld [vmem:[#allocation8 + $0xb4] sm:$0xff]
    %v1752 = vld [vmem:[#allocation8 + $0xbc] sm:$0xf]
    %v1785 = vunpack.c.l.b16 %v1721
    %v1786 = vunpack.c.h.b16 %v1721
    %v1787 = vunpack.c.l.b16 %v1722
    %v1788 = vunpack.c.l.b16 %v1723
    %v1789 = vunpack.c.h.b16 %v1723
    %v1790 = vunpack.c.l.b16 %v1724
    %v1791 = vunpack.c.l.b16 %v1725
    %v1792 = vunpack.c.h.b16 %v1725
    %v1793 = vunpack.c.l.b16 %v1726
    %v1794 = vunpack.c.l.b16 %v1727
    %v1795 = vunpack.c.h.b16 %v1727
    %v1796 = vunpack.c.l.b16 %v1728
    %v1797 = vunpack.c.l.b16 %v1729
    %v1798 = vunpack.c.h.b16 %v1729
    %v1799 = vunpack.c.l.b16 %v1730
    %v1800 = vunpack.c.l.b16 %v1731
    %v1801 = vunpack.c.h.b16 %v1731
    %v1802 = vunpack.c.l.b16 %v1732
    %v1803 = vunpack.c.l.b16 %v1733
    %v1804 = vunpack.c.h.b16 %v1733
    %v1805 = vunpack.c.l.b16 %v1734
    %v1806 = vunpack.c.l.b16 %v1735
    %v1807 = vunpack.c.h.b16 %v1735
    %v1808 = vunpack.c.l.b16 %v1736
    %v1809 = vunpack.c.l.b16 %v1737
    %v1810 = vunpack.c.h.b16 %v1737
    %v1811 = vunpack.c.l.b16 %v1738
    %v1812 = vunpack.c.l.b16 %v1739
    %v1813 = vunpack.c.h.b16 %v1739
    %v1814 = vunpack.c.l.b16 %v1740
    %v1815 = vunpack.c.l.b16 %v1741
    %v1816 = vunpack.c.h.b16 %v1741
    %v1817 = vunpack.c.l.b16 %v1742
    %v1818 = vunpack.c.l.b16 %v1743
    %v1819 = vunpack.c.h.b16 %v1743
    %v1820 = vunpack.c.l.b16 %v1744
    %v1821 = vunpack.c.l.b16 %v1745
    %v1822 = vunpack.c.h.b16 %v1745
    %v1823 = vunpack.c.l.b16 %v1746
    %v1824 = vunpack.c.l.b16 %v1747
    %v1825 = vunpack.c.h.b16 %v1747
    %v1826 = vunpack.c.l.b16 %v1748
    %v1827 = vunpack.c.l.b16 %v1749
    %v1828 = vunpack.c.h.b16 %v1749
    %v1829 = vunpack.c.l.b16 %v1750
    %v1830 = vunpack.c.l.b16 %v1751
    %v1831 = vunpack.c.h.b16 %v1751
    %v1832 = vunpack.c.l.b16 %v1752
    %v1833 = vpack.c.b16 %v1788, %v1785
    %v1834 = vpack.c.b16 %v1789, %v1786
    %v1835 = vpack.c.b16 %v1790, %v1787
    %v1836 = vpack.c.b16 %v1794, %v1791
    %v1837 = vpack.c.b16 %v1795, %v1792
    %v1838 = vpack.c.b16 %v1796, %v1793
    %v1839 = vpack.c.b16 %v1800, %v1797
    %v1840 = vpack.c.b16 %v1801, %v1798
    %v1841 = vpack.c.b16 %v1802, %v1799
    %v1842 = vpack.c.b16 %v1806, %v1803
    %v1843 = vpack.c.b16 %v1807, %v1804
    %v1844 = vpack.c.b16 %v1808, %v1805
    %v1845 = vpack.c.b16 %v1812, %v1809
    %v1846 = vpack.c.b16 %v1813, %v1810
    %v1847 = vpack.c.b16 %v1814, %v1811
    %v1848 = vpack.c.b16 %v1818, %v1815
    %v1849 = vpack.c.b16 %v1819, %v1816
    %v1850 = vpack.c.b16 %v1820, %v1817
    %v1851 = vpack.c.b16 %v1824, %v1821
    %v1852 = vpack.c.b16 %v1825, %v1822
    %v1853 = vpack.c.b16 %v1826, %v1823
    %v1854 = vpack.c.b16 %v1830, %v1827
    %v1855 = vpack.c.b16 %v1831, %v1828
    %v1856 = vpack.c.b16 %v1832, %v1829
    %1881 = vmatprep.subr.bf16.mxu0 %v1834
    %1882 = vmatpush1.bf16.msra.mxu0 %v1833
    %1883 = vmatprep.subr.bf16.mxu0 %v1837
    %1884 = vmatpush1.bf16.msra.mxu0 %v1836
    %1885 = vmatprep.subr.bf16.mxu0 %v1840
    %1886 = vmatpush1.bf16.msra.mxu0 %v1839
    %1887 = vmatprep.subr.bf16.mxu0 %v1843
    %1888 = vmatpush1.bf16.msra.mxu0 %v1842
    %1889 = vmatprep.subr.bf16.mxu0 %v1846
    %1890 = vmatpush1.bf16.msra.mxu0 %v1845
    %1891 = vmatprep.subr.bf16.mxu0 %v1849
    %1892 = vmatpush1.bf16.msra.mxu0 %v1848
    %1893 = vmatprep.subr.bf16.mxu0 %v1852
    %1894 = vmatpush1.bf16.msra.mxu0 %v1851
    %1895 = vmatprep.subr.bf16.mxu0 %v1855
    %1896 = vmatpush1.bf16.msra.mxu0 %v1854
    %1897 = vmatprep.subr.bf16.mxu0 0
    %1898 = vmatpush1.bf16.msra.mxu0 0
    %1899 = vmatprep.subr.bf16.mxu0 0
    %1900 = vmatpush1.bf16.msra.mxu0 0
    %1901 = vmatprep.subr.bf16.mxu0 0
    %1902 = vmatpush1.bf16.msra.mxu0 0
    %1903 = vmatprep.subr.bf16.mxu0 0
    %1904 = vmatpush1.bf16.msra.mxu0 0
    %1905 = vmatprep.subr.bf16.mxu0 0
    %1906 = vmatpush1.bf16.msra.mxu0 0
    %1907 = vmatprep.subr.bf16.mxu0 0
    %1908 = vmatpush1.bf16.msra.mxu0 0
    %1909 = vmatprep.subr.bf16.mxu0 0
    %1910 = vmatpush1.bf16.msra.mxu0 0
    %1911 = vmatprep.subr.bf16.mxu0 0
    %1912 = vmatpush1.bf16.msra.mxu0 0
    %1913 = vmatprep.mubr.bf16.mxu0 0
    %1914 = vmatmul.mubr.bf16.gmra.mrb[0].mxu0 %v1712
    %v1915 = vpop.f32.mrb[0].mxu0
    %v1916 = vadd.f32 0.0, %v1915
    %v1917 = vpop.f32.mrb[0].mxu0
    %v1918 = vadd.f32 0.0, %v1917
    %v1919 = vpop.f32.mrb[0].mxu0
    %v1920 = vpop.f32.mrb[0].mxu0
    %1921 = vdwg.mxu0
    %1922 = vmatprep.subr.bf16.mxu0 0
    %1923 = vmatpush1.bf16.msra.mxu0 %v1835
    %1924 = vmatprep.subr.bf16.mxu0 0
    %1925 = vmatpush1.bf16.msra.mxu0 %v1838
    %1926 = vmatprep.subr.bf16.mxu0 0
    %1927 = vmatpush1.bf16.msra.mxu0 %v1841
    %1928 = vmatprep.subr.bf16.mxu0 0
    %1929 = vmatpush1.bf16.msra.mxu0 %v1844
    %1930 = vmatprep.subr.bf16.mxu0 0
    %1931 = vmatpush1.bf16.msra.mxu0 %v1847
    %1932 = vmatprep.subr.bf16.mxu0 0
    %1933 = vmatpush1.bf16.msra.mxu0 %v1850
    %1934 = vmatprep.subr.bf16.mxu0 0
    %1935 = vmatpush1.bf16.msra.mxu0 %v1853
    %1936 = vmatprep.subr.bf16.mxu0 0
    %1937 = vmatpush1.bf16.msra.mxu0 %v1856
    %1938 = vmatprep.subr.bf16.mxu0 0
    %1939 = vmatpush1.bf16.msra.mxu0 0
    %1940 = vmatprep.subr.bf16.mxu0 0
    %1941 = vmatpush1.bf16.msra.mxu0 0
    %1942 = vmatprep.subr.bf16.mxu0 0
    %1943 = vmatpush1.bf16.msra.mxu0 0
    %1944 = vmatprep.subr.bf16.mxu0 0
    %1945 = vmatpush1.bf16.msra.mxu0 0
    %1946 = vmatprep.subr.bf16.mxu0 0
    %1947 = vmatpush1.bf16.msra.mxu0 0
    %1948 = vmatprep.subr.bf16.mxu0 0
    %1949 = vmatpush1.bf16.msra.mxu0 0
    %1950 = vmatprep.subr.bf16.mxu0 0
    %1951 = vmatpush1.bf16.msra.mxu0 0
    %1952 = vmatprep.subr.bf16.mxu0 0
    %1953 = vmatpush1.bf16.msra.mxu0 0
    %1954 = vmatprep.mubr.bf16.mxu0 0
    %1955 = vmatmul.mubr.bf16.gmra.mrb[0].mxu0 %v1712
    %v1956 = vpop.f32.mrb[0].mxu0
    %v1957 = vadd.f32 0.0, %v1956
    %v1958 = vpop.f32.mrb[0].mxu0
    %v1959 = vpop.f32.mrb[0].mxu0
    %v1960 = vpop.f32.mrb[0].mxu0
    %1961 = vdwg.mxu0
    %v1962 = vadd.f32 %v1718, %v1916
    %v1963 = vxor.u32 %v1962, 2147483648
    %v1964 = vmul.f32 %v1963, 1.442695
    %v1965 = vpow.pop %v1964
    %v1966 = vadd.f32 %v1965, 1.0
    %v1967 = vrcp.pop %v1966
    %v1968 = vmul.f32 1.0, %v1967
    %v1969 = vadd.f32 %v1719, %v1918
    %v1970 = vxor.u32 %v1969, 2147483648
    %v1971 = vmul.f32 %v1970, 1.442695
    %v1972 = vpow.pop %v1971
    %v1973 = vadd.f32 %v1972, 1.0
    %v1974 = vrcp.pop %v1973
    %v1975 = vmul.f32 1.0, %v1974
    %v1976 = vadd.f32 %v1957, %v81
    %v1977 = vmul.f32 %v1968, %v1976
    %v1978 = vadd.f32 %v1720, %v1977
    %v1979 = vtanh.pop %v1978
    %v1980 = vsub.f32 1.0, %v1975
    %v1981 = vmul.f32 %v1980, %v1979
    %v1982 = vmul.f32 %v1975, %v1711
    %v1983 = vadd.f32 %v1981, %v1982
    %v1984 = vpack.c.bf16 %v1983, %v1983
    %s1985 = scalar_lea.vmem [#allocation11], 24
    %1986 = vst [vmem:[%s1985] sm:$0xf] %v1984
    %s1987 = scalar_lea.vmem [#allocation3], 84
    %v1988 = vld [vmem:[%s1987] sm:$0xff]
    %v1989 = vld [vmem:[%s1987 + $0x8] sm:$0xf]
    %v1990 = vunpack.c.l.bf16 %v1988
    %v1991 = vunpack.c.h.bf16 %v1988
    %v1992 = vunpack.c.l.bf16 %v1989
    %v1993 = vld [vmem:[#allocation8] sm:$0xff]
    %v1994 = vld [vmem:[#allocation8 + $0x8] sm:$0xf]
    %v1995 = vld [vmem:[#allocation8 + $0xc] sm:$0xff]
    %v1996 = vld [vmem:[#allocation8 + $0x14] sm:$0xf]
    %v1997 = vld [vmem:[#allocation8 + $0x18] sm:$0xff]
    %v1998 = vld [vmem:[#allocation8 + $0x20] sm:$0xf]
    %v1999 = vld [vmem:[#allocation8 + $0x24] sm:$0xff]
    %v2000 = vld [vmem:[#allocation8 + $0x2c] sm:$0xf]
    %v2001 = vld [vmem:[#allocation8 + $0x30] sm:$0xff]
    %v2002 = vld [vmem:[#allocation8 + $0x38] sm:$0xf]
    %v2003 = vld [vmem:[#allocation8 + $0x3c] sm:$0xff]
    %v2004 = vld [vmem:[#allocation8 + $0x44] sm:$0xf]
    %v2005 = vld [vmem:[#allocation8 + $0x48] sm:$0xff]
    %v2006 = vld [vmem:[#allocation8 + $0x50] sm:$0xf]
    %v2007 = vld [vmem:[#allocation8 + $0x54] sm:$0xff]
    %v2008 = vld [vmem:[#allocation8 + $0x5c] sm:$0xf]
    %v2009 = vld [vmem:[#allocation8 + $0x60] sm:$0xff]
    %v2010 = vld [vmem:[#allocation8 + $0x68] sm:$0xf]
    %v2011 = vld [vmem:[#allocation8 + $0x6c] sm:$0xff]
    %v2012 = vld [vmem:[#allocation8 + $0x74] sm:$0xf]
    %v2013 = vld [vmem:[#allocation8 + $0x78] sm:$0xff]
    %v2014 = vld [vmem:[#allocation8 + $0x80] sm:$0xf]
    %v2015 = vld [vmem:[#allocation8 + $0x84] sm:$0xff]
    %v2016 = vld [vmem:[#allocation8 + $0x8c] sm:$0xf]
    %v2017 = vld [vmem:[#allocation8 + $0x90] sm:$0xff]
    %v2018 = vld [vmem:[#allocation8 + $0x98] sm:$0xf]
    %v2019 = vld [vmem:[#allocation8 + $0x9c] sm:$0xff]
    %v2020 = vld [vmem:[#allocation8 + $0xa4] sm:$0xf]
    %v2021 = vld [vmem:[#allocation8 + $0xa8] sm:$0xff]
    %v2022 = vld [vmem:[#allocation8 + $0xb0] sm:$0xf]
    %v2023 = vld [vmem:[#allocation8 + $0xb4] sm:$0xff]
    %v2024 = vld [vmem:[#allocation8 + $0xbc] sm:$0xf]
    %v2057 = vunpack.c.l.b16 %v1993
    %v2058 = vunpack.c.h.b16 %v1993
    %v2059 = vunpack.c.l.b16 %v1994
    %v2060 = vunpack.c.l.b16 %v1995
    %v2061 = vunpack.c.h.b16 %v1995
    %v2062 = vunpack.c.l.b16 %v1996
    %v2063 = vunpack.c.l.b16 %v1997
    %v2064 = vunpack.c.h.b16 %v1997
    %v2065 = vunpack.c.l.b16 %v1998
    %v2066 = vunpack.c.l.b16 %v1999
    %v2067 = vunpack.c.h.b16 %v1999
    %v2068 = vunpack.c.l.b16 %v2000
    %v2069 = vunpack.c.l.b16 %v2001
    %v2070 = vunpack.c.h.b16 %v2001
    %v2071 = vunpack.c.l.b16 %v2002
    %v2072 = vunpack.c.l.b16 %v2003
    %v2073 = vunpack.c.h.b16 %v2003
    %v2074 = vunpack.c.l.b16 %v2004
    %v2075 = vunpack.c.l.b16 %v2005
    %v2076 = vunpack.c.h.b16 %v2005
    %v2077 = vunpack.c.l.b16 %v2006
    %v2078 = vunpack.c.l.b16 %v2007
    %v2079 = vunpack.c.h.b16 %v2007
    %v2080 = vunpack.c.l.b16 %v2008
    %v2081 = vunpack.c.l.b16 %v2009
    %v2082 = vunpack.c.h.b16 %v2009
    %v2083 = vunpack.c.l.b16 %v2010
    %v2084 = vunpack.c.l.b16 %v2011
    %v2085 = vunpack.c.h.b16 %v2011
    %v2086 = vunpack.c.l.b16 %v2012
    %v2087 = vunpack.c.l.b16 %v2013
    %v2088 = vunpack.c.h.b16 %v2013
    %v2089 = vunpack.c.l.b16 %v2014
    %v2090 = vunpack.c.l.b16 %v2015
    %v2091 = vunpack.c.h.b16 %v2015
    %v2092 = vunpack.c.l.b16 %v2016
    %v2093 = vunpack.c.l.b16 %v2017
    %v2094 = vunpack.c.h.b16 %v2017
    %v2095 = vunpack.c.l.b16 %v2018
    %v2096 = vunpack.c.l.b16 %v2019
    %v2097 = vunpack.c.h.b16 %v2019
    %v2098 = vunpack.c.l.b16 %v2020
    %v2099 = vunpack.c.l.b16 %v2021
    %v2100 = vunpack.c.h.b16 %v2021
    %v2101 = vunpack.c.l.b16 %v2022
    %v2102 = vunpack.c.l.b16 %v2023
    %v2103 = vunpack.c.h.b16 %v2023
    %v2104 = vunpack.c.l.b16 %v2024
    %v2105 = vpack.c.b16 %v2060, %v2057
    %v2106 = vpack.c.b16 %v2061, %v2058
    %v2107 = vpack.c.b16 %v2062, %v2059
    %v2108 = vpack.c.b16 %v2066, %v2063
    %v2109 = vpack.c.b16 %v2067, %v2064
    %v2110 = vpack.c.b16 %v2068, %v2065
    %v2111 = vpack.c.b16 %v2072, %v2069
    %v2112 = vpack.c.b16 %v2073, %v2070
    %v2113 = vpack.c.b16 %v2074, %v2071
    %v2114 = vpack.c.b16 %v2078, %v2075
    %v2115 = vpack.c.b16 %v2079, %v2076
    %v2116 = vpack.c.b16 %v2080, %v2077
    %v2117 = vpack.c.b16 %v2084, %v2081
    %v2118 = vpack.c.b16 %v2085, %v2082
    %v2119 = vpack.c.b16 %v2086, %v2083
    %v2120 = vpack.c.b16 %v2090, %v2087
    %v2121 = vpack.c.b16 %v2091, %v2088
    %v2122 = vpack.c.b16 %v2092, %v2089
    %v2123 = vpack.c.b16 %v2096, %v2093
    %v2124 = vpack.c.b16 %v2097, %v2094
    %v2125 = vpack.c.b16 %v2098, %v2095
    %v2126 = vpack.c.b16 %v2102, %v2099
    %v2127 = vpack.c.b16 %v2103, %v2100
    %v2128 = vpack.c.b16 %v2104, %v2101
    %2153 = vmatprep.subr.bf16.mxu0 %v2106
    %2154 = vmatpush1.bf16.msra.mxu0 %v2105
    %2155 = vmatprep.subr.bf16.mxu0 %v2109
    %2156 = vmatpush1.bf16.msra.mxu0 %v2108
    %2157 = vmatprep.subr.bf16.mxu0 %v2112
    %2158 = vmatpush1.bf16.msra.mxu0 %v2111
    %2159 = vmatprep.subr.bf16.mxu0 %v2115
    %2160 = vmatpush1.bf16.msra.mxu0 %v2114
    %2161 = vmatprep.subr.bf16.mxu0 %v2118
    %2162 = vmatpush1.bf16.msra.mxu0 %v2117
    %2163 = vmatprep.subr.bf16.mxu0 %v2121
    %2164 = vmatpush1.bf16.msra.mxu0 %v2120
    %2165 = vmatprep.subr.bf16.mxu0 %v2124
    %2166 = vmatpush1.bf16.msra.mxu0 %v2123
    %2167 = vmatprep.subr.bf16.mxu0 %v2127
    %2168 = vmatpush1.bf16.msra.mxu0 %v2126
    %2169 = vmatprep.subr.bf16.mxu0 0
    %2170 = vmatpush1.bf16.msra.mxu0 0
    %2171 = vmatprep.subr.bf16.mxu0 0
    %2172 = vmatpush1.bf16.msra.mxu0 0
    %2173 = vmatprep.subr.bf16.mxu0 0
    %2174 = vmatpush1.bf16.msra.mxu0 0
    %2175 = vmatprep.subr.bf16.mxu0 0
    %2176 = vmatpush1.bf16.msra.mxu0 0
    %2177 = vmatprep.subr.bf16.mxu0 0
    %2178 = vmatpush1.bf16.msra.mxu0 0
    %2179 = vmatprep.subr.bf16.mxu0 0
    %2180 = vmatpush1.bf16.msra.mxu0 0
    %2181 = vmatprep.subr.bf16.mxu0 0
    %2182 = vmatpush1.bf16.msra.mxu0 0
    %2183 = vmatprep.subr.bf16.mxu0 0
    %2184 = vmatpush1.bf16.msra.mxu0 0
    %2185 = vmatprep.mubr.bf16.mxu0 0
    %2186 = vmatmul.mubr.bf16.gmra.mrb[0].mxu0 %v1984
    %v2187 = vpop.f32.mrb[0].mxu0
    %v2188 = vadd.f32 0.0, %v2187
    %v2189 = vpop.f32.mrb[0].mxu0
    %v2190 = vadd.f32 0.0, %v2189
    %v2191 = vpop.f32.mrb[0].mxu0
    %v2192 = vpop.f32.mrb[0].mxu0
    %2193 = vdwg.mxu0
    %2194 = vmatprep.subr.bf16.mxu0 0
    %2195 = vmatpush1.bf16.msra.mxu0 %v2107
    %2196 = vmatprep.subr.bf16.mxu0 0
    %2197 = vmatpush1.bf16.msra.mxu0 %v2110
    %2198 = vmatprep.subr.bf16.mxu0 0
    %2199 = vmatpush1.bf16.msra.mxu0 %v2113
    %2200 = vmatprep.subr.bf16.mxu0 0
    %2201 = vmatpush1.bf16.msra.mxu0 %v2116
    %2202 = vmatprep.subr.bf16.mxu0 0
    %2203 = vmatpush1.bf16.msra.mxu0 %v2119
    %2204 = vmatprep.subr.bf16.mxu0 0
    %2205 = vmatpush1.bf16.msra.mxu0 %v2122
    %2206 = vmatprep.subr.bf16.mxu0 0
    %2207 = vmatpush1.bf16.msra.mxu0 %v2125
    %2208 = vmatprep.subr.bf16.mxu0 0
    %2209 = vmatpush1.bf16.msra.mxu0 %v2128
    %2210 = vmatprep.subr.bf16.mxu0 0
    %2211 = vmatpush1.bf16.msra.mxu0 0
    %2212 = vmatprep.subr.bf16.mxu0 0
    %2213 = vmatpush1.bf16.msra.mxu0 0
    %2214 = vmatprep.subr.bf16.mxu0 0
    %2215 = vmatpush1.bf16.msra.mxu0 0
    %2216 = vmatprep.subr.bf16.mxu0 0
    %2217 = vmatpush1.bf16.msra.mxu0 0
    %2218 = vmatprep.subr.bf16.mxu0 0
    %2219 = vmatpush1.bf16.msra.mxu0 0
    %2220 = vmatprep.subr.bf16.mxu0 0
    %2221 = vmatpush1.bf16.msra.mxu0 0
    %2222 = vmatprep.subr.bf16.mxu0 0
    %2223 = vmatpush1.bf16.msra.mxu0 0
    %2224 = vmatprep.subr.bf16.mxu0 0
    %2225 = vmatpush1.bf16.msra.mxu0 0
    %2226 = vmatprep.mubr.bf16.mxu0 0
    %2227 = vmatmul.mubr.bf16.gmra.mrb[0].mxu0 %v1984
    %v2228 = vpop.f32.mrb[0].mxu0
    %v2229 = vadd.f32 0.0, %v2228
    %v2230 = vpop.f32.mrb[0].mxu0
    %v2231 = vpop.f32.mrb[0].mxu0
    %v2232 = vpop.f32.mrb[0].mxu0
    %2233 = vdwg.mxu0
    %v2234 = vadd.f32 %v1990, %v2188
    %v2235 = vxor.u32 %v2234, 2147483648
    %v2236 = vmul.f32 %v2235, 1.442695
    %v2237 = vpow.pop %v2236
    %v2238 = vadd.f32 %v2237, 1.0
    %v2239 = vrcp.pop %v2238
    %v2240 = vmul.f32 1.0, %v2239
    %v2241 = vadd.f32 %v1991, %v2190
    %v2242 = vxor.u32 %v2241, 2147483648
    %v2243 = vmul.f32 %v2242, 1.442695
    %v2244 = vpow.pop %v2243
    %v2245 = vadd.f32 %v2244, 1.0
    %v2246 = vrcp.pop %v2245
    %v2247 = vmul.f32 1.0, %v2246
    %v2248 = vadd.f32 %v2229, %v81
    %v2249 = vmul.f32 %v2240, %v2248
    %v2250 = vadd.f32 %v1992, %v2249
    %v2251 = vtanh.pop %v2250
    %v2252 = vsub.f32 1.0, %v2247
    %v2253 = vmul.f32 %v2252, %v2251
    %v2254 = vmul.f32 %v2247, %v1983
    %v2255 = vadd.f32 %v2253, %v2254
    %v2256 = vpack.c.bf16 %v2255, %v2255
    %s2257 = scalar_lea.vmem [#allocation11], 28
    %2258 = vst [vmem:[%s2257] sm:$0xf] %v2256
    %2259 = vst [vmem:[#allocation2] sm:$0xff] %v2255
    // Predicated region
    $region38: #{fast_decoder_gru_forward.6} parent=1 // pred_check
      _
    $region39: #{fast_decoder_gru_forward.6} parent=1 // pred_check_branch
      %2261 = sbr.rel (0) target = $region41
    $region40: #{fast_decoder_gru_forward.6} parent=1 // pred_region
      %s2263 = ssub.s32 512, 512
      %2264 = vsyncadd [#allocation5], %s2263
      %s2265 = sshll.u32 [#allocation11], 4
      %s2266 = int_to_ptr.vmem [resolvable:$true] %s2265
      %2271 = dma.vmem_to_hbm [thread:$0]  %s2266, 512, %s4, [#allocation5], 64, 64, 4
    $region41: #{fast_decoder_gru_forward.6} parent=1 // pred_fallthru
      _
    // Predicated region
    $region42: #{fast_decoder_gru_forward.6} parent=1 // pred_check
      _
    $region43: #{fast_decoder_gru_forward.6} parent=1 // pred_check_branch
      %2273 = sbr.rel (0) target = $region45
    $region44: #{fast_decoder_gru_forward.6} parent=1 // pred_region
      %2274 = dma.done [#allocation5], 512
    $region45: #{fast_decoder_gru_forward.6} parent=1 // pred_fallthru
      _
    %2275 = vsyncpa [#allocation4], 1
    %2276 = vsyncpa [#allocation7], 1
    %2277 = vsyncpa [#allocation10], 1
    %2278 = vsyncpa [#allocation5], 1

</llo_original>
